<compile_context>
chip_gen: v6e
topology: v6e:2x2x1
jax: 0.10.0
libtpu: 0.0.40
codegen_flags: <defaults>
</compile_context>

<pallas_src>
import jax
import jax.numpy as jnp
from jax import lax
from jax.experimental import pallas as pl
from jax.experimental.pallas import tpu as pltpu


# ----------------------------------------------------------------------------
# Geometry (fixed by the module / example input)
# ----------------------------------------------------------------------------
C_IN = 2                      # conv1 in_channels
C1 = 16                       # conv1 out_channels
C2 = 32                       # conv2 out_channels
H_IN, W_IN = 6, 10            # input spatial (so C2 * H2 * W2 == 1024)
H1, W1 = H_IN, W_IN           # conv1 output spatial ('same')
H2, W2 = H1 - 2, W1 - 2       # conv2 output spatial ('valid') -> (4, 8)
N_OUT = 64                    # Linear out_features
LIN_IN = C2 * H2 * W2         # 1024 == Linear in_features
K1 = 9 * C_IN                 # 18   conv1 im2col contraction depth
ROWS1 = H1 * W1               # 60   conv1 output rows per batch element

assert LIN_IN == 64 * 4 * 4
# Batch-folded shifted-slab bound: the deepest conv2 tap read (last valid
# output row of the last batch element + max tap offset 2*W1+2) must stay
# inside the B*ROWS1 rows of a1.  (Garbage rows between batches are computed
# but never read by the Linear gather.)
assert (H2 - 1) * W1 + (W2 - 1) + 2 * W1 + 2 <= ROWS1 - 1


# ----------------------------------------------------------------------------
# Fused Pallas kernel: one invocation handles the whole batch
# ----------------------------------------------------------------------------
def _make_kernel(batch):
    s2t = (batch - 1) * ROWS1 + (H2 - 1) * W1 + W2   # conv2 slab row count

    def kernel(xcol_ref, w1_ref, b1_ref, w2_ref, b2_ref, wl_ref, bl_ref,
               o_ref, a1_ref, a2_ref, lin_ref):
        # xcol_ref: (B*60, 18)  conv1 im2col (built host-side), row = b,h,w
        # w1_ref  : (18, 16)    conv1 weight, (tap, cin) flattened
        # w2_ref  : (9, 16, 32) conv2 taps (kh*3+kw, cin, cout)
        # wl_ref  : (1024, 64)  Linear weight, rows reordered to (h, w, c)
        # a1_ref  : VMEM (B*60, 16) ; a2_ref: VMEM (s2t, 32)
        # lin_ref : VMEM (B, 1024)  lane-dense Linear input

        # ---- conv1 ('same', 3x3) + ReLU : ONE matmul -----------------------
        a1 = jnp.dot(xcol_ref[...], w1_ref[...],
                     preferred_element_type=jnp.float32)
        a1_ref[...] = jnp.maximum(a1 + b1_ref[...], 0.0)

        # ---- conv2 ('valid', 3x3) + ReLU : 9 shifted-slab matmuls ----------
        # (per-batch row stride ROWS1; 3 independent partial accumulators)
        parts = []
        for di in range(3):
            part = None
            for dj in range(3):
                tap = a1_ref[pl.ds(di * W1 + dj, s2t), :]        # (s2t, 16)
                d = jnp.dot(tap, w2_ref[di * 3 + dj],
                            preferred_element_type=jnp.float32)
                part = d if part is None else part + d
            parts.append(part)
        a2_ref[...] = jnp.maximum(parts[0] + parts[1] + parts[2]
                                  + b2_ref[...], 0.0)

        # ---- flatten: pack valid conv2 rows into lane-dense (B, 1024) ------
        # (feature order (h, w, c) matches wl_ref's host-side re-layout)
        for b in range(batch):
            for h in range(H2):
                for w in range(W2):
                    row = a2_ref[pl.ds(b * ROWS1 + h * W1 + w, 1), :]  # (1,32)
                    lin_ref[pl.ds(b, 1), pl.ds((h * W2 + w) * C2, C2)] = row

        # ---- Linear: ONE (B, 1024) @ (1024, 64) matmul ----------------------
        out = jnp.dot(lin_ref[...], wl_ref[...],
                      preferred_element_type=jnp.float32)
        o_ref[...] = out + bl_ref[...]

    return kernel


def _pgam_pallas(xcol, w1k, b1k, w2k, b2k, wlk, blk, batch):
    s2t = (batch - 1) * ROWS1 + (H2 - 1) * W1 + W2
    flops = (2 * batch * ROWS1 * K1 * C1
             + 2 * 9 * s2t * C1 * C2
             + 2 * batch * LIN_IN * N_OUT)
    bytes_accessed = 4 * (xcol.size + w1k.size + b1k.size + w2k.size
                          + b2k.size + wlk.size + blk.size + batch * N_OUT)
    return pl.pallas_call(
        _make_kernel(batch),
        out_shape=jax.ShapeDtypeStruct((batch, N_OUT), jnp.float32),
        scratch_shapes=[pltpu.VMEM((batch * ROWS1, C1), jnp.float32),
                        pltpu.VMEM((s2t, C2), jnp.float32),
                        pltpu.VMEM((batch, LIN_IN), jnp.float32)],
        compiler_params=pltpu.CompilerParams(
            vmem_limit_bytes=2 * 1024 * 1024),
        cost_estimate=pl.CostEstimate(flops=flops, transcendentals=0,
                                      bytes_accessed=bytes_accessed),
    )(xcol, w1k, b1k, w2k, b2k, wlk, blk)


# ----------------------------------------------------------------------------
# One-time parameter re-layout (PyTorch layout -> kernel layout)
# ----------------------------------------------------------------------------
def prepare_params(params):
    w1, b1, w2, b2, wl, bl = params
    # conv1 OIHW -> (kh, kw, cin, cout) flattened to (18, 16) (im2col order).
    w1k = jnp.transpose(w1, (2, 3, 1, 0)).reshape(K1, C1)
    # conv2 OIHW -> (tap, cin, cout).
    w2k = jnp.transpose(w2, (2, 3, 1, 0)).reshape(9, C1, C2)
    # Linear: reorder input features from PyTorch's (c, h, w) flatten to the
    # kernel's (h, w, c) lane order and pre-transpose to (1024, 64).
    wlk = jnp.transpose(wl.reshape(N_OUT, C2, H2, W2),
                        (2, 3, 1, 0)).reshape(LIN_IN, N_OUT)
    return (w1k, b1.reshape(1, C1), w2k, b2.reshape(1, C2),
            wlk, bl.reshape(1, N_OUT))


@jax.jit
def pgam_forward(x_nchw, kparams):
    w1k, b1k, w2k, b2k, wlk, blk = kparams
    batch = x_nchw.shape[0]
    x = jnp.transpose(x_nchw, (0, 2, 3, 1))                 # NHWC
    xp = jnp.pad(x, ((0, 0), (1, 1), (1, 1), (0, 0)))       # 'same' halo
    # conv1 im2col in the wrapper: (B, 6, 10, 9*C_IN) -> (B*60, 18)
    cols = [lax.slice(xp, (0, di, dj, 0), (batch, di + H1, dj + W1, C_IN))
            for di in range(3) for dj in range(3)]
    xcol = jnp.concatenate(cols, axis=-1).reshape(batch * ROWS1, K1)
    return _pgam_pallas(xcol, w1k, b1k, w2k, b2k, wlk, blk, batch)


# ----------------------------------------------------------------------------
# Pure-JAX reference reproducing the PyTorch forward (NCHW)
# ----------------------------------------------------------------------------
def pgam_reference(x_nchw, params):
    w1, b1, w2, b2, wl, bl = params
    dn = ("NCHW", "OIHW", "NCHW")
    t = lax.conv_general_dilated(x_nchw, w1, (1, 1), "SAME",
                                 dimension_numbers=dn)
    t = jnp.maximum(t + b1[None, :, None, None], 0.0)
    t = lax.conv_general_dilated(t, w2, (1, 1), "VALID",
                                 dimension_numbers=dn)
    t = jnp.maximum(t + b2[None, :, None, None], 0.0)
    t = t.reshape(t.shape[0], -1)
    return t @ wl.T + bl


# ----------------------------------------------------------------------------
def _init_params(key):
    ks = jax.random.split(key, 6)

    def uinit(k, shape, fan_in):
        bound = 1.0 / (fan_in ** 0.5)
        return jax.random.uniform(k, shape, jnp.float32, -bound, bound)

    w1 = uinit(ks[0], (C1, C_IN, 3, 3), C_IN * 9)   # Conv2d(2, 16, 3, 'same')
    b1 = uinit(ks[1], (C1,), C_IN * 9)
    w2 = uinit(ks[2], (C2, C1, 3, 3), C1 * 9)       # Conv2d(16, 32, 3)
    b2 = uinit(ks[3], (C2,), C1 * 9)
    wl = uinit(ks[4], (N_OUT, LIN_IN), LIN_IN)      # Linear(1024, 64)
    bl = uinit(ks[5], (N_OUT,), LIN_IN)
    return (w1, b1, w2, b2, wl, bl)


if __name__ == "__main__":
    key = jax.random.PRNGKey(0)
    pkey, xkey = jax.random.split(key)
    params = _init_params(pkey)
    kparams = prepare_params(params)            # one-time weight re-layout

    # NCHW input; (6, 10) spatial so that 32 * 4 * 8 = 1024 = Linear in_features
    x = jax.random.normal(xkey, (2, C_IN, H_IN, W_IN), jnp.float32)

    out = jax.block_until_ready(pgam_forward(x, kparams))
    ref = jax.block_until_ready(pgam_reference(x, params))

    assert out.shape == (2, N_OUT), out.shape
    assert out.dtype == jnp.float32
    err = float(jnp.max(jnp.abs(out - ref)))
    assert jnp.allclose(out, ref, rtol=1e-3, atol=1e-3), f"max abs err {err}"

    print("KERNEL_OK")
</pallas_src>

<mosaic_0001>
module attributes {stable_mosaic.version = 11 : i64} {
  func.func @kernel(%arg0: memref<120x18xf32, #tpu.memory_space<vmem>>, %arg1: memref<18x16xf32, #tpu.memory_space<vmem>>, %arg2: memref<1x16xf32, #tpu.memory_space<vmem>>, %arg3: memref<9x16x32xf32, #tpu.memory_space<vmem>>, %arg4: memref<1x32xf32, #tpu.memory_space<vmem>>, %arg5: memref<1024x64xf32, #tpu.memory_space<vmem>>, %arg6: memref<1x64xf32, #tpu.memory_space<vmem>>, %arg7: memref<2x64xf32, #tpu.memory_space<vmem>>, %arg8: memref<120x16xf32, #tpu.memory_space<vmem>>, %arg9: memref<98x32xf32, #tpu.memory_space<vmem>>, %arg10: memref<2x1024xf32, #tpu.memory_space<vmem>>) attributes {dimension_semantics = [], scalar_prefetch = 0 : i64, scratch_operands = 3 : i64, tpu.core_type = #tpu.core_type<tc>} {
    %c0 = arith.constant 0 : index
    %c0_0 = arith.constant 0 : index
    %0 = vector.load %arg0[%c0, %c0_0] : memref<120x18xf32, #tpu.memory_space<vmem>>, vector<120x18xf32>
    %c0_1 = arith.constant 0 : index
    %c0_2 = arith.constant 0 : index
    %1 = vector.load %arg1[%c0_1, %c0_2] : memref<18x16xf32, #tpu.memory_space<vmem>>, vector<18x16xf32>
    %cst = arith.constant dense<0.000000e+00> : vector<120x16xf32>
    %2 = tpu.matmul %0, %1, %cst {dimension_numbers = #tpu.dot_dimension_numbers<[1], [0], [0], [1], [0, 0, 1, 1], [], []>} : vector<120x18xf32>, vector<18x16xf32>, vector<120x16xf32> -> vector<120x16xf32>
    %c0_3 = arith.constant 0 : index
    %c0_4 = arith.constant 0 : index
    %3 = vector.load %arg2[%c0_3, %c0_4] : memref<1x16xf32, #tpu.memory_space<vmem>>, vector<1x16xf32>
    %4 = vector.broadcast %3 : vector<1x16xf32> to vector<120x16xf32>
    %5 = arith.addf %2, %4 : vector<120x16xf32>
    %cst_5 = arith.constant 0.000000e+00 : f32
    %6 = vector.broadcast %cst_5 : f32 to vector<120x16xf32>
    %7 = arith.maximumf %5, %6 : vector<120x16xf32>
    %c0_6 = arith.constant 0 : index
    %c0_7 = arith.constant 0 : index
    %8 = vector.load %arg8[%c0_6, %c0_7] : memref<120x16xf32, #tpu.memory_space<vmem>>, vector<120x16xf32>
    tpu.vector_store %arg8[%c0_6, %c0_7], %7 {strides = array<i32>} : memref<120x16xf32, #tpu.memory_space<vmem>>, vector<120x16xf32>,
    %c0_8 = arith.constant 0 : index
    %c0_9 = arith.constant 0 : index
    %9 = vector.load %arg8[%c0_8, %c0_9] : memref<120x16xf32, #tpu.memory_space<vmem>>, vector<98x16xf32>
    %c0_10 = arith.constant 0 : index
    %c0_11 = arith.constant 0 : index
    %c0_12 = arith.constant 0 : index
    %10 = vector.load %arg3[%c0_10, %c0_11, %c0_12] : memref<9x16x32xf32, #tpu.memory_space<vmem>>, vector<1x16x32xf32>
    %11 = vector.shape_cast %10 : vector<1x16x32xf32> to vector<16x32xf32>
    %cst_13 = arith.constant dense<0.000000e+00> : vector<98x32xf32>
    %12 = tpu.matmul %9, %11, %cst_13 {dimension_numbers = #tpu.dot_dimension_numbers<[1], [0], [0], [1], [0, 0, 1, 1], [], []>} : vector<98x16xf32>, vector<16x32xf32>, vector<98x32xf32> -> vector<98x32xf32>
    %c1 = arith.constant 1 : index
    %c0_14 = arith.constant 0 : index
    %13 = vector.load %arg8[%c1, %c0_14] : memref<120x16xf32, #tpu.memory_space<vmem>>, vector<98x16xf32>
    %c1_15 = arith.constant 1 : index
    %c0_16 = arith.constant 0 : index
    %c0_17 = arith.constant 0 : index
    %14 = vector.load %arg3[%c1_15, %c0_16, %c0_17] : memref<9x16x32xf32, #tpu.memory_space<vmem>>, vector<1x16x32xf32>
    %15 = vector.shape_cast %14 : vector<1x16x32xf32> to vector<16x32xf32>
    %cst_18 = arith.constant dense<0.000000e+00> : vector<98x32xf32>
    %16 = tpu.matmul %13, %15, %cst_18 {dimension_numbers = #tpu.dot_dimension_numbers<[1], [0], [0], [1], [0, 0, 1, 1], [], []>} : vector<98x16xf32>, vector<16x32xf32>, vector<98x32xf32> -> vector<98x32xf32>
    %17 = arith.addf %12, %16 : vector<98x32xf32>
    %c2 = arith.constant 2 : index
    %c0_19 = arith.constant 0 : index
    %18 = vector.load %arg8[%c2, %c0_19] : memref<120x16xf32, #tpu.memory_space<vmem>>, vector<98x16xf32>
    %c2_20 = arith.constant 2 : index
    %c0_21 = arith.constant 0 : index
    %c0_22 = arith.constant 0 : index
    %19 = vector.load %arg3[%c2_20, %c0_21, %c0_22] : memref<9x16x32xf32, #tpu.memory_space<vmem>>, vector<1x16x32xf32>
    %20 = vector.shape_cast %19 : vector<1x16x32xf32> to vector<16x32xf32>
    %cst_23 = arith.constant dense<0.000000e+00> : vector<98x32xf32>
    %21 = tpu.matmul %18, %20, %cst_23 {dimension_numbers = #tpu.dot_dimension_numbers<[1], [0], [0], [1], [0, 0, 1, 1], [], []>} : vector<98x16xf32>, vector<16x32xf32>, vector<98x32xf32> -> vector<98x32xf32>
    %22 = arith.addf %17, %21 : vector<98x32xf32>
    %c10 = arith.constant 10 : index
    %c0_24 = arith.constant 0 : index
    %23 = vector.load %arg8[%c10, %c0_24] : memref<120x16xf32, #tpu.memory_space<vmem>>, vector<98x16xf32>
    %c3 = arith.constant 3 : index
    %c0_25 = arith.constant 0 : index
    %c0_26 = arith.constant 0 : index
    %24 = vector.load %arg3[%c3, %c0_25, %c0_26] : memref<9x16x32xf32, #tpu.memory_space<vmem>>, vector<1x16x32xf32>
    %25 = vector.shape_cast %24 : vector<1x16x32xf32> to vector<16x32xf32>
    %cst_27 = arith.constant dense<0.000000e+00> : vector<98x32xf32>
    %26 = tpu.matmul %23, %25, %cst_27 {dimension_numbers = #tpu.dot_dimension_numbers<[1], [0], [0], [1], [0, 0, 1, 1], [], []>} : vector<98x16xf32>, vector<16x32xf32>, vector<98x32xf32> -> vector<98x32xf32>
    %c11 = arith.constant 11 : index
    %c0_28 = arith.constant 0 : index
    %27 = vector.load %arg8[%c11, %c0_28] : memref<120x16xf32, #tpu.memory_space<vmem>>, vector<98x16xf32>
    %c4 = arith.constant 4 : index
    %c0_29 = arith.constant 0 : index
    %c0_30 = arith.constant 0 : index
    %28 = vector.load %arg3[%c4, %c0_29, %c0_30] : memref<9x16x32xf32, #tpu.memory_space<vmem>>, vector<1x16x32xf32>
    %29 = vector.shape_cast %28 : vector<1x16x32xf32> to vector<16x32xf32>
    %cst_31 = arith.constant dense<0.000000e+00> : vector<98x32xf32>
    %30 = tpu.matmul %27, %29, %cst_31 {dimension_numbers = #tpu.dot_dimension_numbers<[1], [0], [0], [1], [0, 0, 1, 1], [], []>} : vector<98x16xf32>, vector<16x32xf32>, vector<98x32xf32> -> vector<98x32xf32>
    %31 = arith.addf %26, %30 : vector<98x32xf32>
    %c12 = arith.constant 12 : index
    %c0_32 = arith.constant 0 : index
    %32 = vector.load %arg8[%c12, %c0_32] : memref<120x16xf32, #tpu.memory_space<vmem>>, vector<98x16xf32>
    %c5 = arith.constant 5 : index
    %c0_33 = arith.constant 0 : index
    %c0_34 = arith.constant 0 : index
    %33 = vector.load %arg3[%c5, %c0_33, %c0_34] : memref<9x16x32xf32, #tpu.memory_space<vmem>>, vector<1x16x32xf32>
    %34 = vector.shape_cast %33 : vector<1x16x32xf32> to vector<16x32xf32>
    %cst_35 = arith.constant dense<0.000000e+00> : vector<98x32xf32>
    %35 = tpu.matmul %32, %34, %cst_35 {dimension_numbers = #tpu.dot_dimension_numbers<[1], [0], [0], [1], [0, 0, 1, 1], [], []>} : vector<98x16xf32>, vector<16x32xf32>, vector<98x32xf32> -> vector<98x32xf32>
    %36 = arith.addf %31, %35 : vector<98x32xf32>
    %c20 = arith.constant 20 : index
    %c0_36 = arith.constant 0 : index
    %37 = vector.load %arg8[%c20, %c0_36] : memref<120x16xf32, #tpu.memory_space<vmem>>, vector<98x16xf32>
    %c6 = arith.constant 6 : index
    %c0_37 = arith.constant 0 : index
    %c0_38 = arith.constant 0 : index
    %38 = vector.load %arg3[%c6, %c0_37, %c0_38] : memref<9x16x32xf32, #tpu.memory_space<vmem>>, vector<1x16x32xf32>
    %39 = vector.shape_cast %38 : vector<1x16x32xf32> to vector<16x32xf32>
    %cst_39 = arith.constant dense<0.000000e+00> : vector<98x32xf32>
    %40 = tpu.matmul %37, %39, %cst_39 {dimension_numbers = #tpu.dot_dimension_numbers<[1], [0], [0], [1], [0, 0, 1, 1], [], []>} : vector<98x16xf32>, vector<16x32xf32>, vector<98x32xf32> -> vector<98x32xf32>
    %c21 = arith.constant 21 : index
    %c0_40 = arith.constant 0 : index
    %41 = vector.load %arg8[%c21, %c0_40] : memref<120x16xf32, #tpu.memory_space<vmem>>, vector<98x16xf32>
    %c7 = arith.constant 7 : index
    %c0_41 = arith.constant 0 : index
    %c0_42 = arith.constant 0 : index
    %42 = vector.load %arg3[%c7, %c0_41, %c0_42] : memref<9x16x32xf32, #tpu.memory_space<vmem>>, vector<1x16x32xf32>
    %43 = vector.shape_cast %42 : vector<1x16x32xf32> to vector<16x32xf32>
    %cst_43 = arith.constant dense<0.000000e+00> : vector<98x32xf32>
    %44 = tpu.matmul %41, %43, %cst_43 {dimension_numbers = #tpu.dot_dimension_numbers<[1], [0], [0], [1], [0, 0, 1, 1], [], []>} : vector<98x16xf32>, vector<16x32xf32>, vector<98x32xf32> -> vector<98x32xf32>
    %45 = arith.addf %40, %44 : vector<98x32xf32>
    %c22 = arith.constant 22 : index
    %c0_44 = arith.constant 0 : index
    %46 = vector.load %arg8[%c22, %c0_44] : memref<120x16xf32, #tpu.memory_space<vmem>>, vector<98x16xf32>
    %c8 = arith.constant 8 : index
    %c0_45 = arith.constant 0 : index
    %c0_46 = arith.constant 0 : index
    %47 = vector.load %arg3[%c8, %c0_45, %c0_46] : memref<9x16x32xf32, #tpu.memory_space<vmem>>, vector<1x16x32xf32>
    %48 = vector.shape_cast %47 : vector<1x16x32xf32> to vector<16x32xf32>
    %cst_47 = arith.constant dense<0.000000e+00> : vector<98x32xf32>
    %49 = tpu.matmul %46, %48, %cst_47 {dimension_numbers = #tpu.dot_dimension_numbers<[1], [0], [0], [1], [0, 0, 1, 1], [], []>} : vector<98x16xf32>, vector<16x32xf32>, vector<98x32xf32> -> vector<98x32xf32>
    %50 = arith.addf %45, %49 : vector<98x32xf32>
    %51 = arith.addf %22, %36 : vector<98x32xf32>
    %52 = arith.addf %51, %50 : vector<98x32xf32>
    %c0_48 = arith.constant 0 : index
    %c0_49 = arith.constant 0 : index
    %53 = vector.load %arg4[%c0_48, %c0_49] : memref<1x32xf32, #tpu.memory_space<vmem>>, vector<1x32xf32>
    %54 = vector.broadcast %53 : vector<1x32xf32> to vector<98x32xf32>
    %55 = arith.addf %52, %54 : vector<98x32xf32>
    %cst_50 = arith.constant 0.000000e+00 : f32
    %56 = vector.broadcast %cst_50 : f32 to vector<98x32xf32>
    %57 = arith.maximumf %55, %56 : vector<98x32xf32>
    %c0_51 = arith.constant 0 : index
    %c0_52 = arith.constant 0 : index
    %58 = vector.load %arg9[%c0_51, %c0_52] : memref<98x32xf32, #tpu.memory_space<vmem>>, vector<98x32xf32>
    tpu.vector_store %arg9[%c0_51, %c0_52], %57 {strides = array<i32>} : memref<98x32xf32, #tpu.memory_space<vmem>>, vector<98x32xf32>,
    %c0_53 = arith.constant 0 : index
    %c0_54 = arith.constant 0 : index
    %59 = vector.load %arg9[%c0_53, %c0_54] : memref<98x32xf32, #tpu.memory_space<vmem>>, vector<1x32xf32>
    %c0_55 = arith.constant 0 : index
    %c0_56 = arith.constant 0 : index
    %60 = vector.load %arg10[%c0_55, %c0_56] : memref<2x1024xf32, #tpu.memory_space<vmem>>, vector<1x32xf32>
    tpu.vector_store %arg10[%c0_55, %c0_56], %59 {strides = array<i32>} : memref<2x1024xf32, #tpu.memory_space<vmem>>, vector<1x32xf32>,
    %c1_57 = arith.constant 1 : index
    %c0_58 = arith.constant 0 : index
    %61 = vector.load %arg9[%c1_57, %c0_58] : memref<98x32xf32, #tpu.memory_space<vmem>>, vector<1x32xf32>
    %c0_59 = arith.constant 0 : index
    %c32 = arith.constant 32 : index
    %62 = vector.load %arg10[%c0_59, %c32] : memref<2x1024xf32, #tpu.memory_space<vmem>>, vector<1x32xf32>
    tpu.vector_store %arg10[%c0_59, %c32], %61 {strides = array<i32>} : memref<2x1024xf32, #tpu.memory_space<vmem>>, vector<1x32xf32>,
    %c2_60 = arith.constant 2 : index
    %c0_61 = arith.constant 0 : index
    %63 = vector.load %arg9[%c2_60, %c0_61] : memref<98x32xf32, #tpu.memory_space<vmem>>, vector<1x32xf32>
    %c0_62 = arith.constant 0 : index
    %c64 = arith.constant 64 : index
    %64 = vector.load %arg10[%c0_62, %c64] : memref<2x1024xf32, #tpu.memory_space<vmem>>, vector<1x32xf32>
    tpu.vector_store %arg10[%c0_62, %c64], %63 {strides = array<i32>} : memref<2x1024xf32, #tpu.memory_space<vmem>>, vector<1x32xf32>,
    %c3_63 = arith.constant 3 : index
    %c0_64 = arith.constant 0 : index
    %65 = vector.load %arg9[%c3_63, %c0_64] : memref<98x32xf32, #tpu.memory_space<vmem>>, vector<1x32xf32>
    %c0_65 = arith.constant 0 : index
    %c96 = arith.constant 96 : index
    %66 = vector.load %arg10[%c0_65, %c96] : memref<2x1024xf32, #tpu.memory_space<vmem>>, vector<1x32xf32>
    tpu.vector_store %arg10[%c0_65, %c96], %65 {strides = array<i32>} : memref<2x1024xf32, #tpu.memory_space<vmem>>, vector<1x32xf32>,
    %c4_66 = arith.constant 4 : index
    %c0_67 = arith.constant 0 : index
    %67 = vector.load %arg9[%c4_66, %c0_67] : memref<98x32xf32, #tpu.memory_space<vmem>>, vector<1x32xf32>
    %c0_68 = arith.constant 0 : index
    %c128 = arith.constant 128 : index
    %68 = vector.load %arg10[%c0_68, %c128] : memref<2x1024xf32, #tpu.memory_space<vmem>>, vector<1x32xf32>
    tpu.vector_store %arg10[%c0_68, %c128], %67 {strides = array<i32>} : memref<2x1024xf32, #tpu.memory_space<vmem>>, vector<1x32xf32>,
    %c5_69 = arith.constant 5 : index
    %c0_70 = arith.constant 0 : index
    %69 = vector.load %arg9[%c5_69, %c0_70] : memref<98x32xf32, #tpu.memory_space<vmem>>, vector<1x32xf32>
    %c0_71 = arith.constant 0 : index
    %c160 = arith.constant 160 : index
    %70 = vector.load %arg10[%c0_71, %c160] : memref<2x1024xf32, #tpu.memory_space<vmem>>, vector<1x32xf32>
    tpu.vector_store %arg10[%c0_71, %c160], %69 {strides = array<i32>} : memref<2x1024xf32, #tpu.memory_space<vmem>>, vector<1x32xf32>,
    %c6_72 = arith.constant 6 : index
    %c0_73 = arith.constant 0 : index
    %71 = vector.load %arg9[%c6_72, %c0_73] : memref<98x32xf32, #tpu.memory_space<vmem>>, vector<1x32xf32>
    %c0_74 = arith.constant 0 : index
    %c192 = arith.constant 192 : index
    %72 = vector.load %arg10[%c0_74, %c192] : memref<2x1024xf32, #tpu.memory_space<vmem>>, vector<1x32xf32>
    tpu.vector_store %arg10[%c0_74, %c192], %71 {strides = array<i32>} : memref<2x1024xf32, #tpu.memory_space<vmem>>, vector<1x32xf32>,
    %c7_75 = arith.constant 7 : index
    %c0_76 = arith.constant 0 : index
    %73 = vector.load %arg9[%c7_75, %c0_76] : memref<98x32xf32, #tpu.memory_space<vmem>>, vector<1x32xf32>
    %c0_77 = arith.constant 0 : index
    %c224 = arith.constant 224 : index
    %74 = vector.load %arg10[%c0_77, %c224] : memref<2x1024xf32, #tpu.memory_space<vmem>>, vector<1x32xf32>
    tpu.vector_store %arg10[%c0_77, %c224], %73 {strides = array<i32>} : memref<2x1024xf32, #tpu.memory_space<vmem>>, vector<1x32xf32>,
    %c10_78 = arith.constant 10 : index
    %c0_79 = arith.constant 0 : index
    %75 = vector.load %arg9[%c10_78, %c0_79] : memref<98x32xf32, #tpu.memory_space<vmem>>, vector<1x32xf32>
    %c0_80 = arith.constant 0 : index
    %c256 = arith.constant 256 : index
    %76 = vector.load %arg10[%c0_80, %c256] : memref<2x1024xf32, #tpu.memory_space<vmem>>, vector<1x32xf32>
    tpu.vector_store %arg10[%c0_80, %c256], %75 {strides = array<i32>} : memref<2x1024xf32, #tpu.memory_space<vmem>>, vector<1x32xf32>,
    %c11_81 = arith.constant 11 : index
    %c0_82 = arith.constant 0 : index
    %77 = vector.load %arg9[%c11_81, %c0_82] : memref<98x32xf32, #tpu.memory_space<vmem>>, vector<1x32xf32>
    %c0_83 = arith.constant 0 : index
    %c288 = arith.constant 288 : index
    %78 = vector.load %arg10[%c0_83, %c288] : memref<2x1024xf32, #tpu.memory_space<vmem>>, vector<1x32xf32>
    tpu.vector_store %arg10[%c0_83, %c288], %77 {strides = array<i32>} : memref<2x1024xf32, #tpu.memory_space<vmem>>, vector<1x32xf32>,
    %c12_84 = arith.constant 12 : index
    %c0_85 = arith.constant 0 : index
    %79 = vector.load %arg9[%c12_84, %c0_85] : memref<98x32xf32, #tpu.memory_space<vmem>>, vector<1x32xf32>
    %c0_86 = arith.constant 0 : index
    %c320 = arith.constant 320 : index
    %80 = vector.load %arg10[%c0_86, %c320] : memref<2x1024xf32, #tpu.memory_space<vmem>>, vector<1x32xf32>
    tpu.vector_store %arg10[%c0_86, %c320], %79 {strides = array<i32>} : memref<2x1024xf32, #tpu.memory_space<vmem>>, vector<1x32xf32>,
    %c13 = arith.constant 13 : index
    %c0_87 = arith.constant 0 : index
    %81 = vector.load %arg9[%c13, %c0_87] : memref<98x32xf32, #tpu.memory_space<vmem>>, vector<1x32xf32>
    %c0_88 = arith.constant 0 : index
    %c352 = arith.constant 352 : index
    %82 = vector.load %arg10[%c0_88, %c352] : memref<2x1024xf32, #tpu.memory_space<vmem>>, vector<1x32xf32>
    tpu.vector_store %arg10[%c0_88, %c352], %81 {strides = array<i32>} : memref<2x1024xf32, #tpu.memory_space<vmem>>, vector<1x32xf32>,
    %c14 = arith.constant 14 : index
    %c0_89 = arith.constant 0 : index
    %83 = vector.load %arg9[%c14, %c0_89] : memref<98x32xf32, #tpu.memory_space<vmem>>, vector<1x32xf32>
    %c0_90 = arith.constant 0 : index
    %c384 = arith.constant 384 : index
    %84 = vector.load %arg10[%c0_90, %c384] : memref<2x1024xf32, #tpu.memory_space<vmem>>, vector<1x32xf32>
    tpu.vector_store %arg10[%c0_90, %c384], %83 {strides = array<i32>} : memref<2x1024xf32, #tpu.memory_space<vmem>>, vector<1x32xf32>,
    %c15 = arith.constant 15 : index
    %c0_91 = arith.constant 0 : index
    %85 = vector.load %arg9[%c15, %c0_91] : memref<98x32xf32, #tpu.memory_space<vmem>>, vector<1x32xf32>
    %c0_92 = arith.constant 0 : index
    %c416 = arith.constant 416 : index
    %86 = vector.load %arg10[%c0_92, %c416] : memref<2x1024xf32, #tpu.memory_space<vmem>>, vector<1x32xf32>
    tpu.vector_store %arg10[%c0_92, %c416], %85 {strides = array<i32>} : memref<2x1024xf32, #tpu.memory_space<vmem>>, vector<1x32xf32>,
    %c16 = arith.constant 16 : index
    %c0_93 = arith.constant 0 : index
    %87 = vector.load %arg9[%c16, %c0_93] : memref<98x32xf32, #tpu.memory_space<vmem>>, vector<1x32xf32>
    %c0_94 = arith.constant 0 : index
    %c448 = arith.constant 448 : index
    %88 = vector.load %arg10[%c0_94, %c448] : memref<2x1024xf32, #tpu.memory_space<vmem>>, vector<1x32xf32>
    tpu.vector_store %arg10[%c0_94, %c448], %87 {strides = array<i32>} : memref<2x1024xf32, #tpu.memory_space<vmem>>, vector<1x32xf32>,
    %c17 = arith.constant 17 : index
    %c0_95 = arith.constant 0 : index
    %89 = vector.load %arg9[%c17, %c0_95] : memref<98x32xf32, #tpu.memory_space<vmem>>, vector<1x32xf32>
    %c0_96 = arith.constant 0 : index
    %c480 = arith.constant 480 : index
    %90 = vector.load %arg10[%c0_96, %c480] : memref<2x1024xf32, #tpu.memory_space<vmem>>, vector<1x32xf32>
    tpu.vector_store %arg10[%c0_96, %c480], %89 {strides = array<i32>} : memref<2x1024xf32, #tpu.memory_space<vmem>>, vector<1x32xf32>,
    %c20_97 = arith.constant 20 : index
    %c0_98 = arith.constant 0 : index
    %91 = vector.load %arg9[%c20_97, %c0_98] : memref<98x32xf32, #tpu.memory_space<vmem>>, vector<1x32xf32>
    %c0_99 = arith.constant 0 : index
    %c512 = arith.constant 512 : index
    %92 = vector.load %arg10[%c0_99, %c512] : memref<2x1024xf32, #tpu.memory_space<vmem>>, vector<1x32xf32>
    tpu.vector_store %arg10[%c0_99, %c512], %91 {strides = array<i32>} : memref<2x1024xf32, #tpu.memory_space<vmem>>, vector<1x32xf32>,
    %c21_100 = arith.constant 21 : index
    %c0_101 = arith.constant 0 : index
    %93 = vector.load %arg9[%c21_100, %c0_101] : memref<98x32xf32, #tpu.memory_space<vmem>>, vector<1x32xf32>
    %c0_102 = arith.constant 0 : index
    %c544 = arith.constant 544 : index
    %94 = vector.load %arg10[%c0_102, %c544] : memref<2x1024xf32, #tpu.memory_space<vmem>>, vector<1x32xf32>
    tpu.vector_store %arg10[%c0_102, %c544], %93 {strides = array<i32>} : memref<2x1024xf32, #tpu.memory_space<vmem>>, vector<1x32xf32>,
    %c22_103 = arith.constant 22 : index
    %c0_104 = arith.constant 0 : index
    %95 = vector.load %arg9[%c22_103, %c0_104] : memref<98x32xf32, #tpu.memory_space<vmem>>, vector<1x32xf32>
    %c0_105 = arith.constant 0 : index
    %c576 = arith.constant 576 : index
    %96 = vector.load %arg10[%c0_105, %c576] : memref<2x1024xf32, #tpu.memory_space<vmem>>, vector<1x32xf32>
    tpu.vector_store %arg10[%c0_105, %c576], %95 {strides = array<i32>} : memref<2x1024xf32, #tpu.memory_space<vmem>>, vector<1x32xf32>,
    %c23 = arith.constant 23 : index
    %c0_106 = arith.constant 0 : index
    %97 = vector.load %arg9[%c23, %c0_106] : memref<98x32xf32, #tpu.memory_space<vmem>>, vector<1x32xf32>
    %c0_107 = arith.constant 0 : index
    %c608 = arith.constant 608 : index
    %98 = vector.load %arg10[%c0_107, %c608] : memref<2x1024xf32, #tpu.memory_space<vmem>>, vector<1x32xf32>
    tpu.vector_store %arg10[%c0_107, %c608], %97 {strides = array<i32>} : memref<2x1024xf32, #tpu.memory_space<vmem>>, vector<1x32xf32>,
    %c24 = arith.constant 24 : index
    %c0_108 = arith.constant 0 : index
    %99 = vector.load %arg9[%c24, %c0_108] : memref<98x32xf32, #tpu.memory_space<vmem>>, vector<1x32xf32>
    %c0_109 = arith.constant 0 : index
    %c640 = arith.constant 640 : index
    %100 = vector.load %arg10[%c0_109, %c640] : memref<2x1024xf32, #tpu.memory_space<vmem>>, vector<1x32xf32>
    tpu.vector_store %arg10[%c0_109, %c640], %99 {strides = array<i32>} : memref<2x1024xf32, #tpu.memory_space<vmem>>, vector<1x32xf32>,
    %c25 = arith.constant 25 : index
    %c0_110 = arith.constant 0 : index
    %101 = vector.load %arg9[%c25, %c0_110] : memref<98x32xf32, #tpu.memory_space<vmem>>, vector<1x32xf32>
    %c0_111 = arith.constant 0 : index
    %c672 = arith.constant 672 : index
    %102 = vector.load %arg10[%c0_111, %c672] : memref<2x1024xf32, #tpu.memory_space<vmem>>, vector<1x32xf32>
    tpu.vector_store %arg10[%c0_111, %c672], %101 {strides = array<i32>} : memref<2x1024xf32, #tpu.memory_space<vmem>>, vector<1x32xf32>,
    %c26 = arith.constant 26 : index
    %c0_112 = arith.constant 0 : index
    %103 = vector.load %arg9[%c26, %c0_112] : memref<98x32xf32, #tpu.memory_space<vmem>>, vector<1x32xf32>
    %c0_113 = arith.constant 0 : index
    %c704 = arith.constant 704 : index
    %104 = vector.load %arg10[%c0_113, %c704] : memref<2x1024xf32, #tpu.memory_space<vmem>>, vector<1x32xf32>
    tpu.vector_store %arg10[%c0_113, %c704], %103 {strides = array<i32>} : memref<2x1024xf32, #tpu.memory_space<vmem>>, vector<1x32xf32>,
    %c27 = arith.constant 27 : index
    %c0_114 = arith.constant 0 : index
    %105 = vector.load %arg9[%c27, %c0_114] : memref<98x32xf32, #tpu.memory_space<vmem>>, vector<1x32xf32>
    %c0_115 = arith.constant 0 : index
    %c736 = arith.constant 736 : index
    %106 = vector.load %arg10[%c0_115, %c736] : memref<2x1024xf32, #tpu.memory_space<vmem>>, vector<1x32xf32>
    tpu.vector_store %arg10[%c0_115, %c736], %105 {strides = array<i32>} : memref<2x1024xf32, #tpu.memory_space<vmem>>, vector<1x32xf32>,
    %c30 = arith.constant 30 : index
    %c0_116 = arith.constant 0 : index
    %107 = vector.load %arg9[%c30, %c0_116] : memref<98x32xf32, #tpu.memory_space<vmem>>, vector<1x32xf32>
    %c0_117 = arith.constant 0 : index
    %c768 = arith.constant 768 : index
    %108 = vector.load %arg10[%c0_117, %c768] : memref<2x1024xf32, #tpu.memory_space<vmem>>, vector<1x32xf32>
    tpu.vector_store %arg10[%c0_117, %c768], %107 {strides = array<i32>} : memref<2x1024xf32, #tpu.memory_space<vmem>>, vector<1x32xf32>,
    %c31 = arith.constant 31 : index
    %c0_118 = arith.constant 0 : index
    %109 = vector.load %arg9[%c31, %c0_118] : memref<98x32xf32, #tpu.memory_space<vmem>>, vector<1x32xf32>
    %c0_119 = arith.constant 0 : index
    %c800 = arith.constant 800 : index
    %110 = vector.load %arg10[%c0_119, %c800] : memref<2x1024xf32, #tpu.memory_space<vmem>>, vector<1x32xf32>
    tpu.vector_store %arg10[%c0_119, %c800], %109 {strides = array<i32>} : memref<2x1024xf32, #tpu.memory_space<vmem>>, vector<1x32xf32>,
    %c32_120 = arith.constant 32 : index
    %c0_121 = arith.constant 0 : index
    %111 = vector.load %arg9[%c32_120, %c0_121] : memref<98x32xf32, #tpu.memory_space<vmem>>, vector<1x32xf32>
    %c0_122 = arith.constant 0 : index
    %c832 = arith.constant 832 : index
    %112 = vector.load %arg10[%c0_122, %c832] : memref<2x1024xf32, #tpu.memory_space<vmem>>, vector<1x32xf32>
    tpu.vector_store %arg10[%c0_122, %c832], %111 {strides = array<i32>} : memref<2x1024xf32, #tpu.memory_space<vmem>>, vector<1x32xf32>,
    %c33 = arith.constant 33 : index
    %c0_123 = arith.constant 0 : index
    %113 = vector.load %arg9[%c33, %c0_123] : memref<98x32xf32, #tpu.memory_space<vmem>>, vector<1x32xf32>
    %c0_124 = arith.constant 0 : index
    %c864 = arith.constant 864 : index
    %114 = vector.load %arg10[%c0_124, %c864] : memref<2x1024xf32, #tpu.memory_space<vmem>>, vector<1x32xf32>
    tpu.vector_store %arg10[%c0_124, %c864], %113 {strides = array<i32>} : memref<2x1024xf32, #tpu.memory_space<vmem>>, vector<1x32xf32>,
    %c34 = arith.constant 34 : index
    %c0_125 = arith.constant 0 : index
    %115 = vector.load %arg9[%c34, %c0_125] : memref<98x32xf32, #tpu.memory_space<vmem>>, vector<1x32xf32>
    %c0_126 = arith.constant 0 : index
    %c896 = arith.constant 896 : index
    %116 = vector.load %arg10[%c0_126, %c896] : memref<2x1024xf32, #tpu.memory_space<vmem>>, vector<1x32xf32>
    tpu.vector_store %arg10[%c0_126, %c896], %115 {strides = array<i32>} : memref<2x1024xf32, #tpu.memory_space<vmem>>, vector<1x32xf32>,
    %c35 = arith.constant 35 : index
    %c0_127 = arith.constant 0 : index
    %117 = vector.load %arg9[%c35, %c0_127] : memref<98x32xf32, #tpu.memory_space<vmem>>, vector<1x32xf32>
    %c0_128 = arith.constant 0 : index
    %c928 = arith.constant 928 : index
    %118 = vector.load %arg10[%c0_128, %c928] : memref<2x1024xf32, #tpu.memory_space<vmem>>, vector<1x32xf32>
    tpu.vector_store %arg10[%c0_128, %c928], %117 {strides = array<i32>} : memref<2x1024xf32, #tpu.memory_space<vmem>>, vector<1x32xf32>,
    %c36 = arith.constant 36 : index
    %c0_129 = arith.constant 0 : index
    %119 = vector.load %arg9[%c36, %c0_129] : memref<98x32xf32, #tpu.memory_space<vmem>>, vector<1x32xf32>
    %c0_130 = arith.constant 0 : index
    %c960 = arith.constant 960 : index
    %120 = vector.load %arg10[%c0_130, %c960] : memref<2x1024xf32, #tpu.memory_space<vmem>>, vector<1x32xf32>
    tpu.vector_store %arg10[%c0_130, %c960], %119 {strides = array<i32>} : memref<2x1024xf32, #tpu.memory_space<vmem>>, vector<1x32xf32>,
    %c37 = arith.constant 37 : index
    %c0_131 = arith.constant 0 : index
    %121 = vector.load %arg9[%c37, %c0_131] : memref<98x32xf32, #tpu.memory_space<vmem>>, vector<1x32xf32>
    %c0_132 = arith.constant 0 : index
    %c992 = arith.constant 992 : index
    %122 = vector.load %arg10[%c0_132, %c992] : memref<2x1024xf32, #tpu.memory_space<vmem>>, vector<1x32xf32>
    tpu.vector_store %arg10[%c0_132, %c992], %121 {strides = array<i32>} : memref<2x1024xf32, #tpu.memory_space<vmem>>, vector<1x32xf32>,
    %c60 = arith.constant 60 : index
    %c0_133 = arith.constant 0 : index
    %123 = vector.load %arg9[%c60, %c0_133] : memref<98x32xf32, #tpu.memory_space<vmem>>, vector<1x32xf32>
    %c1_134 = arith.constant 1 : index
    %c0_135 = arith.constant 0 : index
    %124 = vector.load %arg10[%c1_134, %c0_135] : memref<2x1024xf32, #tpu.memory_space<vmem>>, vector<1x32xf32>
    tpu.vector_store %arg10[%c1_134, %c0_135], %123 {strides = array<i32>} : memref<2x1024xf32, #tpu.memory_space<vmem>>, vector<1x32xf32>,
    %c61 = arith.constant 61 : index
    %c0_136 = arith.constant 0 : index
    %125 = vector.load %arg9[%c61, %c0_136] : memref<98x32xf32, #tpu.memory_space<vmem>>, vector<1x32xf32>
    %c1_137 = arith.constant 1 : index
    %c32_138 = arith.constant 32 : index
    %126 = vector.load %arg10[%c1_137, %c32_138] : memref<2x1024xf32, #tpu.memory_space<vmem>>, vector<1x32xf32>
    tpu.vector_store %arg10[%c1_137, %c32_138], %125 {strides = array<i32>} : memref<2x1024xf32, #tpu.memory_space<vmem>>, vector<1x32xf32>,
    %c62 = arith.constant 62 : index
    %c0_139 = arith.constant 0 : index
    %127 = vector.load %arg9[%c62, %c0_139] : memref<98x32xf32, #tpu.memory_space<vmem>>, vector<1x32xf32>
    %c1_140 = arith.constant 1 : index
    %c64_141 = arith.constant 64 : index
    %128 = vector.load %arg10[%c1_140, %c64_141] : memref<2x1024xf32, #tpu.memory_space<vmem>>, vector<1x32xf32>
    tpu.vector_store %arg10[%c1_140, %c64_141], %127 {strides = array<i32>} : memref<2x1024xf32, #tpu.memory_space<vmem>>, vector<1x32xf32>,
    %c63 = arith.constant 63 : index
    %c0_142 = arith.constant 0 : index
    %129 = vector.load %arg9[%c63, %c0_142] : memref<98x32xf32, #tpu.memory_space<vmem>>, vector<1x32xf32>
    %c1_143 = arith.constant 1 : index
    %c96_144 = arith.constant 96 : index
    %130 = vector.load %arg10[%c1_143, %c96_144] : memref<2x1024xf32, #tpu.memory_space<vmem>>, vector<1x32xf32>
    tpu.vector_store %arg10[%c1_143, %c96_144], %129 {strides = array<i32>} : memref<2x1024xf32, #tpu.memory_space<vmem>>, vector<1x32xf32>,
    %c64_145 = arith.constant 64 : index
    %c0_146 = arith.constant 0 : index
    %131 = vector.load %arg9[%c64_145, %c0_146] : memref<98x32xf32, #tpu.memory_space<vmem>>, vector<1x32xf32>
    %c1_147 = arith.constant 1 : index
    %c128_148 = arith.constant 128 : index
    %132 = vector.load %arg10[%c1_147, %c128_148] : memref<2x1024xf32, #tpu.memory_space<vmem>>, vector<1x32xf32>
    tpu.vector_store %arg10[%c1_147, %c128_148], %131 {strides = array<i32>} : memref<2x1024xf32, #tpu.memory_space<vmem>>, vector<1x32xf32>,
    %c65 = arith.constant 65 : index
    %c0_149 = arith.constant 0 : index
    %133 = vector.load %arg9[%c65, %c0_149] : memref<98x32xf32, #tpu.memory_space<vmem>>, vector<1x32xf32>
    %c1_150 = arith.constant 1 : index
    %c160_151 = arith.constant 160 : index
    %134 = vector.load %arg10[%c1_150, %c160_151] : memref<2x1024xf32, #tpu.memory_space<vmem>>, vector<1x32xf32>
    tpu.vector_store %arg10[%c1_150, %c160_151], %133 {strides = array<i32>} : memref<2x1024xf32, #tpu.memory_space<vmem>>, vector<1x32xf32>,
    %c66 = arith.constant 66 : index
    %c0_152 = arith.constant 0 : index
    %135 = vector.load %arg9[%c66, %c0_152] : memref<98x32xf32, #tpu.memory_space<vmem>>, vector<1x32xf32>
    %c1_153 = arith.constant 1 : index
    %c192_154 = arith.constant 192 : index
    %136 = vector.load %arg10[%c1_153, %c192_154] : memref<2x1024xf32, #tpu.memory_space<vmem>>, vector<1x32xf32>
    tpu.vector_store %arg10[%c1_153, %c192_154], %135 {strides = array<i32>} : memref<2x1024xf32, #tpu.memory_space<vmem>>, vector<1x32xf32>,
    %c67 = arith.constant 67 : index
    %c0_155 = arith.constant 0 : index
    %137 = vector.load %arg9[%c67, %c0_155] : memref<98x32xf32, #tpu.memory_space<vmem>>, vector<1x32xf32>
    %c1_156 = arith.constant 1 : index
    %c224_157 = arith.constant 224 : index
    %138 = vector.load %arg10[%c1_156, %c224_157] : memref<2x1024xf32, #tpu.memory_space<vmem>>, vector<1x32xf32>
    tpu.vector_store %arg10[%c1_156, %c224_157], %137 {strides = array<i32>} : memref<2x1024xf32, #tpu.memory_space<vmem>>, vector<1x32xf32>,
    %c70 = arith.constant 70 : index
    %c0_158 = arith.constant 0 : index
    %139 = vector.load %arg9[%c70, %c0_158] : memref<98x32xf32, #tpu.memory_space<vmem>>, vector<1x32xf32>
    %c1_159 = arith.constant 1 : index
    %c256_160 = arith.constant 256 : index
    %140 = vector.load %arg10[%c1_159, %c256_160] : memref<2x1024xf32, #tpu.memory_space<vmem>>, vector<1x32xf32>
    tpu.vector_store %arg10[%c1_159, %c256_160], %139 {strides = array<i32>} : memref<2x1024xf32, #tpu.memory_space<vmem>>, vector<1x32xf32>,
    %c71 = arith.constant 71 : index
    %c0_161 = arith.constant 0 : index
    %141 = vector.load %arg9[%c71, %c0_161] : memref<98x32xf32, #tpu.memory_space<vmem>>, vector<1x32xf32>
    %c1_162 = arith.constant 1 : index
    %c288_163 = arith.constant 288 : index
    %142 = vector.load %arg10[%c1_162, %c288_163] : memref<2x1024xf32, #tpu.memory_space<vmem>>, vector<1x32xf32>
    tpu.vector_store %arg10[%c1_162, %c288_163], %141 {strides = array<i32>} : memref<2x1024xf32, #tpu.memory_space<vmem>>, vector<1x32xf32>,
    %c72 = arith.constant 72 : index
    %c0_164 = arith.constant 0 : index
    %143 = vector.load %arg9[%c72, %c0_164] : memref<98x32xf32, #tpu.memory_space<vmem>>, vector<1x32xf32>
    %c1_165 = arith.constant 1 : index
    %c320_166 = arith.constant 320 : index
    %144 = vector.load %arg10[%c1_165, %c320_166] : memref<2x1024xf32, #tpu.memory_space<vmem>>, vector<1x32xf32>
    tpu.vector_store %arg10[%c1_165, %c320_166], %143 {strides = array<i32>} : memref<2x1024xf32, #tpu.memory_space<vmem>>, vector<1x32xf32>,
    %c73 = arith.constant 73 : index
    %c0_167 = arith.constant 0 : index
    %145 = vector.load %arg9[%c73, %c0_167] : memref<98x32xf32, #tpu.memory_space<vmem>>, vector<1x32xf32>
    %c1_168 = arith.constant 1 : index
    %c352_169 = arith.constant 352 : index
    %146 = vector.load %arg10[%c1_168, %c352_169] : memref<2x1024xf32, #tpu.memory_space<vmem>>, vector<1x32xf32>
    tpu.vector_store %arg10[%c1_168, %c352_169], %145 {strides = array<i32>} : memref<2x1024xf32, #tpu.memory_space<vmem>>, vector<1x32xf32>,
    %c74 = arith.constant 74 : index
    %c0_170 = arith.constant 0 : index
    %147 = vector.load %arg9[%c74, %c0_170] : memref<98x32xf32, #tpu.memory_space<vmem>>, vector<1x32xf32>
    %c1_171 = arith.constant 1 : index
    %c384_172 = arith.constant 384 : index
    %148 = vector.load %arg10[%c1_171, %c384_172] : memref<2x1024xf32, #tpu.memory_space<vmem>>, vector<1x32xf32>
    tpu.vector_store %arg10[%c1_171, %c384_172], %147 {strides = array<i32>} : memref<2x1024xf32, #tpu.memory_space<vmem>>, vector<1x32xf32>,
    %c75 = arith.constant 75 : index
    %c0_173 = arith.constant 0 : index
    %149 = vector.load %arg9[%c75, %c0_173] : memref<98x32xf32, #tpu.memory_space<vmem>>, vector<1x32xf32>
    %c1_174 = arith.constant 1 : index
    %c416_175 = arith.constant 416 : index
    %150 = vector.load %arg10[%c1_174, %c416_175] : memref<2x1024xf32, #tpu.memory_space<vmem>>, vector<1x32xf32>
    tpu.vector_store %arg10[%c1_174, %c416_175], %149 {strides = array<i32>} : memref<2x1024xf32, #tpu.memory_space<vmem>>, vector<1x32xf32>,
    %c76 = arith.constant 76 : index
    %c0_176 = arith.constant 0 : index
    %151 = vector.load %arg9[%c76, %c0_176] : memref<98x32xf32, #tpu.memory_space<vmem>>, vector<1x32xf32>
    %c1_177 = arith.constant 1 : index
    %c448_178 = arith.constant 448 : index
    %152 = vector.load %arg10[%c1_177, %c448_178] : memref<2x1024xf32, #tpu.memory_space<vmem>>, vector<1x32xf32>
    tpu.vector_store %arg10[%c1_177, %c448_178], %151 {strides = array<i32>} : memref<2x1024xf32, #tpu.memory_space<vmem>>, vector<1x32xf32>,
    %c77 = arith.constant 77 : index
    %c0_179 = arith.constant 0 : index
    %153 = vector.load %arg9[%c77, %c0_179] : memref<98x32xf32, #tpu.memory_space<vmem>>, vector<1x32xf32>
    %c1_180 = arith.constant 1 : index
    %c480_181 = arith.constant 480 : index
    %154 = vector.load %arg10[%c1_180, %c480_181] : memref<2x1024xf32, #tpu.memory_space<vmem>>, vector<1x32xf32>
    tpu.vector_store %arg10[%c1_180, %c480_181], %153 {strides = array<i32>} : memref<2x1024xf32, #tpu.memory_space<vmem>>, vector<1x32xf32>,
    %c80 = arith.constant 80 : index
    %c0_182 = arith.constant 0 : index
    %155 = vector.load %arg9[%c80, %c0_182] : memref<98x32xf32, #tpu.memory_space<vmem>>, vector<1x32xf32>
    %c1_183 = arith.constant 1 : index
    %c512_184 = arith.constant 512 : index
    %156 = vector.load %arg10[%c1_183, %c512_184] : memref<2x1024xf32, #tpu.memory_space<vmem>>, vector<1x32xf32>
    tpu.vector_store %arg10[%c1_183, %c512_184], %155 {strides = array<i32>} : memref<2x1024xf32, #tpu.memory_space<vmem>>, vector<1x32xf32>,
    %c81 = arith.constant 81 : index
    %c0_185 = arith.constant 0 : index
    %157 = vector.load %arg9[%c81, %c0_185] : memref<98x32xf32, #tpu.memory_space<vmem>>, vector<1x32xf32>
    %c1_186 = arith.constant 1 : index
    %c544_187 = arith.constant 544 : index
    %158 = vector.load %arg10[%c1_186, %c544_187] : memref<2x1024xf32, #tpu.memory_space<vmem>>, vector<1x32xf32>
    tpu.vector_store %arg10[%c1_186, %c544_187], %157 {strides = array<i32>} : memref<2x1024xf32, #tpu.memory_space<vmem>>, vector<1x32xf32>,
    %c82 = arith.constant 82 : index
    %c0_188 = arith.constant 0 : index
    %159 = vector.load %arg9[%c82, %c0_188] : memref<98x32xf32, #tpu.memory_space<vmem>>, vector<1x32xf32>
    %c1_189 = arith.constant 1 : index
    %c576_190 = arith.constant 576 : index
    %160 = vector.load %arg10[%c1_189, %c576_190] : memref<2x1024xf32, #tpu.memory_space<vmem>>, vector<1x32xf32>
    tpu.vector_store %arg10[%c1_189, %c576_190], %159 {strides = array<i32>} : memref<2x1024xf32, #tpu.memory_space<vmem>>, vector<1x32xf32>,
    %c83 = arith.constant 83 : index
    %c0_191 = arith.constant 0 : index
    %161 = vector.load %arg9[%c83, %c0_191] : memref<98x32xf32, #tpu.memory_space<vmem>>, vector<1x32xf32>
    %c1_192 = arith.constant 1 : index
    %c608_193 = arith.constant 608 : index
    %162 = vector.load %arg10[%c1_192, %c608_193] : memref<2x1024xf32, #tpu.memory_space<vmem>>, vector<1x32xf32>
    tpu.vector_store %arg10[%c1_192, %c608_193], %161 {strides = array<i32>} : memref<2x1024xf32, #tpu.memory_space<vmem>>, vector<1x32xf32>,
    %c84 = arith.constant 84 : index
    %c0_194 = arith.constant 0 : index
    %163 = vector.load %arg9[%c84, %c0_194] : memref<98x32xf32, #tpu.memory_space<vmem>>, vector<1x32xf32>
    %c1_195 = arith.constant 1 : index
    %c640_196 = arith.constant 640 : index
    %164 = vector.load %arg10[%c1_195, %c640_196] : memref<2x1024xf32, #tpu.memory_space<vmem>>, vector<1x32xf32>
    tpu.vector_store %arg10[%c1_195, %c640_196], %163 {strides = array<i32>} : memref<2x1024xf32, #tpu.memory_space<vmem>>, vector<1x32xf32>,
    %c85 = arith.constant 85 : index
    %c0_197 = arith.constant 0 : index
    %165 = vector.load %arg9[%c85, %c0_197] : memref<98x32xf32, #tpu.memory_space<vmem>>, vector<1x32xf32>
    %c1_198 = arith.constant 1 : index
    %c672_199 = arith.constant 672 : index
    %166 = vector.load %arg10[%c1_198, %c672_199] : memref<2x1024xf32, #tpu.memory_space<vmem>>, vector<1x32xf32>
    tpu.vector_store %arg10[%c1_198, %c672_199], %165 {strides = array<i32>} : memref<2x1024xf32, #tpu.memory_space<vmem>>, vector<1x32xf32>,
    %c86 = arith.constant 86 : index
    %c0_200 = arith.constant 0 : index
    %167 = vector.load %arg9[%c86, %c0_200] : memref<98x32xf32, #tpu.memory_space<vmem>>, vector<1x32xf32>
    %c1_201 = arith.constant 1 : index
    %c704_202 = arith.constant 704 : index
    %168 = vector.load %arg10[%c1_201, %c704_202] : memref<2x1024xf32, #tpu.memory_space<vmem>>, vector<1x32xf32>
    tpu.vector_store %arg10[%c1_201, %c704_202], %167 {strides = array<i32>} : memref<2x1024xf32, #tpu.memory_space<vmem>>, vector<1x32xf32>,
    %c87 = arith.constant 87 : index
    %c0_203 = arith.constant 0 : index
    %169 = vector.load %arg9[%c87, %c0_203] : memref<98x32xf32, #tpu.memory_space<vmem>>, vector<1x32xf32>
    %c1_204 = arith.constant 1 : index
    %c736_205 = arith.constant 736 : index
    %170 = vector.load %arg10[%c1_204, %c736_205] : memref<2x1024xf32, #tpu.memory_space<vmem>>, vector<1x32xf32>
    tpu.vector_store %arg10[%c1_204, %c736_205], %169 {strides = array<i32>} : memref<2x1024xf32, #tpu.memory_space<vmem>>, vector<1x32xf32>,
    %c90 = arith.constant 90 : index
    %c0_206 = arith.constant 0 : index
    %171 = vector.load %arg9[%c90, %c0_206] : memref<98x32xf32, #tpu.memory_space<vmem>>, vector<1x32xf32>
    %c1_207 = arith.constant 1 : index
    %c768_208 = arith.constant 768 : index
    %172 = vector.load %arg10[%c1_207, %c768_208] : memref<2x1024xf32, #tpu.memory_space<vmem>>, vector<1x32xf32>
    tpu.vector_store %arg10[%c1_207, %c768_208], %171 {strides = array<i32>} : memref<2x1024xf32, #tpu.memory_space<vmem>>, vector<1x32xf32>,
    %c91 = arith.constant 91 : index
    %c0_209 = arith.constant 0 : index
    %173 = vector.load %arg9[%c91, %c0_209] : memref<98x32xf32, #tpu.memory_space<vmem>>, vector<1x32xf32>
    %c1_210 = arith.constant 1 : index
    %c800_211 = arith.constant 800 : index
    %174 = vector.load %arg10[%c1_210, %c800_211] : memref<2x1024xf32, #tpu.memory_space<vmem>>, vector<1x32xf32>
    tpu.vector_store %arg10[%c1_210, %c800_211], %173 {strides = array<i32>} : memref<2x1024xf32, #tpu.memory_space<vmem>>, vector<1x32xf32>,
    %c92 = arith.constant 92 : index
    %c0_212 = arith.constant 0 : index
    %175 = vector.load %arg9[%c92, %c0_212] : memref<98x32xf32, #tpu.memory_space<vmem>>, vector<1x32xf32>
    %c1_213 = arith.constant 1 : index
    %c832_214 = arith.constant 832 : index
    %176 = vector.load %arg10[%c1_213, %c832_214] : memref<2x1024xf32, #tpu.memory_space<vmem>>, vector<1x32xf32>
    tpu.vector_store %arg10[%c1_213, %c832_214], %175 {strides = array<i32>} : memref<2x1024xf32, #tpu.memory_space<vmem>>, vector<1x32xf32>,
    %c93 = arith.constant 93 : index
    %c0_215 = arith.constant 0 : index
    %177 = vector.load %arg9[%c93, %c0_215] : memref<98x32xf32, #tpu.memory_space<vmem>>, vector<1x32xf32>
    %c1_216 = arith.constant 1 : index
    %c864_217 = arith.constant 864 : index
    %178 = vector.load %arg10[%c1_216, %c864_217] : memref<2x1024xf32, #tpu.memory_space<vmem>>, vector<1x32xf32>
    tpu.vector_store %arg10[%c1_216, %c864_217], %177 {strides = array<i32>} : memref<2x1024xf32, #tpu.memory_space<vmem>>, vector<1x32xf32>,
    %c94 = arith.constant 94 : index
    %c0_218 = arith.constant 0 : index
    %179 = vector.load %arg9[%c94, %c0_218] : memref<98x32xf32, #tpu.memory_space<vmem>>, vector<1x32xf32>
    %c1_219 = arith.constant 1 : index
    %c896_220 = arith.constant 896 : index
    %180 = vector.load %arg10[%c1_219, %c896_220] : memref<2x1024xf32, #tpu.memory_space<vmem>>, vector<1x32xf32>
    tpu.vector_store %arg10[%c1_219, %c896_220], %179 {strides = array<i32>} : memref<2x1024xf32, #tpu.memory_space<vmem>>, vector<1x32xf32>,
    %c95 = arith.constant 95 : index
    %c0_221 = arith.constant 0 : index
    %181 = vector.load %arg9[%c95, %c0_221] : memref<98x32xf32, #tpu.memory_space<vmem>>, vector<1x32xf32>
    %c1_222 = arith.constant 1 : index
    %c928_223 = arith.constant 928 : index
    %182 = vector.load %arg10[%c1_222, %c928_223] : memref<2x1024xf32, #tpu.memory_space<vmem>>, vector<1x32xf32>
    tpu.vector_store %arg10[%c1_222, %c928_223], %181 {strides = array<i32>} : memref<2x1024xf32, #tpu.memory_space<vmem>>, vector<1x32xf32>,
    %c96_224 = arith.constant 96 : index
    %c0_225 = arith.constant 0 : index
    %183 = vector.load %arg9[%c96_224, %c0_225] : memref<98x32xf32, #tpu.memory_space<vmem>>, vector<1x32xf32>
    %c1_226 = arith.constant 1 : index
    %c960_227 = arith.constant 960 : index
    %184 = vector.load %arg10[%c1_226, %c960_227] : memref<2x1024xf32, #tpu.memory_space<vmem>>, vector<1x32xf32>
    tpu.vector_store %arg10[%c1_226, %c960_227], %183 {strides = array<i32>} : memref<2x1024xf32, #tpu.memory_space<vmem>>, vector<1x32xf32>,
    %c97 = arith.constant 97 : index
    %c0_228 = arith.constant 0 : index
    %185 = vector.load %arg9[%c97, %c0_228] : memref<98x32xf32, #tpu.memory_space<vmem>>, vector<1x32xf32>
    %c1_229 = arith.constant 1 : index
    %c992_230 = arith.constant 992 : index
    %186 = vector.load %arg10[%c1_229, %c992_230] : memref<2x1024xf32, #tpu.memory_space<vmem>>, vector<1x32xf32>
    tpu.vector_store %arg10[%c1_229, %c992_230], %185 {strides = array<i32>} : memref<2x1024xf32, #tpu.memory_space<vmem>>, vector<1x32xf32>,
    %c0_231 = arith.constant 0 : index
    %c0_232 = arith.constant 0 : index
    %187 = vector.load %arg10[%c0_231, %c0_232] : memref<2x1024xf32, #tpu.memory_space<vmem>>, vector<2x1024xf32>
    %c0_233 = arith.constant 0 : index
    %c0_234 = arith.constant 0 : index
    %188 = vector.load %arg5[%c0_233, %c0_234] : memref<1024x64xf32, #tpu.memory_space<vmem>>, vector<1024x64xf32>
    %cst_235 = arith.constant dense<0.000000e+00> : vector<2x64xf32>
    %189 = tpu.matmul %187, %188, %cst_235 {dimension_numbers = #tpu.dot_dimension_numbers<[1], [0], [0], [1], [0, 0, 1, 1], [], []>} : vector<2x1024xf32>, vector<1024x64xf32>, vector<2x64xf32> -> vector<2x64xf32>
    %c0_236 = arith.constant 0 : index
    %c0_237 = arith.constant 0 : index
    %190 = vector.load %arg6[%c0_236, %c0_237] : memref<1x64xf32, #tpu.memory_space<vmem>>, vector<1x64xf32>
    %191 = vector.broadcast %190 : vector<1x64xf32> to vector<2x64xf32>
    %192 = arith.addf %189, %191 : vector<2x64xf32>
    %c0_238 = arith.constant 0 : index
    %c0_239 = arith.constant 0 : index
    %193 = vector.load %arg7[%c0_238, %c0_239] : memref<2x64xf32, #tpu.memory_space<vmem>>, vector<2x64xf32>
    tpu.vector_store %arg7[%c0_238, %c0_239], %192 {strides = array<i32>} : memref<2x64xf32, #tpu.memory_space<vmem>>, vector<2x64xf32>,
    return
  }
}

</mosaic_0001>

<llo_original>
// kernel: pgam_forward.1
$region0: #{pgam_forward.1}
  #allocation0 [shape = 'u32[]', space=smem, size = 0x4, offset = 0x4, fixed_abs, tag = 'smem constant byte address 0x4 - core index']
  #allocation1 [shape = 'u32[144,128]{1,0:T(1,128)}', space=vmem, size = 0x12000, scoped, tag = 'internal scratch']
  #allocation2 [shape = 'f32[120,16]{1,0:T(8,128)}', space=vmem, size = 0xf000, scoped, tag = 'scratch operand']
  #allocation3 [shape = 'f32[98,32]{1,0:T(8,128)}', space=vmem, size = 0xd000, scoped, tag = 'scratch operand']
  #allocation4 [shape = 'f32[2,1024]{1,0:T(2,128)}', space=vmem, size = 0x2000, scoped, tag = 'scratch operand']
  %s0 = inlined_call_operand.vmem [shape: f32[120,18], index: 0, kind: input, shape index: {}]
  %s1 = inlined_call_operand.vmem [shape: f32[18,16], index: 1, kind: input, shape index: {}]
  %s2 = inlined_call_operand.vmem [shape: f32[1,16], index: 2, kind: input, shape index: {}]
  %s3 = inlined_call_operand.vmem [shape: f32[9,16,32], index: 3, kind: input, shape index: {}]
  %s4 = inlined_call_operand.vmem [shape: f32[1,32], index: 4, kind: input, shape index: {}]
  %s5 = inlined_call_operand.vmem [shape: f32[1024,64], index: 5, kind: input, shape index: {}]
  %s6 = inlined_call_operand.vmem [shape: f32[1,64], index: 6, kind: input, shape index: {}]
  %s7 = inlined_call_operand.hbm [shape: f32[2,64], index: 7, kind: output, shape index: {}]
  %s8 = sld [smem:[#allocation0]]
  $region38: #{pgam_forward.1} parent=0
    _
  %s10 = ssub.s32 1, %s8
  %s11 = scalar_select 0, %s10, %s8
  $region1: #{pgam_forward.1} parent=0
    #allocation5 [shape = 'u8[1024]{0}', space=vmem, size = 0x400, scoped, tag = 'output window, operand 0, single buffered']
    #allocation6 [shape = 's32[1]{0}', space=sflag, size = 0x4, scoped, tag = 'scoped memory for pgam_forward.1']
    %12 = vsyncpa [#allocation6], 0
    // Predicated region
    $region2: #{pgam_forward.1} parent=1 // pred_check
      _
    $region3: #{pgam_forward.1} parent=1 // pred_check_branch
      %14 = sbr.rel (0) target = $region5
    $region4: #{pgam_forward.1} parent=1 // pred_region
      _
    $region5: #{pgam_forward.1} parent=1 // pred_fallthru
      _
    // Predicated region
    $region6: #{pgam_forward.1} parent=1 // pred_check
      _
    $region7: #{pgam_forward.1} parent=1 // pred_check_branch
      %16 = sbr.rel (0) target = $region9
    $region8: #{pgam_forward.1} parent=1 // pred_region
      _
    $region9: #{pgam_forward.1} parent=1 // pred_fallthru
      _
    // Predicated region
    $region10: #{pgam_forward.1} parent=1 // pred_check
      _
    $region11: #{pgam_forward.1} parent=1 // pred_check_branch
      %18 = sbr.rel (0) target = $region13
    $region12: #{pgam_forward.1} parent=1 // pred_region
      _
    $region13: #{pgam_forward.1} parent=1 // pred_fallthru
      _
    // Predicated region
    $region14: #{pgam_forward.1} parent=1 // pred_check
      _
    $region15: #{pgam_forward.1} parent=1 // pred_check_branch
      %20 = sbr.rel (0) target = $region17
    $region16: #{pgam_forward.1} parent=1 // pred_region
      _
    $region17: #{pgam_forward.1} parent=1 // pred_fallthru
      _
    // Predicated region
    $region18: #{pgam_forward.1} parent=1 // pred_check
      _
    $region19: #{pgam_forward.1} parent=1 // pred_check_branch
      %22 = sbr.rel (0) target = $region21
    $region20: #{pgam_forward.1} parent=1 // pred_region
      _
    $region21: #{pgam_forward.1} parent=1 // pred_fallthru
      _
    // Predicated region
    $region22: #{pgam_forward.1} parent=1 // pred_check
      _
    $region23: #{pgam_forward.1} parent=1 // pred_check_branch
      %24 = sbr.rel (0) target = $region25
    $region24: #{pgam_forward.1} parent=1 // pred_region
      _
    $region25: #{pgam_forward.1} parent=1 // pred_fallthru
      _
    // Predicated region
    $region26: #{pgam_forward.1} parent=1 // pred_check
      _
    $region27: #{pgam_forward.1} parent=1 // pred_check_branch
      %26 = sbr.rel (0) target = $region29
    $region28: #{pgam_forward.1} parent=1 // pred_region
      _
    $region29: #{pgam_forward.1} parent=1 // pred_fallthru
      _
    %v27 = vld [vmem:[%s0] sm:$0xff]
    %v28 = vld [vmem:[%s0 + $0x8] sm:$0xff]
    %v29 = vld [vmem:[%s0 + $0x10] sm:$0xff]
    %v30 = vld [vmem:[%s0 + $0x18] sm:$0xff]
    %v31 = vld [vmem:[%s0 + $0x20] sm:$0xff]
    %v32 = vld [vmem:[%s0 + $0x28] sm:$0xff]
    %v33 = vld [vmem:[%s0 + $0x30] sm:$0xff]
    %v34 = vld [vmem:[%s0 + $0x38] sm:$0xff]
    %v35 = vld [vmem:[%s0 + $0x40] sm:$0xff]
    %v36 = vld [vmem:[%s0 + $0x48] sm:$0xff]
    %v37 = vld [vmem:[%s0 + $0x50] sm:$0xff]
    %v38 = vld [vmem:[%s0 + $0x58] sm:$0xff]
    %v39 = vld [vmem:[%s0 + $0x60] sm:$0xff]
    %v40 = vld [vmem:[%s0 + $0x68] sm:$0xff]
    %v41 = vld [vmem:[%s0 + $0x70] sm:$0xff]
    %v42 = vld [vmem:[%s1] sm:$0xff]
    %v43 = vld [vmem:[%s1 + $0x8] sm:$0xff]
    %v44 = vld [vmem:[%s1 + $0x10] sm:$0x3]
    %v45 = vld [vmem:[%s2] sm:$0x1]
    %v47 = vlaneseq
    %v48 = vshrl.u32 %v47, 7
    %v49 = vsub.s32 0, %v48
    %v50 = vrot.slane %v45, %v49
    %vm52 = vcmask 146432
    %v54 = vsel %vm52, %v27, 0
    %v57 = vsel %vm52, %v28, 0
    %v60 = vsel %vm52, %v29, 0
    %v63 = vsel %vm52, %v30, 0
    %v66 = vsel %vm52, %v31, 0
    %v69 = vsel %vm52, %v32, 0
    %v72 = vsel %vm52, %v33, 0
    %v75 = vsel %vm52, %v34, 0
    %v78 = vsel %vm52, %v35, 0
    %v81 = vsel %vm52, %v36, 0
    %v84 = vsel %vm52, %v37, 0
    %v87 = vsel %vm52, %v38, 0
    %v90 = vsel %vm52, %v39, 0
    %v93 = vsel %vm52, %v40, 0
    %v96 = vsel %vm52, %v41, 0
    %vm98 = vcmask 1041408
    %v100 = vsel %vm98, %v44, 0
    %102 = vmatprep.subr.mxu0 0.0
    %103 = vmatpush1.msra.mxu0 0.0
    %104 = vmatprep.subr.mxu0 0.0
    %105 = vmatpush1.msra.mxu0 0.0
    %106 = vmatprep.subr.mxu0 0.0
    %107 = vmatpush1.msra.mxu0 0.0
    %108 = vmatprep.subr.mxu0 0.0
    %109 = vmatpush1.msra.mxu0 0.0
    %110 = vmatprep.subr.mxu0 0.0
    %111 = vmatpush1.msra.mxu0 0.0
    %112 = vmatprep.subr.mxu0 0.0
    %113 = vmatpush1.msra.mxu0 0.0
    %114 = vmatprep.subr.mxu0 0.0
    %115 = vmatpush1.msra.mxu0 0.0
    %116 = vmatprep.subr.mxu0 0.0
    %117 = vmatpush1.msra.mxu0 0.0
    %118 = vmatprep.subr.mxu0 0.0
    %119 = vmatpush1.msra.mxu0 0.0
    %120 = vmatprep.subr.mxu0 0.0
    %121 = vmatpush1.msra.mxu0 0.0
    %122 = vmatprep.subr.mxu0 0.0
    %123 = vmatpush1.msra.mxu0 0.0
    %124 = vmatprep.subr.mxu0 0.0
    %125 = vmatpush1.msra.mxu0 0.0
    %126 = vmatprep.subr.mxu0 0.0
    %127 = vmatpush1.msra.mxu0 0.0
    %128 = vmatprep.subr.mxu0 0.0
    %129 = vmatpush1.msra.mxu0 %v100
    %130 = vmatprep.subr.mxu0 0.0
    %131 = vmatpush1.msra.mxu0 %v43
    %132 = vmatprep.subr.mxu0 0.0
    %133 = vmatpush1.msra.mxu0 %v42
    %134 = vmatprep.subr.mxu0 0.0
    %135 = vmatpush2.msra.mxu0 0.0
    %136 = vmatprep.subr.mxu0 0.0
    %137 = vmatpush2.msra.mxu0 0.0
    %138 = vmatprep.subr.mxu0 0.0
    %139 = vmatpush2.msra.mxu0 0.0
    %140 = vmatprep.subr.mxu0 0.0
    %141 = vmatpush2.msra.mxu0 0.0
    %142 = vmatprep.subr.mxu0 0.0
    %143 = vmatpush2.msra.mxu0 0.0
    %144 = vmatprep.subr.mxu0 0.0
    %145 = vmatpush2.msra.mxu0 0.0
    %146 = vmatprep.subr.mxu0 0.0
    %147 = vmatpush2.msra.mxu0 0.0
    %148 = vmatprep.subr.mxu0 0.0
    %149 = vmatpush2.msra.mxu0 0.0
    %150 = vmatprep.subr.mxu0 0.0
    %151 = vmatpush2.msra.mxu0 0.0
    %152 = vmatprep.subr.mxu0 0.0
    %153 = vmatpush2.msra.mxu0 0.0
    %154 = vmatprep.subr.mxu0 0.0
    %155 = vmatpush2.msra.mxu0 0.0
    %156 = vmatprep.subr.mxu0 0.0
    %157 = vmatpush2.msra.mxu0 0.0
    %158 = vmatprep.subr.mxu0 0.0
    %159 = vmatpush2.msra.mxu0 0.0
    %160 = vmatprep.subr.mxu0 0.0
    %161 = vmatpush2.msra.mxu0 0.0
    %162 = vmatprep.subr.mxu0 0.0
    %163 = vmatpush2.msra.mxu0 0.0
    %164 = vmatprep.subr.mxu0 0.0
    %165 = vmatpush2.msra.mxu0 0.0
    %166 = vmatprep.mubr.f32.mxu0 0.0
    %167 = vmatmul.mubr.f32.gmra.mxu0 %v54
    %v168 = vpop.f32.mrf.mxu0
    %v169 = vadd.f32 %v50, %v168
    %v170 = vpop.f32.mrf.mxu0
    %171 = vmatprep.mubr.f32.mxu0 0.0
    %172 = vmatmul.mubr.f32.gmra.mxu0 %v57
    %v173 = vpop.f32.mrf.mxu0
    %v174 = vadd.f32 %v50, %v173
    %v175 = vpop.f32.mrf.mxu0
    %176 = vmatprep.mubr.f32.mxu0 0.0
    %177 = vmatmul.mubr.f32.gmra.mxu0 %v60
    %v178 = vpop.f32.mrf.mxu0
    %v179 = vadd.f32 %v50, %v178
    %v180 = vpop.f32.mrf.mxu0
    %181 = vmatprep.mubr.f32.mxu0 0.0
    %182 = vmatmul.mubr.f32.gmra.mxu0 %v63
    %v183 = vpop.f32.mrf.mxu0
    %v184 = vadd.f32 %v50, %v183
    %v185 = vpop.f32.mrf.mxu0
    %186 = vmatprep.mubr.f32.mxu0 0.0
    %187 = vmatmul.mubr.f32.gmra.mxu0 %v66
    %v188 = vpop.f32.mrf.mxu0
    %v189 = vadd.f32 %v50, %v188
    %v190 = vpop.f32.mrf.mxu0
    %191 = vmatprep.mubr.f32.mxu0 0.0
    %192 = vmatmul.mubr.f32.gmra.mxu0 %v69
    %v193 = vpop.f32.mrf.mxu0
    %v194 = vadd.f32 %v50, %v193
    %v195 = vpop.f32.mrf.mxu0
    %196 = vmatprep.mubr.f32.mxu0 0.0
    %197 = vmatmul.mubr.f32.gmra.mxu0 %v72
    %v198 = vpop.f32.mrf.mxu0
    %v199 = vadd.f32 %v50, %v198
    %v200 = vpop.f32.mrf.mxu0
    %201 = vmatprep.mubr.f32.mxu0 0.0
    %202 = vmatmul.mubr.f32.gmra.mxu0 %v75
    %v203 = vpop.f32.mrf.mxu0
    %v204 = vadd.f32 %v50, %v203
    %v205 = vpop.f32.mrf.mxu0
    %206 = vmatprep.mubr.f32.mxu0 0.0
    %207 = vmatmul.mubr.f32.gmra.mxu0 %v78
    %v208 = vpop.f32.mrf.mxu0
    %v209 = vadd.f32 %v50, %v208
    %v210 = vpop.f32.mrf.mxu0
    %211 = vmatprep.mubr.f32.mxu0 0.0
    %212 = vmatmul.mubr.f32.gmra.mxu0 %v81
    %v213 = vpop.f32.mrf.mxu0
    %v214 = vadd.f32 %v50, %v213
    %v215 = vpop.f32.mrf.mxu0
    %216 = vmatprep.mubr.f32.mxu0 0.0
    %217 = vmatmul.mubr.f32.gmra.mxu0 %v84
    %v218 = vpop.f32.mrf.mxu0
    %v219 = vadd.f32 %v50, %v218
    %v220 = vpop.f32.mrf.mxu0
    %221 = vmatprep.mubr.f32.mxu0 0.0
    %222 = vmatmul.mubr.f32.gmra.mxu0 %v87
    %v223 = vpop.f32.mrf.mxu0
    %v224 = vadd.f32 %v50, %v223
    %v225 = vpop.f32.mrf.mxu0
    %226 = vmatprep.mubr.f32.mxu0 0.0
    %227 = vmatmul.mubr.f32.gmra.mxu0 %v90
    %v228 = vpop.f32.mrf.mxu0
    %v229 = vadd.f32 %v50, %v228
    %v230 = vpop.f32.mrf.mxu0
    %231 = vmatprep.mubr.f32.mxu0 0.0
    %232 = vmatmul.mubr.f32.gmra.mxu0 %v93
    %v233 = vpop.f32.mrf.mxu0
    %v234 = vadd.f32 %v50, %v233
    %v235 = vpop.f32.mrf.mxu0
    %236 = vmatprep.mubr.f32.mxu0 0.0
    %237 = vmatmul.mubr.f32.gmra.mxu0 %v96
    %v238 = vpop.f32.mrf.mxu0
    %v239 = vadd.f32 %v50, %v238
    %v240 = vpop.f32.mrf.mxu0
    %241 = vdwg.mxu0
    %v242 = vmax.f32 %v169, 0.0
    %v243 = vmax.f32 %v174, 0.0
    %v244 = vmax.f32 %v179, 0.0
    %v245 = vmax.f32 %v184, 0.0
    %v246 = vmax.f32 %v189, 0.0
    %v247 = vmax.f32 %v194, 0.0
    %v248 = vmax.f32 %v199, 0.0
    %v249 = vmax.f32 %v204, 0.0
    %v250 = vmax.f32 %v209, 0.0
    %v251 = vmax.f32 %v214, 0.0
    %v252 = vmax.f32 %v219, 0.0
    %v253 = vmax.f32 %v224, 0.0
    %v254 = vmax.f32 %v229, 0.0
    %v255 = vmax.f32 %v234, 0.0
    %v256 = vmax.f32 %v239, 0.0
    %vm257 = vcmask 130048
    %258 = vst.msk [vmem:[#allocation2] sm:$0xff] %vm257, %v242
    %259 = vst.msk [vmem:[#allocation2 + $0x8] sm:$0xff] %vm257, %v243
    %260 = vst.msk [vmem:[#allocation2 + $0x10] sm:$0xff] %vm257, %v244
    %261 = vst.msk [vmem:[#allocation2 + $0x18] sm:$0xff] %vm257, %v245
    %262 = vst.msk [vmem:[#allocation2 + $0x20] sm:$0xff] %vm257, %v246
    %263 = vst.msk [vmem:[#allocation2 + $0x28] sm:$0xff] %vm257, %v247
    %264 = vst.msk [vmem:[#allocation2 + $0x30] sm:$0xff] %vm257, %v248
    %265 = vst.msk [vmem:[#allocation2 + $0x38] sm:$0xff] %vm257, %v249
    %266 = vst.msk [vmem:[#allocation2 + $0x40] sm:$0xff] %vm257, %v250
    %267 = vst.msk [vmem:[#allocation2 + $0x48] sm:$0xff] %vm257, %v251
    %268 = vst.msk [vmem:[#allocation2 + $0x50] sm:$0xff] %vm257, %v252
    %269 = vst.msk [vmem:[#allocation2 + $0x58] sm:$0xff] %vm257, %v253
    %270 = vst.msk [vmem:[#allocation2 + $0x60] sm:$0xff] %vm257, %v254
    %271 = vst.msk [vmem:[#allocation2 + $0x68] sm:$0xff] %vm257, %v255
    %272 = vst.msk [vmem:[#allocation2 + $0x70] sm:$0xff] %vm257, %v256
    %v273 = vld [vmem:[#allocation2] sm:$0xff]
    %v274 = vld [vmem:[#allocation2 + $0x8] sm:$0xff]
    %v275 = vld [vmem:[#allocation2 + $0x10] sm:$0xff]
    %v276 = vld [vmem:[#allocation2 + $0x18] sm:$0xff]
    %v277 = vld [vmem:[#allocation2 + $0x20] sm:$0xff]
    %v278 = vld [vmem:[#allocation2 + $0x28] sm:$0xff]
    %v279 = vld [vmem:[#allocation2 + $0x30] sm:$0xff]
    %v280 = vld [vmem:[#allocation2 + $0x38] sm:$0xff]
    %v281 = vld [vmem:[#allocation2 + $0x40] sm:$0xff]
    %v282 = vld [vmem:[#allocation2 + $0x48] sm:$0xff]
    %v283 = vld [vmem:[#allocation2 + $0x50] sm:$0xff]
    %v284 = vld [vmem:[#allocation2 + $0x58] sm:$0xff]
    %v285 = vld [vmem:[#allocation2 + $0x60] sm:$0x3]
    %v286 = vld [vmem:[%s3] sm:$0xff]
    %v287 = vld [vmem:[%s3 + $0x8] sm:$0xff]
    %v288 = vld [vmem:[#allocation2 + $0x1] sm:$0xff]
    %v289 = vld [vmem:[#allocation2 + $0x9] sm:$0xff]
    %v290 = vld [vmem:[#allocation2 + $0x11] sm:$0xff]
    %v291 = vld [vmem:[#allocation2 + $0x19] sm:$0xff]
    %v292 = vld [vmem:[#allocation2 + $0x21] sm:$0xff]
    %v293 = vld [vmem:[#allocation2 + $0x29] sm:$0xff]
    %v294 = vld [vmem:[#allocation2 + $0x31] sm:$0xff]
    %v295 = vld [vmem:[#allocation2 + $0x39] sm:$0xff]
    %v296 = vld [vmem:[#allocation2 + $0x41] sm:$0xff]
    %v297 = vld [vmem:[#allocation2 + $0x49] sm:$0xff]
    %v298 = vld [vmem:[#allocation2 + $0x51] sm:$0xff]
    %v299 = vld [vmem:[#allocation2 + $0x59] sm:$0xff]
    %v300 = vld [vmem:[#allocation2 + $0x61] sm:$0x3]
    %s301 = scalar_lea.vmem %s3, 16
    %v302 = vld [vmem:[%s301] sm:$0xff]
    %v303 = vld [vmem:[%s301 + $0x8] sm:$0xff]
    %v305 = vsel %vm257, %v288, 0
    %v308 = vsel %vm257, %v289, 0
    %v311 = vsel %vm257, %v290, 0
    %v314 = vsel %vm257, %v291, 0
    %v317 = vsel %vm257, %v292, 0
    %v320 = vsel %vm257, %v293, 0
    %v323 = vsel %vm257, %v294, 0
    %v326 = vsel %vm257, %v295, 0
    %v329 = vsel %vm257, %v296, 0
    %v332 = vsel %vm257, %v297, 0
    %v335 = vsel %vm257, %v298, 0
    %v338 = vsel %vm257, %v299, 0
    %v341 = vsel %vm257, %v300, 0
    %343 = vmatprep.subr.mxu0 0.0
    %344 = vmatpush1.msra.mxu0 0.0
    %345 = vmatprep.subr.mxu0 0.0
    %346 = vmatpush1.msra.mxu0 0.0
    %347 = vmatprep.subr.mxu0 0.0
    %348 = vmatpush1.msra.mxu0 0.0
    %349 = vmatprep.subr.mxu0 0.0
    %350 = vmatpush1.msra.mxu0 0.0
    %351 = vmatprep.subr.mxu0 0.0
    %352 = vmatpush1.msra.mxu0 0.0
    %353 = vmatprep.subr.mxu0 0.0
    %354 = vmatpush1.msra.mxu0 0.0
    %355 = vmatprep.subr.mxu0 0.0
    %356 = vmatpush1.msra.mxu0 0.0
    %357 = vmatprep.subr.mxu0 0.0
    %358 = vmatpush1.msra.mxu0 0.0
    %359 = vmatprep.subr.mxu0 0.0
    %360 = vmatpush1.msra.mxu0 0.0
    %361 = vmatprep.subr.mxu0 0.0
    %362 = vmatpush1.msra.mxu0 0.0
    %363 = vmatprep.subr.mxu0 0.0
    %364 = vmatpush1.msra.mxu0 0.0
    %365 = vmatprep.subr.mxu0 0.0
    %366 = vmatpush1.msra.mxu0 0.0
    %367 = vmatprep.subr.mxu0 0.0
    %368 = vmatpush1.msra.mxu0 0.0
    %369 = vmatprep.subr.mxu0 0.0
    %370 = vmatpush1.msra.mxu0 0.0
    %371 = vmatprep.subr.mxu0 0.0
    %372 = vmatpush1.msra.mxu0 %v303
    %373 = vmatprep.subr.mxu0 0.0
    %374 = vmatpush1.msra.mxu0 %v302
    %375 = vmatprep.subr.mxu0 0.0
    %376 = vmatpush2.msra.mxu0 0.0
    %377 = vmatprep.subr.mxu0 0.0
    %378 = vmatpush2.msra.mxu0 0.0
    %379 = vmatprep.subr.mxu0 0.0
    %380 = vmatpush2.msra.mxu0 0.0
    %381 = vmatprep.subr.mxu0 0.0
    %382 = vmatpush2.msra.mxu0 0.0
    %383 = vmatprep.subr.mxu0 0.0
    %384 = vmatpush2.msra.mxu0 0.0
    %385 = vmatprep.subr.mxu0 0.0
    %386 = vmatpush2.msra.mxu0 0.0
    %387 = vmatprep.subr.mxu0 0.0
    %388 = vmatpush2.msra.mxu0 0.0
    %389 = vmatprep.subr.mxu0 0.0
    %390 = vmatpush2.msra.mxu0 0.0
    %391 = vmatprep.subr.mxu0 0.0
    %392 = vmatpush2.msra.mxu0 0.0
    %393 = vmatprep.subr.mxu0 0.0
    %394 = vmatpush2.msra.mxu0 0.0
    %395 = vmatprep.subr.mxu0 0.0
    %396 = vmatpush2.msra.mxu0 0.0
    %397 = vmatprep.subr.mxu0 0.0
    %398 = vmatpush2.msra.mxu0 0.0
    %399 = vmatprep.subr.mxu0 0.0
    %400 = vmatpush2.msra.mxu0 0.0
    %401 = vmatprep.subr.mxu0 0.0
    %402 = vmatpush2.msra.mxu0 0.0
    %403 = vmatprep.subr.mxu0 0.0
    %404 = vmatpush2.msra.mxu0 0.0
    %405 = vmatprep.subr.mxu0 0.0
    %406 = vmatpush2.msra.mxu0 0.0
    %407 = vmatprep.mubr.f32.mxu0 0.0
    %408 = vmatmul.mubr.f32.gmra.mxu0 %v305
    %v409 = vpop.f32.mrf.mxu0
    %v410 = vadd.f32 0.0, %v409
    %v411 = vpop.f32.mrf.mxu0
    %412 = vmatprep.mubr.f32.mxu0 0.0
    %413 = vmatmul.mubr.f32.gmra.mxu0 %v308
    %v414 = vpop.f32.mrf.mxu0
    %v415 = vadd.f32 0.0, %v414
    %v416 = vpop.f32.mrf.mxu0
    %417 = vmatprep.mubr.f32.mxu0 0.0
    %418 = vmatmul.mubr.f32.gmra.mxu0 %v311
    %v419 = vpop.f32.mrf.mxu0
    %v420 = vadd.f32 0.0, %v419
    %v421 = vpop.f32.mrf.mxu0
    %422 = vmatprep.mubr.f32.mxu0 0.0
    %423 = vmatmul.mubr.f32.gmra.mxu0 %v314
    %v424 = vpop.f32.mrf.mxu0
    %v425 = vadd.f32 0.0, %v424
    %v426 = vpop.f32.mrf.mxu0
    %427 = vmatprep.mubr.f32.mxu0 0.0
    %428 = vmatmul.mubr.f32.gmra.mxu0 %v317
    %v429 = vpop.f32.mrf.mxu0
    %v430 = vadd.f32 0.0, %v429
    %v431 = vpop.f32.mrf.mxu0
    %432 = vmatprep.mubr.f32.mxu0 0.0
    %433 = vmatmul.mubr.f32.gmra.mxu0 %v320
    %v434 = vpop.f32.mrf.mxu0
    %v435 = vadd.f32 0.0, %v434
    %v436 = vpop.f32.mrf.mxu0
    %437 = vmatprep.mubr.f32.mxu0 0.0
    %438 = vmatmul.mubr.f32.gmra.mxu0 %v323
    %v439 = vpop.f32.mrf.mxu0
    %v440 = vadd.f32 0.0, %v439
    %v441 = vpop.f32.mrf.mxu0
    %442 = vmatprep.mubr.f32.mxu0 0.0
    %443 = vmatmul.mubr.f32.gmra.mxu0 %v326
    %v444 = vpop.f32.mrf.mxu0
    %v445 = vadd.f32 0.0, %v444
    %v446 = vpop.f32.mrf.mxu0
    %447 = vmatprep.mubr.f32.mxu0 0.0
    %448 = vmatmul.mubr.f32.gmra.mxu0 %v329
    %v449 = vpop.f32.mrf.mxu0
    %v450 = vadd.f32 0.0, %v449
    %v451 = vpop.f32.mrf.mxu0
    %452 = vmatprep.mubr.f32.mxu0 0.0
    %453 = vmatmul.mubr.f32.gmra.mxu0 %v332
    %v454 = vpop.f32.mrf.mxu0
    %v455 = vadd.f32 0.0, %v454
    %v456 = vpop.f32.mrf.mxu0
    %457 = vmatprep.mubr.f32.mxu0 0.0
    %458 = vmatmul.mubr.f32.gmra.mxu0 %v335
    %v459 = vpop.f32.mrf.mxu0
    %v460 = vadd.f32 0.0, %v459
    %v461 = vpop.f32.mrf.mxu0
    %462 = vmatprep.mubr.f32.mxu0 0.0
    %463 = vmatmul.mubr.f32.gmra.mxu0 %v338
    %v464 = vpop.f32.mrf.mxu0
    %v465 = vadd.f32 0.0, %v464
    %v466 = vpop.f32.mrf.mxu0
    %467 = vmatprep.mubr.f32.mxu0 0.0
    %468 = vmatmul.mubr.f32.gmra.mxu0 %v341
    %v469 = vpop.f32.mrf.mxu0
    %v470 = vadd.f32 0.0, %v469
    %v471 = vpop.f32.mrf.mxu0
    %472 = vdwg.mxu0
    %v474 = vsel %vm257, %v273, 0
    %v477 = vsel %vm257, %v274, 0
    %v480 = vsel %vm257, %v275, 0
    %v483 = vsel %vm257, %v276, 0
    %v486 = vsel %vm257, %v277, 0
    %v489 = vsel %vm257, %v278, 0
    %v492 = vsel %vm257, %v279, 0
    %v495 = vsel %vm257, %v280, 0
    %v498 = vsel %vm257, %v281, 0
    %v501 = vsel %vm257, %v282, 0
    %v504 = vsel %vm257, %v283, 0
    %v507 = vsel %vm257, %v284, 0
    %v510 = vsel %vm257, %v285, 0
    %512 = vmatprep.subr.mxu0 0.0
    %513 = vmatpush1.msra.mxu0 0.0
    %514 = vmatprep.subr.mxu0 0.0
    %515 = vmatpush1.msra.mxu0 0.0
    %516 = vmatprep.subr.mxu0 0.0
    %517 = vmatpush1.msra.mxu0 0.0
    %518 = vmatprep.subr.mxu0 0.0
    %519 = vmatpush1.msra.mxu0 0.0
    %520 = vmatprep.subr.mxu0 0.0
    %521 = vmatpush1.msra.mxu0 0.0
    %522 = vmatprep.subr.mxu0 0.0
    %523 = vmatpush1.msra.mxu0 0.0
    %524 = vmatprep.subr.mxu0 0.0
    %525 = vmatpush1.msra.mxu0 0.0
    %526 = vmatprep.subr.mxu0 0.0
    %527 = vmatpush1.msra.mxu0 0.0
    %528 = vmatprep.subr.mxu0 0.0
    %529 = vmatpush1.msra.mxu0 0.0
    %530 = vmatprep.subr.mxu0 0.0
    %531 = vmatpush1.msra.mxu0 0.0
    %532 = vmatprep.subr.mxu0 0.0
    %533 = vmatpush1.msra.mxu0 0.0
    %534 = vmatprep.subr.mxu0 0.0
    %535 = vmatpush1.msra.mxu0 0.0
    %536 = vmatprep.subr.mxu0 0.0
    %537 = vmatpush1.msra.mxu0 0.0
    %538 = vmatprep.subr.mxu0 0.0
    %539 = vmatpush1.msra.mxu0 0.0
    %540 = vmatprep.subr.mxu0 0.0
    %541 = vmatpush1.msra.mxu0 %v287
    %542 = vmatprep.subr.mxu0 0.0
    %543 = vmatpush1.msra.mxu0 %v286
    %544 = vmatprep.subr.mxu0 0.0
    %545 = vmatpush2.msra.mxu0 0.0
    %546 = vmatprep.subr.mxu0 0.0
    %547 = vmatpush2.msra.mxu0 0.0
    %548 = vmatprep.subr.mxu0 0.0
    %549 = vmatpush2.msra.mxu0 0.0
    %550 = vmatprep.subr.mxu0 0.0
    %551 = vmatpush2.msra.mxu0 0.0
    %552 = vmatprep.subr.mxu0 0.0
    %553 = vmatpush2.msra.mxu0 0.0
    %554 = vmatprep.subr.mxu0 0.0
    %555 = vmatpush2.msra.mxu0 0.0
    %556 = vmatprep.subr.mxu0 0.0
    %557 = vmatpush2.msra.mxu0 0.0
    %558 = vmatprep.subr.mxu0 0.0
    %559 = vmatpush2.msra.mxu0 0.0
    %560 = vmatprep.subr.mxu0 0.0
    %561 = vmatpush2.msra.mxu0 0.0
    %562 = vmatprep.subr.mxu0 0.0
    %563 = vmatpush2.msra.mxu0 0.0
    %564 = vmatprep.subr.mxu0 0.0
    %565 = vmatpush2.msra.mxu0 0.0
    %566 = vmatprep.subr.mxu0 0.0
    %567 = vmatpush2.msra.mxu0 0.0
    %568 = vmatprep.subr.mxu0 0.0
    %569 = vmatpush2.msra.mxu0 0.0
    %570 = vmatprep.subr.mxu0 0.0
    %571 = vmatpush2.msra.mxu0 0.0
    %572 = vmatprep.subr.mxu0 0.0
    %573 = vmatpush2.msra.mxu0 0.0
    %574 = vmatprep.subr.mxu0 0.0
    %575 = vmatpush2.msra.mxu0 0.0
    %576 = vmatprep.mubr.f32.mxu0 0.0
    %577 = vmatmul.mubr.f32.gmra.mxu0 %v474
    %v578 = vpop.f32.mrf.mxu0
    %v579 = vadd.f32 %v410, %v578
    %v580 = vpop.f32.mrf.mxu0
    %581 = vmatprep.mubr.f32.mxu0 0.0
    %582 = vmatmul.mubr.f32.gmra.mxu0 %v477
    %v583 = vpop.f32.mrf.mxu0
    %v584 = vadd.f32 %v415, %v583
    %v585 = vpop.f32.mrf.mxu0
    %586 = vmatprep.mubr.f32.mxu0 0.0
    %587 = vmatmul.mubr.f32.gmra.mxu0 %v480
    %v588 = vpop.f32.mrf.mxu0
    %v589 = vadd.f32 %v420, %v588
    %v590 = vpop.f32.mrf.mxu0
    %591 = vmatprep.mubr.f32.mxu0 0.0
    %592 = vmatmul.mubr.f32.gmra.mxu0 %v483
    %v593 = vpop.f32.mrf.mxu0
    %v594 = vadd.f32 %v425, %v593
    %v595 = vpop.f32.mrf.mxu0
    %596 = vmatprep.mubr.f32.mxu0 0.0
    %597 = vmatmul.mubr.f32.gmra.mxu0 %v486
    %v598 = vpop.f32.mrf.mxu0
    %v599 = vadd.f32 %v430, %v598
    %v600 = vpop.f32.mrf.mxu0
    %601 = vmatprep.mubr.f32.mxu0 0.0
    %602 = vmatmul.mubr.f32.gmra.mxu0 %v489
    %v603 = vpop.f32.mrf.mxu0
    %v604 = vadd.f32 %v435, %v603
    %v605 = vpop.f32.mrf.mxu0
    %606 = vmatprep.mubr.f32.mxu0 0.0
    %607 = vmatmul.mubr.f32.gmra.mxu0 %v492
    %v608 = vpop.f32.mrf.mxu0
    %v609 = vadd.f32 %v440, %v608
    %v610 = vpop.f32.mrf.mxu0
    %611 = vmatprep.mubr.f32.mxu0 0.0
    %612 = vmatmul.mubr.f32.gmra.mxu0 %v495
    %v613 = vpop.f32.mrf.mxu0
    %v614 = vadd.f32 %v445, %v613
    %v615 = vpop.f32.mrf.mxu0
    %616 = vmatprep.mubr.f32.mxu0 0.0
    %617 = vmatmul.mubr.f32.gmra.mxu0 %v498
    %v618 = vpop.f32.mrf.mxu0
    %v619 = vadd.f32 %v450, %v618
    %v620 = vpop.f32.mrf.mxu0
    %621 = vmatprep.mubr.f32.mxu0 0.0
    %622 = vmatmul.mubr.f32.gmra.mxu0 %v501
    %v623 = vpop.f32.mrf.mxu0
    %v624 = vadd.f32 %v455, %v623
    %v625 = vpop.f32.mrf.mxu0
    %626 = vmatprep.mubr.f32.mxu0 0.0
    %627 = vmatmul.mubr.f32.gmra.mxu0 %v504
    %v628 = vpop.f32.mrf.mxu0
    %v629 = vadd.f32 %v460, %v628
    %v630 = vpop.f32.mrf.mxu0
    %631 = vmatprep.mubr.f32.mxu0 0.0
    %632 = vmatmul.mubr.f32.gmra.mxu0 %v507
    %v633 = vpop.f32.mrf.mxu0
    %v634 = vadd.f32 %v465, %v633
    %v635 = vpop.f32.mrf.mxu0
    %636 = vmatprep.mubr.f32.mxu0 0.0
    %637 = vmatmul.mubr.f32.gmra.mxu0 %v510
    %v638 = vpop.f32.mrf.mxu0
    %v639 = vadd.f32 %v470, %v638
    %v640 = vpop.f32.mrf.mxu0
    %641 = vdwg.mxu0
    %v642 = vld [vmem:[#allocation2 + $0x2] sm:$0xff]
    %v643 = vld [vmem:[#allocation2 + $0xa] sm:$0xff]
    %v644 = vld [vmem:[#allocation2 + $0x12] sm:$0xff]
    %v645 = vld [vmem:[#allocation2 + $0x1a] sm:$0xff]
    %v646 = vld [vmem:[#allocation2 + $0x22] sm:$0xff]
    %v647 = vld [vmem:[#allocation2 + $0x2a] sm:$0xff]
    %v648 = vld [vmem:[#allocation2 + $0x32] sm:$0xff]
    %v649 = vld [vmem:[#allocation2 + $0x3a] sm:$0xff]
    %v650 = vld [vmem:[#allocation2 + $0x42] sm:$0xff]
    %v651 = vld [vmem:[#allocation2 + $0x4a] sm:$0xff]
    %v652 = vld [vmem:[#allocation2 + $0x52] sm:$0xff]
    %v653 = vld [vmem:[#allocation2 + $0x5a] sm:$0xff]
    %v654 = vld [vmem:[#allocation2 + $0x62] sm:$0x3]
    %s655 = scalar_lea.vmem %s3, 32
    %v656 = vld [vmem:[%s655] sm:$0xff]
    %v657 = vld [vmem:[%s655 + $0x8] sm:$0xff]
    %v659 = vsel %vm257, %v642, 0
    %v662 = vsel %vm257, %v643, 0
    %v665 = vsel %vm257, %v644, 0
    %v668 = vsel %vm257, %v645, 0
    %v671 = vsel %vm257, %v646, 0
    %v674 = vsel %vm257, %v647, 0
    %v677 = vsel %vm257, %v648, 0
    %v680 = vsel %vm257, %v649, 0
    %v683 = vsel %vm257, %v650, 0
    %v686 = vsel %vm257, %v651, 0
    %v689 = vsel %vm257, %v652, 0
    %v692 = vsel %vm257, %v653, 0
    %v695 = vsel %vm257, %v654, 0
    %697 = vmatprep.subr.mxu0 0.0
    %698 = vmatpush1.msra.mxu0 0.0
    %699 = vmatprep.subr.mxu0 0.0
    %700 = vmatpush1.msra.mxu0 0.0
    %701 = vmatprep.subr.mxu0 0.0
    %702 = vmatpush1.msra.mxu0 0.0
    %703 = vmatprep.subr.mxu0 0.0
    %704 = vmatpush1.msra.mxu0 0.0
    %705 = vmatprep.subr.mxu0 0.0
    %706 = vmatpush1.msra.mxu0 0.0
    %707 = vmatprep.subr.mxu0 0.0
    %708 = vmatpush1.msra.mxu0 0.0
    %709 = vmatprep.subr.mxu0 0.0
    %710 = vmatpush1.msra.mxu0 0.0
    %711 = vmatprep.subr.mxu0 0.0
    %712 = vmatpush1.msra.mxu0 0.0
    %713 = vmatprep.subr.mxu0 0.0
    %714 = vmatpush1.msra.mxu0 0.0
    %715 = vmatprep.subr.mxu0 0.0
    %716 = vmatpush1.msra.mxu0 0.0
    %717 = vmatprep.subr.mxu0 0.0
    %718 = vmatpush1.msra.mxu0 0.0
    %719 = vmatprep.subr.mxu0 0.0
    %720 = vmatpush1.msra.mxu0 0.0
    %721 = vmatprep.subr.mxu0 0.0
    %722 = vmatpush1.msra.mxu0 0.0
    %723 = vmatprep.subr.mxu0 0.0
    %724 = vmatpush1.msra.mxu0 0.0
    %725 = vmatprep.subr.mxu0 0.0
    %726 = vmatpush1.msra.mxu0 %v657
    %727 = vmatprep.subr.mxu0 0.0
    %728 = vmatpush1.msra.mxu0 %v656
    %729 = vmatprep.subr.mxu0 0.0
    %730 = vmatpush2.msra.mxu0 0.0
    %731 = vmatprep.subr.mxu0 0.0
    %732 = vmatpush2.msra.mxu0 0.0
    %733 = vmatprep.subr.mxu0 0.0
    %734 = vmatpush2.msra.mxu0 0.0
    %735 = vmatprep.subr.mxu0 0.0
    %736 = vmatpush2.msra.mxu0 0.0
    %737 = vmatprep.subr.mxu0 0.0
    %738 = vmatpush2.msra.mxu0 0.0
    %739 = vmatprep.subr.mxu0 0.0
    %740 = vmatpush2.msra.mxu0 0.0
    %741 = vmatprep.subr.mxu0 0.0
    %742 = vmatpush2.msra.mxu0 0.0
    %743 = vmatprep.subr.mxu0 0.0
    %744 = vmatpush2.msra.mxu0 0.0
    %745 = vmatprep.subr.mxu0 0.0
    %746 = vmatpush2.msra.mxu0 0.0
    %747 = vmatprep.subr.mxu0 0.0
    %748 = vmatpush2.msra.mxu0 0.0
    %749 = vmatprep.subr.mxu0 0.0
    %750 = vmatpush2.msra.mxu0 0.0
    %751 = vmatprep.subr.mxu0 0.0
    %752 = vmatpush2.msra.mxu0 0.0
    %753 = vmatprep.subr.mxu0 0.0
    %754 = vmatpush2.msra.mxu0 0.0
    %755 = vmatprep.subr.mxu0 0.0
    %756 = vmatpush2.msra.mxu0 0.0
    %757 = vmatprep.subr.mxu0 0.0
    %758 = vmatpush2.msra.mxu0 0.0
    %759 = vmatprep.subr.mxu0 0.0
    %760 = vmatpush2.msra.mxu0 0.0
    %761 = vmatprep.mubr.f32.mxu0 0.0
    %762 = vmatmul.mubr.f32.gmra.mxu0 %v659
    %v763 = vpop.f32.mrf.mxu0
    %v764 = vadd.f32 0.0, %v763
    %v765 = vpop.f32.mrf.mxu0
    %766 = vmatprep.mubr.f32.mxu0 0.0
    %767 = vmatmul.mubr.f32.gmra.mxu0 %v662
    %v768 = vpop.f32.mrf.mxu0
    %v769 = vadd.f32 0.0, %v768
    %v770 = vpop.f32.mrf.mxu0
    %771 = vmatprep.mubr.f32.mxu0 0.0
    %772 = vmatmul.mubr.f32.gmra.mxu0 %v665
    %v773 = vpop.f32.mrf.mxu0
    %v774 = vadd.f32 0.0, %v773
    %v775 = vpop.f32.mrf.mxu0
    %776 = vmatprep.mubr.f32.mxu0 0.0
    %777 = vmatmul.mubr.f32.gmra.mxu0 %v668
    %v778 = vpop.f32.mrf.mxu0
    %v779 = vadd.f32 0.0, %v778
    %v780 = vpop.f32.mrf.mxu0
    %781 = vmatprep.mubr.f32.mxu0 0.0
    %782 = vmatmul.mubr.f32.gmra.mxu0 %v671
    %v783 = vpop.f32.mrf.mxu0
    %v784 = vadd.f32 0.0, %v783
    %v785 = vpop.f32.mrf.mxu0
    %786 = vmatprep.mubr.f32.mxu0 0.0
    %787 = vmatmul.mubr.f32.gmra.mxu0 %v674
    %v788 = vpop.f32.mrf.mxu0
    %v789 = vadd.f32 0.0, %v788
    %v790 = vpop.f32.mrf.mxu0
    %791 = vmatprep.mubr.f32.mxu0 0.0
    %792 = vmatmul.mubr.f32.gmra.mxu0 %v677
    %v793 = vpop.f32.mrf.mxu0
    %v794 = vadd.f32 0.0, %v793
    %v795 = vpop.f32.mrf.mxu0
    %796 = vmatprep.mubr.f32.mxu0 0.0
    %797 = vmatmul.mubr.f32.gmra.mxu0 %v680
    %v798 = vpop.f32.mrf.mxu0
    %v799 = vadd.f32 0.0, %v798
    %v800 = vpop.f32.mrf.mxu0
    %801 = vmatprep.mubr.f32.mxu0 0.0
    %802 = vmatmul.mubr.f32.gmra.mxu0 %v683
    %v803 = vpop.f32.mrf.mxu0
    %v804 = vadd.f32 0.0, %v803
    %v805 = vpop.f32.mrf.mxu0
    %806 = vmatprep.mubr.f32.mxu0 0.0
    %807 = vmatmul.mubr.f32.gmra.mxu0 %v686
    %v808 = vpop.f32.mrf.mxu0
    %v809 = vadd.f32 0.0, %v808
    %v810 = vpop.f32.mrf.mxu0
    %811 = vmatprep.mubr.f32.mxu0 0.0
    %812 = vmatmul.mubr.f32.gmra.mxu0 %v689
    %v813 = vpop.f32.mrf.mxu0
    %v814 = vadd.f32 0.0, %v813
    %v815 = vpop.f32.mrf.mxu0
    %816 = vmatprep.mubr.f32.mxu0 0.0
    %817 = vmatmul.mubr.f32.gmra.mxu0 %v692
    %v818 = vpop.f32.mrf.mxu0
    %v819 = vadd.f32 0.0, %v818
    %v820 = vpop.f32.mrf.mxu0
    %821 = vmatprep.mubr.f32.mxu0 0.0
    %822 = vmatmul.mubr.f32.gmra.mxu0 %v695
    %v823 = vpop.f32.mrf.mxu0
    %v824 = vadd.f32 0.0, %v823
    %v825 = vpop.f32.mrf.mxu0
    %826 = vdwg.mxu0
    %v827 = vadd.f32 %v579, %v764
    %v828 = vadd.f32 %v584, %v769
    %v829 = vadd.f32 %v589, %v774
    %v830 = vadd.f32 %v594, %v779
    %v831 = vadd.f32 %v599, %v784
    %v832 = vadd.f32 %v604, %v789
    %v833 = vadd.f32 %v609, %v794
    %v834 = vadd.f32 %v614, %v799
    %v835 = vadd.f32 %v619, %v804
    %v836 = vadd.f32 %v624, %v809
    %v837 = vadd.f32 %v629, %v814
    %v838 = vadd.f32 %v634, %v819
    %v839 = vadd.f32 %v639, %v824
    %v840 = vld [vmem:[#allocation2 + $0xa] sm:$0xff]
    %v841 = vld [vmem:[#allocation2 + $0x12] sm:$0xff]
    %v842 = vld [vmem:[#allocation2 + $0x1a] sm:$0xff]
    %v843 = vld [vmem:[#allocation2 + $0x22] sm:$0xff]
    %v844 = vld [vmem:[#allocation2 + $0x2a] sm:$0xff]
    %v845 = vld [vmem:[#allocation2 + $0x32] sm:$0xff]
    %v846 = vld [vmem:[#allocation2 + $0x3a] sm:$0xff]
    %v847 = vld [vmem:[#allocation2 + $0x42] sm:$0xff]
    %v848 = vld [vmem:[#allocation2 + $0x4a] sm:$0xff]
    %v849 = vld [vmem:[#allocation2 + $0x52] sm:$0xff]
    %v850 = vld [vmem:[#allocation2 + $0x5a] sm:$0xff]
    %v851 = vld [vmem:[#allocation2 + $0x62] sm:$0xff]
    %v852 = vld [vmem:[#allocation2 + $0x6a] sm:$0x3]
    %s853 = scalar_lea.vmem %s3, 48
    %v854 = vld [vmem:[%s853] sm:$0xff]
    %v855 = vld [vmem:[%s853 + $0x8] sm:$0xff]
    %v856 = vld [vmem:[#allocation2 + $0xb] sm:$0xff]
    %v857 = vld [vmem:[#allocation2 + $0x13] sm:$0xff]
    %v858 = vld [vmem:[#allocation2 + $0x1b] sm:$0xff]
    %v859 = vld [vmem:[#allocation2 + $0x23] sm:$0xff]
    %v860 = vld [vmem:[#allocation2 + $0x2b] sm:$0xff]
    %v861 = vld [vmem:[#allocation2 + $0x33] sm:$0xff]
    %v862 = vld [vmem:[#allocation2 + $0x3b] sm:$0xff]
    %v863 = vld [vmem:[#allocation2 + $0x43] sm:$0xff]
    %v864 = vld [vmem:[#allocation2 + $0x4b] sm:$0xff]
    %v865 = vld [vmem:[#allocation2 + $0x53] sm:$0xff]
    %v866 = vld [vmem:[#allocation2 + $0x5b] sm:$0xff]
    %v867 = vld [vmem:[#allocation2 + $0x63] sm:$0xff]
    %v868 = vld [vmem:[#allocation2 + $0x6b] sm:$0x3]
    %s869 = scalar_lea.vmem %s3, 64
    %v870 = vld [vmem:[%s869] sm:$0xff]
    %v871 = vld [vmem:[%s869 + $0x8] sm:$0xff]
    %v873 = vsel %vm257, %v856, 0
    %v876 = vsel %vm257, %v857, 0
    %v879 = vsel %vm257, %v858, 0
    %v882 = vsel %vm257, %v859, 0
    %v885 = vsel %vm257, %v860, 0
    %v888 = vsel %vm257, %v861, 0
    %v891 = vsel %vm257, %v862, 0
    %v894 = vsel %vm257, %v863, 0
    %v897 = vsel %vm257, %v864, 0
    %v900 = vsel %vm257, %v865, 0
    %v903 = vsel %vm257, %v866, 0
    %v906 = vsel %vm257, %v867, 0
    %v909 = vsel %vm257, %v868, 0
    %911 = vmatprep.subr.mxu0 0.0
    %912 = vmatpush1.msra.mxu0 0.0
    %913 = vmatprep.subr.mxu0 0.0
    %914 = vmatpush1.msra.mxu0 0.0
    %915 = vmatprep.subr.mxu0 0.0
    %916 = vmatpush1.msra.mxu0 0.0
    %917 = vmatprep.subr.mxu0 0.0
    %918 = vmatpush1.msra.mxu0 0.0
    %919 = vmatprep.subr.mxu0 0.0
    %920 = vmatpush1.msra.mxu0 0.0
    %921 = vmatprep.subr.mxu0 0.0
    %922 = vmatpush1.msra.mxu0 0.0
    %923 = vmatprep.subr.mxu0 0.0
    %924 = vmatpush1.msra.mxu0 0.0
    %925 = vmatprep.subr.mxu0 0.0
    %926 = vmatpush1.msra.mxu0 0.0
    %927 = vmatprep.subr.mxu0 0.0
    %928 = vmatpush1.msra.mxu0 0.0
    %929 = vmatprep.subr.mxu0 0.0
    %930 = vmatpush1.msra.mxu0 0.0
    %931 = vmatprep.subr.mxu0 0.0
    %932 = vmatpush1.msra.mxu0 0.0
    %933 = vmatprep.subr.mxu0 0.0
    %934 = vmatpush1.msra.mxu0 0.0
    %935 = vmatprep.subr.mxu0 0.0
    %936 = vmatpush1.msra.mxu0 0.0
    %937 = vmatprep.subr.mxu0 0.0
    %938 = vmatpush1.msra.mxu0 0.0
    %939 = vmatprep.subr.mxu0 0.0
    %940 = vmatpush1.msra.mxu0 %v871
    %941 = vmatprep.subr.mxu0 0.0
    %942 = vmatpush1.msra.mxu0 %v870
    %943 = vmatprep.subr.mxu0 0.0
    %944 = vmatpush2.msra.mxu0 0.0
    %945 = vmatprep.subr.mxu0 0.0
    %946 = vmatpush2.msra.mxu0 0.0
    %947 = vmatprep.subr.mxu0 0.0
    %948 = vmatpush2.msra.mxu0 0.0
    %949 = vmatprep.subr.mxu0 0.0
    %950 = vmatpush2.msra.mxu0 0.0
    %951 = vmatprep.subr.mxu0 0.0
    %952 = vmatpush2.msra.mxu0 0.0
    %953 = vmatprep.subr.mxu0 0.0
    %954 = vmatpush2.msra.mxu0 0.0
    %955 = vmatprep.subr.mxu0 0.0
    %956 = vmatpush2.msra.mxu0 0.0
    %957 = vmatprep.subr.mxu0 0.0
    %958 = vmatpush2.msra.mxu0 0.0
    %959 = vmatprep.subr.mxu0 0.0
    %960 = vmatpush2.msra.mxu0 0.0
    %961 = vmatprep.subr.mxu0 0.0
    %962 = vmatpush2.msra.mxu0 0.0
    %963 = vmatprep.subr.mxu0 0.0
    %964 = vmatpush2.msra.mxu0 0.0
    %965 = vmatprep.subr.mxu0 0.0
    %966 = vmatpush2.msra.mxu0 0.0
    %967 = vmatprep.subr.mxu0 0.0
    %968 = vmatpush2.msra.mxu0 0.0
    %969 = vmatprep.subr.mxu0 0.0
    %970 = vmatpush2.msra.mxu0 0.0
    %971 = vmatprep.subr.mxu0 0.0
    %972 = vmatpush2.msra.mxu0 0.0
    %973 = vmatprep.subr.mxu0 0.0
    %974 = vmatpush2.msra.mxu0 0.0
    %975 = vmatprep.mubr.f32.mxu0 0.0
    %976 = vmatmul.mubr.f32.gmra.mxu0 %v873
    %v977 = vpop.f32.mrf.mxu0
    %v978 = vadd.f32 0.0, %v977
    %v979 = vpop.f32.mrf.mxu0
    %980 = vmatprep.mubr.f32.mxu0 0.0
    %981 = vmatmul.mubr.f32.gmra.mxu0 %v876
    %v982 = vpop.f32.mrf.mxu0
    %v983 = vadd.f32 0.0, %v982
    %v984 = vpop.f32.mrf.mxu0
    %985 = vmatprep.mubr.f32.mxu0 0.0
    %986 = vmatmul.mubr.f32.gmra.mxu0 %v879
    %v987 = vpop.f32.mrf.mxu0
    %v988 = vadd.f32 0.0, %v987
    %v989 = vpop.f32.mrf.mxu0
    %990 = vmatprep.mubr.f32.mxu0 0.0
    %991 = vmatmul.mubr.f32.gmra.mxu0 %v882
    %v992 = vpop.f32.mrf.mxu0
    %v993 = vadd.f32 0.0, %v992
    %v994 = vpop.f32.mrf.mxu0
    %995 = vmatprep.mubr.f32.mxu0 0.0
    %996 = vmatmul.mubr.f32.gmra.mxu0 %v885
    %v997 = vpop.f32.mrf.mxu0
    %v998 = vadd.f32 0.0, %v997
    %v999 = vpop.f32.mrf.mxu0
    %1000 = vmatprep.mubr.f32.mxu0 0.0
    %1001 = vmatmul.mubr.f32.gmra.mxu0 %v888
    %v1002 = vpop.f32.mrf.mxu0
    %v1003 = vadd.f32 0.0, %v1002
    %v1004 = vpop.f32.mrf.mxu0
    %1005 = vmatprep.mubr.f32.mxu0 0.0
    %1006 = vmatmul.mubr.f32.gmra.mxu0 %v891
    %v1007 = vpop.f32.mrf.mxu0
    %v1008 = vadd.f32 0.0, %v1007
    %v1009 = vpop.f32.mrf.mxu0
    %1010 = vmatprep.mubr.f32.mxu0 0.0
    %1011 = vmatmul.mubr.f32.gmra.mxu0 %v894
    %v1012 = vpop.f32.mrf.mxu0
    %v1013 = vadd.f32 0.0, %v1012
    %v1014 = vpop.f32.mrf.mxu0
    %1015 = vmatprep.mubr.f32.mxu0 0.0
    %1016 = vmatmul.mubr.f32.gmra.mxu0 %v897
    %v1017 = vpop.f32.mrf.mxu0
    %v1018 = vadd.f32 0.0, %v1017
    %v1019 = vpop.f32.mrf.mxu0
    %1020 = vmatprep.mubr.f32.mxu0 0.0
    %1021 = vmatmul.mubr.f32.gmra.mxu0 %v900
    %v1022 = vpop.f32.mrf.mxu0
    %v1023 = vadd.f32 0.0, %v1022
    %v1024 = vpop.f32.mrf.mxu0
    %1025 = vmatprep.mubr.f32.mxu0 0.0
    %1026 = vmatmul.mubr.f32.gmra.mxu0 %v903
    %v1027 = vpop.f32.mrf.mxu0
    %v1028 = vadd.f32 0.0, %v1027
    %v1029 = vpop.f32.mrf.mxu0
    %1030 = vmatprep.mubr.f32.mxu0 0.0
    %1031 = vmatmul.mubr.f32.gmra.mxu0 %v906
    %v1032 = vpop.f32.mrf.mxu0
    %v1033 = vadd.f32 0.0, %v1032
    %v1034 = vpop.f32.mrf.mxu0
    %1035 = vmatprep.mubr.f32.mxu0 0.0
    %1036 = vmatmul.mubr.f32.gmra.mxu0 %v909
    %v1037 = vpop.f32.mrf.mxu0
    %v1038 = vadd.f32 0.0, %v1037
    %v1039 = vpop.f32.mrf.mxu0
    %1040 = vdwg.mxu0
    %v1042 = vsel %vm257, %v840, 0
    %v1045 = vsel %vm257, %v841, 0
    %v1048 = vsel %vm257, %v842, 0
    %v1051 = vsel %vm257, %v843, 0
    %v1054 = vsel %vm257, %v844, 0
    %v1057 = vsel %vm257, %v845, 0
    %v1060 = vsel %vm257, %v846, 0
    %v1063 = vsel %vm257, %v847, 0
    %v1066 = vsel %vm257, %v848, 0
    %v1069 = vsel %vm257, %v849, 0
    %v1072 = vsel %vm257, %v850, 0
    %v1075 = vsel %vm257, %v851, 0
    %v1078 = vsel %vm257, %v852, 0
    %1080 = vmatprep.subr.mxu0 0.0
    %1081 = vmatpush1.msra.mxu0 0.0
    %1082 = vmatprep.subr.mxu0 0.0
    %1083 = vmatpush1.msra.mxu0 0.0
    %1084 = vmatprep.subr.mxu0 0.0
    %1085 = vmatpush1.msra.mxu0 0.0
    %1086 = vmatprep.subr.mxu0 0.0
    %1087 = vmatpush1.msra.mxu0 0.0
    %1088 = vmatprep.subr.mxu0 0.0
    %1089 = vmatpush1.msra.mxu0 0.0
    %1090 = vmatprep.subr.mxu0 0.0
    %1091 = vmatpush1.msra.mxu0 0.0
    %1092 = vmatprep.subr.mxu0 0.0
    %1093 = vmatpush1.msra.mxu0 0.0
    %1094 = vmatprep.subr.mxu0 0.0
    %1095 = vmatpush1.msra.mxu0 0.0
    %1096 = vmatprep.subr.mxu0 0.0
    %1097 = vmatpush1.msra.mxu0 0.0
    %1098 = vmatprep.subr.mxu0 0.0
    %1099 = vmatpush1.msra.mxu0 0.0
    %1100 = vmatprep.subr.mxu0 0.0
    %1101 = vmatpush1.msra.mxu0 0.0
    %1102 = vmatprep.subr.mxu0 0.0
    %1103 = vmatpush1.msra.mxu0 0.0
    %1104 = vmatprep.subr.mxu0 0.0
    %1105 = vmatpush1.msra.mxu0 0.0
    %1106 = vmatprep.subr.mxu0 0.0
    %1107 = vmatpush1.msra.mxu0 0.0
    %1108 = vmatprep.subr.mxu0 0.0
    %1109 = vmatpush1.msra.mxu0 %v855
    %1110 = vmatprep.subr.mxu0 0.0
    %1111 = vmatpush1.msra.mxu0 %v854
    %1112 = vmatprep.subr.mxu0 0.0
    %1113 = vmatpush2.msra.mxu0 0.0
    %1114 = vmatprep.subr.mxu0 0.0
    %1115 = vmatpush2.msra.mxu0 0.0
    %1116 = vmatprep.subr.mxu0 0.0
    %1117 = vmatpush2.msra.mxu0 0.0
    %1118 = vmatprep.subr.mxu0 0.0
    %1119 = vmatpush2.msra.mxu0 0.0
    %1120 = vmatprep.subr.mxu0 0.0
    %1121 = vmatpush2.msra.mxu0 0.0
    %1122 = vmatprep.subr.mxu0 0.0
    %1123 = vmatpush2.msra.mxu0 0.0
    %1124 = vmatprep.subr.mxu0 0.0
    %1125 = vmatpush2.msra.mxu0 0.0
    %1126 = vmatprep.subr.mxu0 0.0
    %1127 = vmatpush2.msra.mxu0 0.0
    %1128 = vmatprep.subr.mxu0 0.0
    %1129 = vmatpush2.msra.mxu0 0.0
    %1130 = vmatprep.subr.mxu0 0.0
    %1131 = vmatpush2.msra.mxu0 0.0
    %1132 = vmatprep.subr.mxu0 0.0
    %1133 = vmatpush2.msra.mxu0 0.0
    %1134 = vmatprep.subr.mxu0 0.0
    %1135 = vmatpush2.msra.mxu0 0.0
    %1136 = vmatprep.subr.mxu0 0.0
    %1137 = vmatpush2.msra.mxu0 0.0
    %1138 = vmatprep.subr.mxu0 0.0
    %1139 = vmatpush2.msra.mxu0 0.0
    %1140 = vmatprep.subr.mxu0 0.0
    %1141 = vmatpush2.msra.mxu0 0.0
    %1142 = vmatprep.subr.mxu0 0.0
    %1143 = vmatpush2.msra.mxu0 0.0
    %1144 = vmatprep.mubr.f32.mxu0 0.0
    %1145 = vmatmul.mubr.f32.gmra.mxu0 %v1042
    %v1146 = vpop.f32.mrf.mxu0
    %v1147 = vadd.f32 %v978, %v1146
    %v1148 = vpop.f32.mrf.mxu0
    %1149 = vmatprep.mubr.f32.mxu0 0.0
    %1150 = vmatmul.mubr.f32.gmra.mxu0 %v1045
    %v1151 = vpop.f32.mrf.mxu0
    %v1152 = vadd.f32 %v983, %v1151
    %v1153 = vpop.f32.mrf.mxu0
    %1154 = vmatprep.mubr.f32.mxu0 0.0
    %1155 = vmatmul.mubr.f32.gmra.mxu0 %v1048
    %v1156 = vpop.f32.mrf.mxu0
    %v1157 = vadd.f32 %v988, %v1156
    %v1158 = vpop.f32.mrf.mxu0
    %1159 = vmatprep.mubr.f32.mxu0 0.0
    %1160 = vmatmul.mubr.f32.gmra.mxu0 %v1051
    %v1161 = vpop.f32.mrf.mxu0
    %v1162 = vadd.f32 %v993, %v1161
    %v1163 = vpop.f32.mrf.mxu0
    %1164 = vmatprep.mubr.f32.mxu0 0.0
    %1165 = vmatmul.mubr.f32.gmra.mxu0 %v1054
    %v1166 = vpop.f32.mrf.mxu0
    %v1167 = vadd.f32 %v998, %v1166
    %v1168 = vpop.f32.mrf.mxu0
    %1169 = vmatprep.mubr.f32.mxu0 0.0
    %1170 = vmatmul.mubr.f32.gmra.mxu0 %v1057
    %v1171 = vpop.f32.mrf.mxu0
    %v1172 = vadd.f32 %v1003, %v1171
    %v1173 = vpop.f32.mrf.mxu0
    %1174 = vmatprep.mubr.f32.mxu0 0.0
    %1175 = vmatmul.mubr.f32.gmra.mxu0 %v1060
    %v1176 = vpop.f32.mrf.mxu0
    %v1177 = vadd.f32 %v1008, %v1176
    %v1178 = vpop.f32.mrf.mxu0
    %1179 = vmatprep.mubr.f32.mxu0 0.0
    %1180 = vmatmul.mubr.f32.gmra.mxu0 %v1063
    %v1181 = vpop.f32.mrf.mxu0
    %v1182 = vadd.f32 %v1013, %v1181
    %v1183 = vpop.f32.mrf.mxu0
    %1184 = vmatprep.mubr.f32.mxu0 0.0
    %1185 = vmatmul.mubr.f32.gmra.mxu0 %v1066
    %v1186 = vpop.f32.mrf.mxu0
    %v1187 = vadd.f32 %v1018, %v1186
    %v1188 = vpop.f32.mrf.mxu0
    %1189 = vmatprep.mubr.f32.mxu0 0.0
    %1190 = vmatmul.mubr.f32.gmra.mxu0 %v1069
    %v1191 = vpop.f32.mrf.mxu0
    %v1192 = vadd.f32 %v1023, %v1191
    %v1193 = vpop.f32.mrf.mxu0
    %1194 = vmatprep.mubr.f32.mxu0 0.0
    %1195 = vmatmul.mubr.f32.gmra.mxu0 %v1072
    %v1196 = vpop.f32.mrf.mxu0
    %v1197 = vadd.f32 %v1028, %v1196
    %v1198 = vpop.f32.mrf.mxu0
    %1199 = vmatprep.mubr.f32.mxu0 0.0
    %1200 = vmatmul.mubr.f32.gmra.mxu0 %v1075
    %v1201 = vpop.f32.mrf.mxu0
    %v1202 = vadd.f32 %v1033, %v1201
    %v1203 = vpop.f32.mrf.mxu0
    %1204 = vmatprep.mubr.f32.mxu0 0.0
    %1205 = vmatmul.mubr.f32.gmra.mxu0 %v1078
    %v1206 = vpop.f32.mrf.mxu0
    %v1207 = vadd.f32 %v1038, %v1206
    %v1208 = vpop.f32.mrf.mxu0
    %1209 = vdwg.mxu0
    %v1210 = vld [vmem:[#allocation2 + $0xc] sm:$0xff]
    %v1211 = vld [vmem:[#allocation2 + $0x14] sm:$0xff]
    %v1212 = vld [vmem:[#allocation2 + $0x1c] sm:$0xff]
    %v1213 = vld [vmem:[#allocation2 + $0x24] sm:$0xff]
    %v1214 = vld [vmem:[#allocation2 + $0x2c] sm:$0xff]
    %v1215 = vld [vmem:[#allocation2 + $0x34] sm:$0xff]
    %v1216 = vld [vmem:[#allocation2 + $0x3c] sm:$0xff]
    %v1217 = vld [vmem:[#allocation2 + $0x44] sm:$0xff]
    %v1218 = vld [vmem:[#allocation2 + $0x4c] sm:$0xff]
    %v1219 = vld [vmem:[#allocation2 + $0x54] sm:$0xff]
    %v1220 = vld [vmem:[#allocation2 + $0x5c] sm:$0xff]
    %v1221 = vld [vmem:[#allocation2 + $0x64] sm:$0xff]
    %v1222 = vld [vmem:[#allocation2 + $0x6c] sm:$0x3]
    %s1223 = scalar_lea.vmem %s3, 80
    %v1224 = vld [vmem:[%s1223] sm:$0xff]
    %v1225 = vld [vmem:[%s1223 + $0x8] sm:$0xff]
    %v1227 = vsel %vm257, %v1210, 0
    %v1230 = vsel %vm257, %v1211, 0
    %v1233 = vsel %vm257, %v1212, 0
    %v1236 = vsel %vm257, %v1213, 0
    %v1239 = vsel %vm257, %v1214, 0
    %v1242 = vsel %vm257, %v1215, 0
    %v1245 = vsel %vm257, %v1216, 0
    %v1248 = vsel %vm257, %v1217, 0
    %v1251 = vsel %vm257, %v1218, 0
    %v1254 = vsel %vm257, %v1219, 0
    %v1257 = vsel %vm257, %v1220, 0
    %v1260 = vsel %vm257, %v1221, 0
    %v1263 = vsel %vm257, %v1222, 0
    %1265 = vmatprep.subr.mxu0 0.0
    %1266 = vmatpush1.msra.mxu0 0.0
    %1267 = vmatprep.subr.mxu0 0.0
    %1268 = vmatpush1.msra.mxu0 0.0
    %1269 = vmatprep.subr.mxu0 0.0
    %1270 = vmatpush1.msra.mxu0 0.0
    %1271 = vmatprep.subr.mxu0 0.0
    %1272 = vmatpush1.msra.mxu0 0.0
    %1273 = vmatprep.subr.mxu0 0.0
    %1274 = vmatpush1.msra.mxu0 0.0
    %1275 = vmatprep.subr.mxu0 0.0
    %1276 = vmatpush1.msra.mxu0 0.0
    %1277 = vmatprep.subr.mxu0 0.0
    %1278 = vmatpush1.msra.mxu0 0.0
    %1279 = vmatprep.subr.mxu0 0.0
    %1280 = vmatpush1.msra.mxu0 0.0
    %1281 = vmatprep.subr.mxu0 0.0
    %1282 = vmatpush1.msra.mxu0 0.0
    %1283 = vmatprep.subr.mxu0 0.0
    %1284 = vmatpush1.msra.mxu0 0.0
    %1285 = vmatprep.subr.mxu0 0.0
    %1286 = vmatpush1.msra.mxu0 0.0
    %1287 = vmatprep.subr.mxu0 0.0
    %1288 = vmatpush1.msra.mxu0 0.0
    %1289 = vmatprep.subr.mxu0 0.0
    %1290 = vmatpush1.msra.mxu0 0.0
    %1291 = vmatprep.subr.mxu0 0.0
    %1292 = vmatpush1.msra.mxu0 0.0
    %1293 = vmatprep.subr.mxu0 0.0
    %1294 = vmatpush1.msra.mxu0 %v1225
    %1295 = vmatprep.subr.mxu0 0.0
    %1296 = vmatpush1.msra.mxu0 %v1224
    %1297 = vmatprep.subr.mxu0 0.0
    %1298 = vmatpush2.msra.mxu0 0.0
    %1299 = vmatprep.subr.mxu0 0.0
    %1300 = vmatpush2.msra.mxu0 0.0
    %1301 = vmatprep.subr.mxu0 0.0
    %1302 = vmatpush2.msra.mxu0 0.0
    %1303 = vmatprep.subr.mxu0 0.0
    %1304 = vmatpush2.msra.mxu0 0.0
    %1305 = vmatprep.subr.mxu0 0.0
    %1306 = vmatpush2.msra.mxu0 0.0
    %1307 = vmatprep.subr.mxu0 0.0
    %1308 = vmatpush2.msra.mxu0 0.0
    %1309 = vmatprep.subr.mxu0 0.0
    %1310 = vmatpush2.msra.mxu0 0.0
    %1311 = vmatprep.subr.mxu0 0.0
    %1312 = vmatpush2.msra.mxu0 0.0
    %1313 = vmatprep.subr.mxu0 0.0
    %1314 = vmatpush2.msra.mxu0 0.0
    %1315 = vmatprep.subr.mxu0 0.0
    %1316 = vmatpush2.msra.mxu0 0.0
    %1317 = vmatprep.subr.mxu0 0.0
    %1318 = vmatpush2.msra.mxu0 0.0
    %1319 = vmatprep.subr.mxu0 0.0
    %1320 = vmatpush2.msra.mxu0 0.0
    %1321 = vmatprep.subr.mxu0 0.0
    %1322 = vmatpush2.msra.mxu0 0.0
    %1323 = vmatprep.subr.mxu0 0.0
    %1324 = vmatpush2.msra.mxu0 0.0
    %1325 = vmatprep.subr.mxu0 0.0
    %1326 = vmatpush2.msra.mxu0 0.0
    %1327 = vmatprep.subr.mxu0 0.0
    %1328 = vmatpush2.msra.mxu0 0.0
    %1329 = vmatprep.mubr.f32.mxu0 0.0
    %1330 = vmatmul.mubr.f32.gmra.mxu0 %v1227
    %v1331 = vpop.f32.mrf.mxu0
    %v1332 = vadd.f32 0.0, %v1331
    %v1333 = vpop.f32.mrf.mxu0
    %1334 = vmatprep.mubr.f32.mxu0 0.0
    %1335 = vmatmul.mubr.f32.gmra.mxu0 %v1230
    %v1336 = vpop.f32.mrf.mxu0
    %v1337 = vadd.f32 0.0, %v1336
    %v1338 = vpop.f32.mrf.mxu0
    %1339 = vmatprep.mubr.f32.mxu0 0.0
    %1340 = vmatmul.mubr.f32.gmra.mxu0 %v1233
    %v1341 = vpop.f32.mrf.mxu0
    %v1342 = vadd.f32 0.0, %v1341
    %v1343 = vpop.f32.mrf.mxu0
    %1344 = vmatprep.mubr.f32.mxu0 0.0
    %1345 = vmatmul.mubr.f32.gmra.mxu0 %v1236
    %v1346 = vpop.f32.mrf.mxu0
    %v1347 = vadd.f32 0.0, %v1346
    %v1348 = vpop.f32.mrf.mxu0
    %1349 = vmatprep.mubr.f32.mxu0 0.0
    %1350 = vmatmul.mubr.f32.gmra.mxu0 %v1239
    %v1351 = vpop.f32.mrf.mxu0
    %v1352 = vadd.f32 0.0, %v1351
    %v1353 = vpop.f32.mrf.mxu0
    %1354 = vmatprep.mubr.f32.mxu0 0.0
    %1355 = vmatmul.mubr.f32.gmra.mxu0 %v1242
    %v1356 = vpop.f32.mrf.mxu0
    %v1357 = vadd.f32 0.0, %v1356
    %v1358 = vpop.f32.mrf.mxu0
    %1359 = vmatprep.mubr.f32.mxu0 0.0
    %1360 = vmatmul.mubr.f32.gmra.mxu0 %v1245
    %v1361 = vpop.f32.mrf.mxu0
    %v1362 = vadd.f32 0.0, %v1361
    %v1363 = vpop.f32.mrf.mxu0
    %1364 = vmatprep.mubr.f32.mxu0 0.0
    %1365 = vmatmul.mubr.f32.gmra.mxu0 %v1248
    %v1366 = vpop.f32.mrf.mxu0
    %v1367 = vadd.f32 0.0, %v1366
    %v1368 = vpop.f32.mrf.mxu0
    %1369 = vmatprep.mubr.f32.mxu0 0.0
    %1370 = vmatmul.mubr.f32.gmra.mxu0 %v1251
    %v1371 = vpop.f32.mrf.mxu0
    %v1372 = vadd.f32 0.0, %v1371
    %v1373 = vpop.f32.mrf.mxu0
    %1374 = vmatprep.mubr.f32.mxu0 0.0
    %1375 = vmatmul.mubr.f32.gmra.mxu0 %v1254
    %v1376 = vpop.f32.mrf.mxu0
    %v1377 = vadd.f32 0.0, %v1376
    %v1378 = vpop.f32.mrf.mxu0
    %1379 = vmatprep.mubr.f32.mxu0 0.0
    %1380 = vmatmul.mubr.f32.gmra.mxu0 %v1257
    %v1381 = vpop.f32.mrf.mxu0
    %v1382 = vadd.f32 0.0, %v1381
    %v1383 = vpop.f32.mrf.mxu0
    %1384 = vmatprep.mubr.f32.mxu0 0.0
    %1385 = vmatmul.mubr.f32.gmra.mxu0 %v1260
    %v1386 = vpop.f32.mrf.mxu0
    %v1387 = vadd.f32 0.0, %v1386
    %v1388 = vpop.f32.mrf.mxu0
    %1389 = vmatprep.mubr.f32.mxu0 0.0
    %1390 = vmatmul.mubr.f32.gmra.mxu0 %v1263
    %v1391 = vpop.f32.mrf.mxu0
    %v1392 = vadd.f32 0.0, %v1391
    %v1393 = vpop.f32.mrf.mxu0
    %1394 = vdwg.mxu0
    %v1395 = vadd.f32 %v1147, %v1332
    %v1396 = vadd.f32 %v1152, %v1337
    %v1397 = vadd.f32 %v1157, %v1342
    %v1398 = vadd.f32 %v1162, %v1347
    %v1399 = vadd.f32 %v1167, %v1352
    %v1400 = vadd.f32 %v1172, %v1357
    %v1401 = vadd.f32 %v1177, %v1362
    %v1402 = vadd.f32 %v1182, %v1367
    %v1403 = vadd.f32 %v1187, %v1372
    %v1404 = vadd.f32 %v1192, %v1377
    %v1405 = vadd.f32 %v1197, %v1382
    %v1406 = vadd.f32 %v1202, %v1387
    %v1407 = vadd.f32 %v1207, %v1392
    %v1408 = vld [vmem:[#allocation2 + $0x14] sm:$0xff]
    %v1409 = vld [vmem:[#allocation2 + $0x1c] sm:$0xff]
    %v1410 = vld [vmem:[#allocation2 + $0x24] sm:$0xff]
    %v1411 = vld [vmem:[#allocation2 + $0x2c] sm:$0xff]
    %v1412 = vld [vmem:[#allocation2 + $0x34] sm:$0xff]
    %v1413 = vld [vmem:[#allocation2 + $0x3c] sm:$0xff]
    %v1414 = vld [vmem:[#allocation2 + $0x44] sm:$0xff]
    %v1415 = vld [vmem:[#allocation2 + $0x4c] sm:$0xff]
    %v1416 = vld [vmem:[#allocation2 + $0x54] sm:$0xff]
    %v1417 = vld [vmem:[#allocation2 + $0x5c] sm:$0xff]
    %v1418 = vld [vmem:[#allocation2 + $0x64] sm:$0xff]
    %v1419 = vld [vmem:[#allocation2 + $0x6c] sm:$0xff]
    %v1420 = vld [vmem:[#allocation2 + $0x74] sm:$0x3]
    %s1421 = scalar_lea.vmem %s3, 96
    %v1422 = vld [vmem:[%s1421] sm:$0xff]
    %v1423 = vld [vmem:[%s1421 + $0x8] sm:$0xff]
    %v1424 = vld [vmem:[#allocation2 + $0x15] sm:$0xff]
    %v1425 = vld [vmem:[#allocation2 + $0x1d] sm:$0xff]
    %v1426 = vld [vmem:[#allocation2 + $0x25] sm:$0xff]
    %v1427 = vld [vmem:[#allocation2 + $0x2d] sm:$0xff]
    %v1428 = vld [vmem:[#allocation2 + $0x35] sm:$0xff]
    %v1429 = vld [vmem:[#allocation2 + $0x3d] sm:$0xff]
    %v1430 = vld [vmem:[#allocation2 + $0x45] sm:$0xff]
    %v1431 = vld [vmem:[#allocation2 + $0x4d] sm:$0xff]
    %v1432 = vld [vmem:[#allocation2 + $0x55] sm:$0xff]
    %v1433 = vld [vmem:[#allocation2 + $0x5d] sm:$0xff]
    %v1434 = vld [vmem:[#allocation2 + $0x65] sm:$0xff]
    %v1435 = vld [vmem:[#allocation2 + $0x6d] sm:$0xff]
    %v1436 = vld [vmem:[#allocation2 + $0x75] sm:$0x3]
    %s1437 = scalar_lea.vmem %s3, 112
    %v1438 = vld [vmem:[%s1437] sm:$0xff]
    %v1439 = vld [vmem:[%s1437 + $0x8] sm:$0xff]
    %v1441 = vsel %vm257, %v1424, 0
    %v1444 = vsel %vm257, %v1425, 0
    %v1447 = vsel %vm257, %v1426, 0
    %v1450 = vsel %vm257, %v1427, 0
    %v1453 = vsel %vm257, %v1428, 0
    %v1456 = vsel %vm257, %v1429, 0
    %v1459 = vsel %vm257, %v1430, 0
    %v1462 = vsel %vm257, %v1431, 0
    %v1465 = vsel %vm257, %v1432, 0
    %v1468 = vsel %vm257, %v1433, 0
    %v1471 = vsel %vm257, %v1434, 0
    %v1474 = vsel %vm257, %v1435, 0
    %v1477 = vsel %vm257, %v1436, 0
    %1479 = vmatprep.subr.mxu0 0.0
    %1480 = vmatpush1.msra.mxu0 0.0
    %1481 = vmatprep.subr.mxu0 0.0
    %1482 = vmatpush1.msra.mxu0 0.0
    %1483 = vmatprep.subr.mxu0 0.0
    %1484 = vmatpush1.msra.mxu0 0.0
    %1485 = vmatprep.subr.mxu0 0.0
    %1486 = vmatpush1.msra.mxu0 0.0
    %1487 = vmatprep.subr.mxu0 0.0
    %1488 = vmatpush1.msra.mxu0 0.0
    %1489 = vmatprep.subr.mxu0 0.0
    %1490 = vmatpush1.msra.mxu0 0.0
    %1491 = vmatprep.subr.mxu0 0.0
    %1492 = vmatpush1.msra.mxu0 0.0
    %1493 = vmatprep.subr.mxu0 0.0
    %1494 = vmatpush1.msra.mxu0 0.0
    %1495 = vmatprep.subr.mxu0 0.0
    %1496 = vmatpush1.msra.mxu0 0.0
    %1497 = vmatprep.subr.mxu0 0.0
    %1498 = vmatpush1.msra.mxu0 0.0
    %1499 = vmatprep.subr.mxu0 0.0
    %1500 = vmatpush1.msra.mxu0 0.0
    %1501 = vmatprep.subr.mxu0 0.0
    %1502 = vmatpush1.msra.mxu0 0.0
    %1503 = vmatprep.subr.mxu0 0.0
    %1504 = vmatpush1.msra.mxu0 0.0
    %1505 = vmatprep.subr.mxu0 0.0
    %1506 = vmatpush1.msra.mxu0 0.0
    %1507 = vmatprep.subr.mxu0 0.0
    %1508 = vmatpush1.msra.mxu0 %v1439
    %1509 = vmatprep.subr.mxu0 0.0
    %1510 = vmatpush1.msra.mxu0 %v1438
    %1511 = vmatprep.subr.mxu0 0.0
    %1512 = vmatpush2.msra.mxu0 0.0
    %1513 = vmatprep.subr.mxu0 0.0
    %1514 = vmatpush2.msra.mxu0 0.0
    %1515 = vmatprep.subr.mxu0 0.0
    %1516 = vmatpush2.msra.mxu0 0.0
    %1517 = vmatprep.subr.mxu0 0.0
    %1518 = vmatpush2.msra.mxu0 0.0
    %1519 = vmatprep.subr.mxu0 0.0
    %1520 = vmatpush2.msra.mxu0 0.0
    %1521 = vmatprep.subr.mxu0 0.0
    %1522 = vmatpush2.msra.mxu0 0.0
    %1523 = vmatprep.subr.mxu0 0.0
    %1524 = vmatpush2.msra.mxu0 0.0
    %1525 = vmatprep.subr.mxu0 0.0
    %1526 = vmatpush2.msra.mxu0 0.0
    %1527 = vmatprep.subr.mxu0 0.0
    %1528 = vmatpush2.msra.mxu0 0.0
    %1529 = vmatprep.subr.mxu0 0.0
    %1530 = vmatpush2.msra.mxu0 0.0
    %1531 = vmatprep.subr.mxu0 0.0
    %1532 = vmatpush2.msra.mxu0 0.0
    %1533 = vmatprep.subr.mxu0 0.0
    %1534 = vmatpush2.msra.mxu0 0.0
    %1535 = vmatprep.subr.mxu0 0.0
    %1536 = vmatpush2.msra.mxu0 0.0
    %1537 = vmatprep.subr.mxu0 0.0
    %1538 = vmatpush2.msra.mxu0 0.0
    %1539 = vmatprep.subr.mxu0 0.0
    %1540 = vmatpush2.msra.mxu0 0.0
    %1541 = vmatprep.subr.mxu0 0.0
    %1542 = vmatpush2.msra.mxu0 0.0
    %1543 = vmatprep.mubr.f32.mxu0 0.0
    %1544 = vmatmul.mubr.f32.gmra.mxu0 %v1441
    %v1545 = vpop.f32.mrf.mxu0
    %v1546 = vadd.f32 0.0, %v1545
    %v1547 = vpop.f32.mrf.mxu0
    %1548 = vmatprep.mubr.f32.mxu0 0.0
    %1549 = vmatmul.mubr.f32.gmra.mxu0 %v1444
    %v1550 = vpop.f32.mrf.mxu0
    %v1551 = vadd.f32 0.0, %v1550
    %v1552 = vpop.f32.mrf.mxu0
    %1553 = vmatprep.mubr.f32.mxu0 0.0
    %1554 = vmatmul.mubr.f32.gmra.mxu0 %v1447
    %v1555 = vpop.f32.mrf.mxu0
    %v1556 = vadd.f32 0.0, %v1555
    %v1557 = vpop.f32.mrf.mxu0
    %1558 = vmatprep.mubr.f32.mxu0 0.0
    %1559 = vmatmul.mubr.f32.gmra.mxu0 %v1450
    %v1560 = vpop.f32.mrf.mxu0
    %v1561 = vadd.f32 0.0, %v1560
    %v1562 = vpop.f32.mrf.mxu0
    %1563 = vmatprep.mubr.f32.mxu0 0.0
    %1564 = vmatmul.mubr.f32.gmra.mxu0 %v1453
    %v1565 = vpop.f32.mrf.mxu0
    %v1566 = vadd.f32 0.0, %v1565
    %v1567 = vpop.f32.mrf.mxu0
    %1568 = vmatprep.mubr.f32.mxu0 0.0
    %1569 = vmatmul.mubr.f32.gmra.mxu0 %v1456
    %v1570 = vpop.f32.mrf.mxu0
    %v1571 = vadd.f32 0.0, %v1570
    %v1572 = vpop.f32.mrf.mxu0
    %1573 = vmatprep.mubr.f32.mxu0 0.0
    %1574 = vmatmul.mubr.f32.gmra.mxu0 %v1459
    %v1575 = vpop.f32.mrf.mxu0
    %v1576 = vadd.f32 0.0, %v1575
    %v1577 = vpop.f32.mrf.mxu0
    %1578 = vmatprep.mubr.f32.mxu0 0.0
    %1579 = vmatmul.mubr.f32.gmra.mxu0 %v1462
    %v1580 = vpop.f32.mrf.mxu0
    %v1581 = vadd.f32 0.0, %v1580
    %v1582 = vpop.f32.mrf.mxu0
    %1583 = vmatprep.mubr.f32.mxu0 0.0
    %1584 = vmatmul.mubr.f32.gmra.mxu0 %v1465
    %v1585 = vpop.f32.mrf.mxu0
    %v1586 = vadd.f32 0.0, %v1585
    %v1587 = vpop.f32.mrf.mxu0
    %1588 = vmatprep.mubr.f32.mxu0 0.0
    %1589 = vmatmul.mubr.f32.gmra.mxu0 %v1468
    %v1590 = vpop.f32.mrf.mxu0
    %v1591 = vadd.f32 0.0, %v1590
    %v1592 = vpop.f32.mrf.mxu0
    %1593 = vmatprep.mubr.f32.mxu0 0.0
    %1594 = vmatmul.mubr.f32.gmra.mxu0 %v1471
    %v1595 = vpop.f32.mrf.mxu0
    %v1596 = vadd.f32 0.0, %v1595
    %v1597 = vpop.f32.mrf.mxu0
    %1598 = vmatprep.mubr.f32.mxu0 0.0
    %1599 = vmatmul.mubr.f32.gmra.mxu0 %v1474
    %v1600 = vpop.f32.mrf.mxu0
    %v1601 = vadd.f32 0.0, %v1600
    %v1602 = vpop.f32.mrf.mxu0
    %1603 = vmatprep.mubr.f32.mxu0 0.0
    %1604 = vmatmul.mubr.f32.gmra.mxu0 %v1477
    %v1605 = vpop.f32.mrf.mxu0
    %v1606 = vadd.f32 0.0, %v1605
    %v1607 = vpop.f32.mrf.mxu0
    %1608 = vdwg.mxu0
    %v1610 = vsel %vm257, %v1408, 0
    %v1613 = vsel %vm257, %v1409, 0
    %v1616 = vsel %vm257, %v1410, 0
    %v1619 = vsel %vm257, %v1411, 0
    %v1622 = vsel %vm257, %v1412, 0
    %v1625 = vsel %vm257, %v1413, 0
    %v1628 = vsel %vm257, %v1414, 0
    %v1631 = vsel %vm257, %v1415, 0
    %v1634 = vsel %vm257, %v1416, 0
    %v1637 = vsel %vm257, %v1417, 0
    %v1640 = vsel %vm257, %v1418, 0
    %v1643 = vsel %vm257, %v1419, 0
    %v1646 = vsel %vm257, %v1420, 0
    %1648 = vmatprep.subr.mxu0 0.0
    %1649 = vmatpush1.msra.mxu0 0.0
    %1650 = vmatprep.subr.mxu0 0.0
    %1651 = vmatpush1.msra.mxu0 0.0
    %1652 = vmatprep.subr.mxu0 0.0
    %1653 = vmatpush1.msra.mxu0 0.0
    %1654 = vmatprep.subr.mxu0 0.0
    %1655 = vmatpush1.msra.mxu0 0.0
    %1656 = vmatprep.subr.mxu0 0.0
    %1657 = vmatpush1.msra.mxu0 0.0
    %1658 = vmatprep.subr.mxu0 0.0
    %1659 = vmatpush1.msra.mxu0 0.0
    %1660 = vmatprep.subr.mxu0 0.0
    %1661 = vmatpush1.msra.mxu0 0.0
    %1662 = vmatprep.subr.mxu0 0.0
    %1663 = vmatpush1.msra.mxu0 0.0
    %1664 = vmatprep.subr.mxu0 0.0
    %1665 = vmatpush1.msra.mxu0 0.0
    %1666 = vmatprep.subr.mxu0 0.0
    %1667 = vmatpush1.msra.mxu0 0.0
    %1668 = vmatprep.subr.mxu0 0.0
    %1669 = vmatpush1.msra.mxu0 0.0
    %1670 = vmatprep.subr.mxu0 0.0
    %1671 = vmatpush1.msra.mxu0 0.0
    %1672 = vmatprep.subr.mxu0 0.0
    %1673 = vmatpush1.msra.mxu0 0.0
    %1674 = vmatprep.subr.mxu0 0.0
    %1675 = vmatpush1.msra.mxu0 0.0
    %1676 = vmatprep.subr.mxu0 0.0
    %1677 = vmatpush1.msra.mxu0 %v1423
    %1678 = vmatprep.subr.mxu0 0.0
    %1679 = vmatpush1.msra.mxu0 %v1422
    %1680 = vmatprep.subr.mxu0 0.0
    %1681 = vmatpush2.msra.mxu0 0.0
    %1682 = vmatprep.subr.mxu0 0.0
    %1683 = vmatpush2.msra.mxu0 0.0
    %1684 = vmatprep.subr.mxu0 0.0
    %1685 = vmatpush2.msra.mxu0 0.0
    %1686 = vmatprep.subr.mxu0 0.0
    %1687 = vmatpush2.msra.mxu0 0.0
    %1688 = vmatprep.subr.mxu0 0.0
    %1689 = vmatpush2.msra.mxu0 0.0
    %1690 = vmatprep.subr.mxu0 0.0
    %1691 = vmatpush2.msra.mxu0 0.0
    %1692 = vmatprep.subr.mxu0 0.0
    %1693 = vmatpush2.msra.mxu0 0.0
    %1694 = vmatprep.subr.mxu0 0.0
    %1695 = vmatpush2.msra.mxu0 0.0
    %1696 = vmatprep.subr.mxu0 0.0
    %1697 = vmatpush2.msra.mxu0 0.0
    %1698 = vmatprep.subr.mxu0 0.0
    %1699 = vmatpush2.msra.mxu0 0.0
    %1700 = vmatprep.subr.mxu0 0.0
    %1701 = vmatpush2.msra.mxu0 0.0
    %1702 = vmatprep.subr.mxu0 0.0
    %1703 = vmatpush2.msra.mxu0 0.0
    %1704 = vmatprep.subr.mxu0 0.0
    %1705 = vmatpush2.msra.mxu0 0.0
    %1706 = vmatprep.subr.mxu0 0.0
    %1707 = vmatpush2.msra.mxu0 0.0
    %1708 = vmatprep.subr.mxu0 0.0
    %1709 = vmatpush2.msra.mxu0 0.0
    %1710 = vmatprep.subr.mxu0 0.0
    %1711 = vmatpush2.msra.mxu0 0.0
    %1712 = vmatprep.mubr.f32.mxu0 0.0
    %1713 = vmatmul.mubr.f32.gmra.mxu0 %v1610
    %v1714 = vpop.f32.mrf.mxu0
    %v1715 = vadd.f32 %v1546, %v1714
    %v1716 = vpop.f32.mrf.mxu0
    %1717 = vmatprep.mubr.f32.mxu0 0.0
    %1718 = vmatmul.mubr.f32.gmra.mxu0 %v1613
    %v1719 = vpop.f32.mrf.mxu0
    %v1720 = vadd.f32 %v1551, %v1719
    %v1721 = vpop.f32.mrf.mxu0
    %1722 = vmatprep.mubr.f32.mxu0 0.0
    %1723 = vmatmul.mubr.f32.gmra.mxu0 %v1616
    %v1724 = vpop.f32.mrf.mxu0
    %v1725 = vadd.f32 %v1556, %v1724
    %v1726 = vpop.f32.mrf.mxu0
    %1727 = vmatprep.mubr.f32.mxu0 0.0
    %1728 = vmatmul.mubr.f32.gmra.mxu0 %v1619
    %v1729 = vpop.f32.mrf.mxu0
    %v1730 = vadd.f32 %v1561, %v1729
    %v1731 = vpop.f32.mrf.mxu0
    %1732 = vmatprep.mubr.f32.mxu0 0.0
    %1733 = vmatmul.mubr.f32.gmra.mxu0 %v1622
    %v1734 = vpop.f32.mrf.mxu0
    %v1735 = vadd.f32 %v1566, %v1734
    %v1736 = vpop.f32.mrf.mxu0
    %1737 = vmatprep.mubr.f32.mxu0 0.0
    %1738 = vmatmul.mubr.f32.gmra.mxu0 %v1625
    %v1739 = vpop.f32.mrf.mxu0
    %v1740 = vadd.f32 %v1571, %v1739
    %v1741 = vpop.f32.mrf.mxu0
    %1742 = vmatprep.mubr.f32.mxu0 0.0
    %1743 = vmatmul.mubr.f32.gmra.mxu0 %v1628
    %v1744 = vpop.f32.mrf.mxu0
    %v1745 = vadd.f32 %v1576, %v1744
    %v1746 = vpop.f32.mrf.mxu0
    %1747 = vmatprep.mubr.f32.mxu0 0.0
    %1748 = vmatmul.mubr.f32.gmra.mxu0 %v1631
    %v1749 = vpop.f32.mrf.mxu0
    %v1750 = vadd.f32 %v1581, %v1749
    %v1751 = vpop.f32.mrf.mxu0
    %1752 = vmatprep.mubr.f32.mxu0 0.0
    %1753 = vmatmul.mubr.f32.gmra.mxu0 %v1634
    %v1754 = vpop.f32.mrf.mxu0
    %v1755 = vadd.f32 %v1586, %v1754
    %v1756 = vpop.f32.mrf.mxu0
    %1757 = vmatprep.mubr.f32.mxu0 0.0
    %1758 = vmatmul.mubr.f32.gmra.mxu0 %v1637
    %v1759 = vpop.f32.mrf.mxu0
    %v1760 = vadd.f32 %v1591, %v1759
    %v1761 = vpop.f32.mrf.mxu0
    %1762 = vmatprep.mubr.f32.mxu0 0.0
    %1763 = vmatmul.mubr.f32.gmra.mxu0 %v1640
    %v1764 = vpop.f32.mrf.mxu0
    %v1765 = vadd.f32 %v1596, %v1764
    %v1766 = vpop.f32.mrf.mxu0
    %1767 = vmatprep.mubr.f32.mxu0 0.0
    %1768 = vmatmul.mubr.f32.gmra.mxu0 %v1643
    %v1769 = vpop.f32.mrf.mxu0
    %v1770 = vadd.f32 %v1601, %v1769
    %v1771 = vpop.f32.mrf.mxu0
    %1772 = vmatprep.mubr.f32.mxu0 0.0
    %1773 = vmatmul.mubr.f32.gmra.mxu0 %v1646
    %v1774 = vpop.f32.mrf.mxu0
    %v1775 = vadd.f32 %v1606, %v1774
    %v1776 = vpop.f32.mrf.mxu0
    %1777 = vdwg.mxu0
    %v1778 = vld [vmem:[#allocation2 + $0x16] sm:$0xff]
    %v1779 = vld [vmem:[#allocation2 + $0x1e] sm:$0xff]
    %v1780 = vld [vmem:[#allocation2 + $0x26] sm:$0xff]
    %v1781 = vld [vmem:[#allocation2 + $0x2e] sm:$0xff]
    %v1782 = vld [vmem:[#allocation2 + $0x36] sm:$0xff]
    %v1783 = vld [vmem:[#allocation2 + $0x3e] sm:$0xff]
    %v1784 = vld [vmem:[#allocation2 + $0x46] sm:$0xff]
    %v1785 = vld [vmem:[#allocation2 + $0x4e] sm:$0xff]
    %v1786 = vld [vmem:[#allocation2 + $0x56] sm:$0xff]
    %v1787 = vld [vmem:[#allocation2 + $0x5e] sm:$0xff]
    %v1788 = vld [vmem:[#allocation2 + $0x66] sm:$0xff]
    %v1789 = vld [vmem:[#allocation2 + $0x6e] sm:$0xff]
    %v1790 = vld [vmem:[#allocation2 + $0x76] sm:$0x3]
    %s1791 = scalar_lea.vmem %s3, 128
    %v1792 = vld [vmem:[%s1791] sm:$0xff]
    %v1793 = vld [vmem:[%s1791 + $0x8] sm:$0xff]
    %v1795 = vsel %vm257, %v1778, 0
    %v1798 = vsel %vm257, %v1779, 0
    %v1801 = vsel %vm257, %v1780, 0
    %v1804 = vsel %vm257, %v1781, 0
    %v1807 = vsel %vm257, %v1782, 0
    %v1810 = vsel %vm257, %v1783, 0
    %v1813 = vsel %vm257, %v1784, 0
    %v1816 = vsel %vm257, %v1785, 0
    %v1819 = vsel %vm257, %v1786, 0
    %v1822 = vsel %vm257, %v1787, 0
    %v1825 = vsel %vm257, %v1788, 0
    %v1828 = vsel %vm257, %v1789, 0
    %v1831 = vsel %vm257, %v1790, 0
    %1833 = vmatprep.subr.mxu0 0.0
    %1834 = vmatpush1.msra.mxu0 0.0
    %1835 = vmatprep.subr.mxu0 0.0
    %1836 = vmatpush1.msra.mxu0 0.0
    %1837 = vmatprep.subr.mxu0 0.0
    %1838 = vmatpush1.msra.mxu0 0.0
    %1839 = vmatprep.subr.mxu0 0.0
    %1840 = vmatpush1.msra.mxu0 0.0
    %1841 = vmatprep.subr.mxu0 0.0
    %1842 = vmatpush1.msra.mxu0 0.0
    %1843 = vmatprep.subr.mxu0 0.0
    %1844 = vmatpush1.msra.mxu0 0.0
    %1845 = vmatprep.subr.mxu0 0.0
    %1846 = vmatpush1.msra.mxu0 0.0
    %1847 = vmatprep.subr.mxu0 0.0
    %1848 = vmatpush1.msra.mxu0 0.0
    %1849 = vmatprep.subr.mxu0 0.0
    %1850 = vmatpush1.msra.mxu0 0.0
    %1851 = vmatprep.subr.mxu0 0.0
    %1852 = vmatpush1.msra.mxu0 0.0
    %1853 = vmatprep.subr.mxu0 0.0
    %1854 = vmatpush1.msra.mxu0 0.0
    %1855 = vmatprep.subr.mxu0 0.0
    %1856 = vmatpush1.msra.mxu0 0.0
    %1857 = vmatprep.subr.mxu0 0.0
    %1858 = vmatpush1.msra.mxu0 0.0
    %1859 = vmatprep.subr.mxu0 0.0
    %1860 = vmatpush1.msra.mxu0 0.0
    %1861 = vmatprep.subr.mxu0 0.0
    %1862 = vmatpush1.msra.mxu0 %v1793
    %1863 = vmatprep.subr.mxu0 0.0
    %1864 = vmatpush1.msra.mxu0 %v1792
    %1865 = vmatprep.subr.mxu0 0.0
    %1866 = vmatpush2.msra.mxu0 0.0
    %1867 = vmatprep.subr.mxu0 0.0
    %1868 = vmatpush2.msra.mxu0 0.0
    %1869 = vmatprep.subr.mxu0 0.0
    %1870 = vmatpush2.msra.mxu0 0.0
    %1871 = vmatprep.subr.mxu0 0.0
    %1872 = vmatpush2.msra.mxu0 0.0
    %1873 = vmatprep.subr.mxu0 0.0
    %1874 = vmatpush2.msra.mxu0 0.0
    %1875 = vmatprep.subr.mxu0 0.0
    %1876 = vmatpush2.msra.mxu0 0.0
    %1877 = vmatprep.subr.mxu0 0.0
    %1878 = vmatpush2.msra.mxu0 0.0
    %1879 = vmatprep.subr.mxu0 0.0
    %1880 = vmatpush2.msra.mxu0 0.0
    %1881 = vmatprep.subr.mxu0 0.0
    %1882 = vmatpush2.msra.mxu0 0.0
    %1883 = vmatprep.subr.mxu0 0.0
    %1884 = vmatpush2.msra.mxu0 0.0
    %1885 = vmatprep.subr.mxu0 0.0
    %1886 = vmatpush2.msra.mxu0 0.0
    %1887 = vmatprep.subr.mxu0 0.0
    %1888 = vmatpush2.msra.mxu0 0.0
    %1889 = vmatprep.subr.mxu0 0.0
    %1890 = vmatpush2.msra.mxu0 0.0
    %1891 = vmatprep.subr.mxu0 0.0
    %1892 = vmatpush2.msra.mxu0 0.0
    %1893 = vmatprep.subr.mxu0 0.0
    %1894 = vmatpush2.msra.mxu0 0.0
    %1895 = vmatprep.subr.mxu0 0.0
    %1896 = vmatpush2.msra.mxu0 0.0
    %1897 = vmatprep.mubr.f32.mxu0 0.0
    %1898 = vmatmul.mubr.f32.gmra.mxu0 %v1795
    %v1899 = vpop.f32.mrf.mxu0
    %v1900 = vadd.f32 0.0, %v1899
    %v1901 = vpop.f32.mrf.mxu0
    %1902 = vmatprep.mubr.f32.mxu0 0.0
    %1903 = vmatmul.mubr.f32.gmra.mxu0 %v1798
    %v1904 = vpop.f32.mrf.mxu0
    %v1905 = vadd.f32 0.0, %v1904
    %v1906 = vpop.f32.mrf.mxu0
    %1907 = vmatprep.mubr.f32.mxu0 0.0
    %1908 = vmatmul.mubr.f32.gmra.mxu0 %v1801
    %v1909 = vpop.f32.mrf.mxu0
    %v1910 = vadd.f32 0.0, %v1909
    %v1911 = vpop.f32.mrf.mxu0
    %1912 = vmatprep.mubr.f32.mxu0 0.0
    %1913 = vmatmul.mubr.f32.gmra.mxu0 %v1804
    %v1914 = vpop.f32.mrf.mxu0
    %v1915 = vadd.f32 0.0, %v1914
    %v1916 = vpop.f32.mrf.mxu0
    %1917 = vmatprep.mubr.f32.mxu0 0.0
    %1918 = vmatmul.mubr.f32.gmra.mxu0 %v1807
    %v1919 = vpop.f32.mrf.mxu0
    %v1920 = vadd.f32 0.0, %v1919
    %v1921 = vpop.f32.mrf.mxu0
    %1922 = vmatprep.mubr.f32.mxu0 0.0
    %1923 = vmatmul.mubr.f32.gmra.mxu0 %v1810
    %v1924 = vpop.f32.mrf.mxu0
    %v1925 = vadd.f32 0.0, %v1924
    %v1926 = vpop.f32.mrf.mxu0
    %1927 = vmatprep.mubr.f32.mxu0 0.0
    %1928 = vmatmul.mubr.f32.gmra.mxu0 %v1813
    %v1929 = vpop.f32.mrf.mxu0
    %v1930 = vadd.f32 0.0, %v1929
    %v1931 = vpop.f32.mrf.mxu0
    %1932 = vmatprep.mubr.f32.mxu0 0.0
    %1933 = vmatmul.mubr.f32.gmra.mxu0 %v1816
    %v1934 = vpop.f32.mrf.mxu0
    %v1935 = vadd.f32 0.0, %v1934
    %v1936 = vpop.f32.mrf.mxu0
    %1937 = vmatprep.mubr.f32.mxu0 0.0
    %1938 = vmatmul.mubr.f32.gmra.mxu0 %v1819
    %v1939 = vpop.f32.mrf.mxu0
    %v1940 = vadd.f32 0.0, %v1939
    %v1941 = vpop.f32.mrf.mxu0
    %1942 = vmatprep.mubr.f32.mxu0 0.0
    %1943 = vmatmul.mubr.f32.gmra.mxu0 %v1822
    %v1944 = vpop.f32.mrf.mxu0
    %v1945 = vadd.f32 0.0, %v1944
    %v1946 = vpop.f32.mrf.mxu0
    %1947 = vmatprep.mubr.f32.mxu0 0.0
    %1948 = vmatmul.mubr.f32.gmra.mxu0 %v1825
    %v1949 = vpop.f32.mrf.mxu0
    %v1950 = vadd.f32 0.0, %v1949
    %v1951 = vpop.f32.mrf.mxu0
    %1952 = vmatprep.mubr.f32.mxu0 0.0
    %1953 = vmatmul.mubr.f32.gmra.mxu0 %v1828
    %v1954 = vpop.f32.mrf.mxu0
    %v1955 = vadd.f32 0.0, %v1954
    %v1956 = vpop.f32.mrf.mxu0
    %1957 = vmatprep.mubr.f32.mxu0 0.0
    %1958 = vmatmul.mubr.f32.gmra.mxu0 %v1831
    %v1959 = vpop.f32.mrf.mxu0
    %v1960 = vadd.f32 0.0, %v1959
    %v1961 = vpop.f32.mrf.mxu0
    %1962 = vdwg.mxu0
    %v1963 = vadd.f32 %v1715, %v1900
    %v1964 = vadd.f32 %v1720, %v1905
    %v1965 = vadd.f32 %v1725, %v1910
    %v1966 = vadd.f32 %v1730, %v1915
    %v1967 = vadd.f32 %v1735, %v1920
    %v1968 = vadd.f32 %v1740, %v1925
    %v1969 = vadd.f32 %v1745, %v1930
    %v1970 = vadd.f32 %v1750, %v1935
    %v1971 = vadd.f32 %v1755, %v1940
    %v1972 = vadd.f32 %v1760, %v1945
    %v1973 = vadd.f32 %v1765, %v1950
    %v1974 = vadd.f32 %v1770, %v1955
    %v1975 = vadd.f32 %v1775, %v1960
    %v1976 = vadd.f32 %v827, %v1395
    %v1977 = vadd.f32 %v828, %v1396
    %v1978 = vadd.f32 %v829, %v1397
    %v1979 = vadd.f32 %v830, %v1398
    %v1980 = vadd.f32 %v831, %v1399
    %v1981 = vadd.f32 %v832, %v1400
    %v1982 = vadd.f32 %v833, %v1401
    %v1983 = vadd.f32 %v834, %v1402
    %v1984 = vadd.f32 %v835, %v1403
    %v1985 = vadd.f32 %v836, %v1404
    %v1986 = vadd.f32 %v837, %v1405
    %v1987 = vadd.f32 %v838, %v1406
    %v1988 = vadd.f32 %v839, %v1407
    %v1989 = vadd.f32 %v1976, %v1963
    %v1990 = vadd.f32 %v1977, %v1964
    %v1991 = vadd.f32 %v1978, %v1965
    %v1992 = vadd.f32 %v1979, %v1966
    %v1993 = vadd.f32 %v1980, %v1967
    %v1994 = vadd.f32 %v1981, %v1968
    %v1995 = vadd.f32 %v1982, %v1969
    %v1996 = vadd.f32 %v1983, %v1970
    %v1997 = vadd.f32 %v1984, %v1971
    %v1998 = vadd.f32 %v1985, %v1972
    %v1999 = vadd.f32 %v1986, %v1973
    %v2000 = vadd.f32 %v1987, %v1974
    %v2001 = vadd.f32 %v1988, %v1975
    %v2002 = vld [vmem:[%s4] sm:$0x1]
    %v2004 = vlaneseq
    %v2005 = vshrl.u32 %v2004, 7
    %v2006 = vsub.s32 0, %v2005
    %v2007 = vrot.slane %v2002, %v2006
    %v2009 = vadd.f32 %v1989, %v2007
    %v2010 = vadd.f32 %v1990, %v2007
    %v2011 = vadd.f32 %v1991, %v2007
    %v2012 = vadd.f32 %v1992, %v2007
    %v2013 = vadd.f32 %v1993, %v2007
    %v2014 = vadd.f32 %v1994, %v2007
    %v2015 = vadd.f32 %v1995, %v2007
    %v2016 = vadd.f32 %v1996, %v2007
    %v2017 = vadd.f32 %v1997, %v2007
    %v2018 = vadd.f32 %v1998, %v2007
    %v2019 = vadd.f32 %v1999, %v2007
    %v2020 = vadd.f32 %v2000, %v2007
    %v2021 = vadd.f32 %v2001, %v2007
    %v2022 = vmax.f32 %v2009, 0.0
    %v2023 = vmax.f32 %v2010, 0.0
    %v2024 = vmax.f32 %v2011, 0.0
    %v2025 = vmax.f32 %v2012, 0.0
    %v2026 = vmax.f32 %v2013, 0.0
    %v2027 = vmax.f32 %v2014, 0.0
    %v2028 = vmax.f32 %v2015, 0.0
    %v2029 = vmax.f32 %v2016, 0.0
    %v2030 = vmax.f32 %v2017, 0.0
    %v2031 = vmax.f32 %v2018, 0.0
    %v2032 = vmax.f32 %v2019, 0.0
    %v2033 = vmax.f32 %v2020, 0.0
    %v2034 = vmax.f32 %v2021, 0.0
    %vm2035 = vcmask 261120
    %2036 = vst.msk [vmem:[#allocation3] sm:$0xff] %vm2035, %v2022
    %2037 = vst.msk [vmem:[#allocation3 + $0x8] sm:$0xff] %vm2035, %v2023
    %2038 = vst.msk [vmem:[#allocation3 + $0x10] sm:$0xff] %vm2035, %v2024
    %2039 = vst.msk [vmem:[#allocation3 + $0x18] sm:$0xff] %vm2035, %v2025
    %2040 = vst.msk [vmem:[#allocation3 + $0x20] sm:$0xff] %vm2035, %v2026
    %2041 = vst.msk [vmem:[#allocation3 + $0x28] sm:$0xff] %vm2035, %v2027
    %2042 = vst.msk [vmem:[#allocation3 + $0x30] sm:$0xff] %vm2035, %v2028
    %2043 = vst.msk [vmem:[#allocation3 + $0x38] sm:$0xff] %vm2035, %v2029
    %2044 = vst.msk [vmem:[#allocation3 + $0x40] sm:$0xff] %vm2035, %v2030
    %2045 = vst.msk [vmem:[#allocation3 + $0x48] sm:$0xff] %vm2035, %v2031
    %2046 = vst.msk [vmem:[#allocation3 + $0x50] sm:$0xff] %vm2035, %v2032
    %2047 = vst.msk [vmem:[#allocation3 + $0x58] sm:$0xff] %vm2035, %v2033
    %vm2048 = vcmask 254976
    %2049 = vst.msk [vmem:[#allocation3 + $0x60] sm:$0x3] %vm2048, %v2034
    %v2050 = vld [vmem:[#allocation3] sm:$0x1]
    %vm2051 = vcmask 253952
    %2052 = vst.msk [vmem:[#allocation4] sm:$0x1] %vm2051, %v2050
    %v2053 = vld [vmem:[#allocation3 + $0x1] sm:$0x1]
    %v2056 = vunpack.c.l.s4 1983009808
    %v2057 = vunpack.c.0.s8 %v2056
    %v2058 = vlaneseq
    %v2059 = vshrl.u32 %v2058, 7
    %v2060 = vsub.s32 %v2057, %v2059
    %v2061 = vrot.slane %v2053, %v2060
    %2062 = vrot.lane.b32.xlu0 %v2061, 32
    %v2063 = vpop.permute.xlu0 %2062
    %vm2065 = vcmask 516352
    %2066 = vst.msk [vmem:[#allocation4] sm:$0x1] %vm2065, %v2063
    %v2067 = vld [vmem:[#allocation3 + $0x2] sm:$0x1]
    %v2070 = vunpack.c.l.s4 1983009808
    %v2071 = vunpack.c.0.s8 %v2070
    %v2072 = vlaneseq
    %v2073 = vshrl.u32 %v2072, 7
    %v2074 = vsub.s32 %v2071, %v2073
    %v2075 = vrot.slane %v2067, %v2074
    %2076 = vrot.lane.b32.xlu0 %v2075, 64
    %v2077 = vpop.permute.xlu0 %2076
    %vm2079 = vcmask 778752
    %2080 = vst.msk [vmem:[#allocation4] sm:$0x1] %vm2079, %v2077
    %v2081 = vld [vmem:[#allocation3 + $0x3] sm:$0x1]
    %v2084 = vunpack.c.l.s4 1983009808
    %v2085 = vunpack.c.0.s8 %v2084
    %v2086 = vlaneseq
    %v2087 = vshrl.u32 %v2086, 7
    %v2088 = vsub.s32 %v2085, %v2087
    %v2089 = vrot.slane %v2081, %v2088
    %2090 = vrot.lane.b32.xlu0 %v2089, 96
    %v2091 = vpop.permute.xlu0 %2090
    %vm2093 = vcmask 1041152
    %2094 = vst.msk [vmem:[#allocation4] sm:$0x1] %vm2093, %v2091
    %v2095 = vld [vmem:[#allocation3 + $0x4] sm:$0x1]
    %2096 = vst.msk [vmem:[#allocation4 + $0x2] sm:$0x1] %vm2051, %v2095
    %v2097 = vld [vmem:[#allocation3 + $0x5] sm:$0x1]
    %v2100 = vunpack.c.l.s4 1983009808
    %v2101 = vunpack.c.0.s8 %v2100
    %v2102 = vlaneseq
    %v2103 = vshrl.u32 %v2102, 7
    %v2104 = vsub.s32 %v2101, %v2103
    %v2105 = vrot.slane %v2097, %v2104
    %2106 = vrot.lane.b32.xlu0 %v2105, 32
    %v2107 = vpop.permute.xlu0 %2106
    %2109 = vst.msk [vmem:[#allocation4 + $0x2] sm:$0x1] %vm2065, %v2107
    %v2110 = vld [vmem:[#allocation3 + $0x6] sm:$0x1]
    %v2113 = vunpack.c.l.s4 1983009808
    %v2114 = vunpack.c.0.s8 %v2113
    %v2115 = vlaneseq
    %v2116 = vshrl.u32 %v2115, 7
    %v2117 = vsub.s32 %v2114, %v2116
    %v2118 = vrot.slane %v2110, %v2117
    %2119 = vrot.lane.b32.xlu0 %v2118, 64
    %v2120 = vpop.permute.xlu0 %2119
    %2122 = vst.msk [vmem:[#allocation4 + $0x2] sm:$0x1] %vm2079, %v2120
    %v2123 = vld [vmem:[#allocation3 + $0x7] sm:$0x1]
    %v2126 = vunpack.c.l.s4 1983009808
    %v2127 = vunpack.c.0.s8 %v2126
    %v2128 = vlaneseq
    %v2129 = vshrl.u32 %v2128, 7
    %v2130 = vsub.s32 %v2127, %v2129
    %v2131 = vrot.slane %v2123, %v2130
    %2132 = vrot.lane.b32.xlu0 %v2131, 96
    %v2133 = vpop.permute.xlu0 %2132
    %2135 = vst.msk [vmem:[#allocation4 + $0x2] sm:$0x1] %vm2093, %v2133
    %v2136 = vld [vmem:[#allocation3 + $0xa] sm:$0x1]
    %2137 = vst.msk [vmem:[#allocation4 + $0x4] sm:$0x1] %vm2051, %v2136
    %v2138 = vld [vmem:[#allocation3 + $0xb] sm:$0x1]
    %v2141 = vunpack.c.l.s4 1983009808
    %v2142 = vunpack.c.0.s8 %v2141
    %v2143 = vlaneseq
    %v2144 = vshrl.u32 %v2143, 7
    %v2145 = vsub.s32 %v2142, %v2144
    %v2146 = vrot.slane %v2138, %v2145
    %2147 = vrot.lane.b32.xlu0 %v2146, 32
    %v2148 = vpop.permute.xlu0 %2147
    %2150 = vst.msk [vmem:[#allocation4 + $0x4] sm:$0x1] %vm2065, %v2148
    %v2151 = vld [vmem:[#allocation3 + $0xc] sm:$0x1]
    %v2154 = vunpack.c.l.s4 1983009808
    %v2155 = vunpack.c.0.s8 %v2154
    %v2156 = vlaneseq
    %v2157 = vshrl.u32 %v2156, 7
    %v2158 = vsub.s32 %v2155, %v2157
    %v2159 = vrot.slane %v2151, %v2158
    %2160 = vrot.lane.b32.xlu0 %v2159, 64
    %v2161 = vpop.permute.xlu0 %2160
    %2163 = vst.msk [vmem:[#allocation4 + $0x4] sm:$0x1] %vm2079, %v2161
    %v2164 = vld [vmem:[#allocation3 + $0xd] sm:$0x1]
    %v2167 = vunpack.c.l.s4 1983009808
    %v2168 = vunpack.c.0.s8 %v2167
    %v2169 = vlaneseq
    %v2170 = vshrl.u32 %v2169, 7
    %v2171 = vsub.s32 %v2168, %v2170
    %v2172 = vrot.slane %v2164, %v2171
    %2173 = vrot.lane.b32.xlu0 %v2172, 96
    %v2174 = vpop.permute.xlu0 %2173
    %2176 = vst.msk [vmem:[#allocation4 + $0x4] sm:$0x1] %vm2093, %v2174
    %v2177 = vld [vmem:[#allocation3 + $0xe] sm:$0x1]
    %2178 = vst.msk [vmem:[#allocation4 + $0x6] sm:$0x1] %vm2051, %v2177
    %v2179 = vld [vmem:[#allocation3 + $0xf] sm:$0x1]
    %v2182 = vunpack.c.l.s4 1983009808
    %v2183 = vunpack.c.0.s8 %v2182
    %v2184 = vlaneseq
    %v2185 = vshrl.u32 %v2184, 7
    %v2186 = vsub.s32 %v2183, %v2185
    %v2187 = vrot.slane %v2179, %v2186
    %2188 = vrot.lane.b32.xlu0 %v2187, 32
    %v2189 = vpop.permute.xlu0 %2188
    %2191 = vst.msk [vmem:[#allocation4 + $0x6] sm:$0x1] %vm2065, %v2189
    %v2192 = vld [vmem:[#allocation3 + $0x10] sm:$0x1]
    %v2195 = vunpack.c.l.s4 1983009808
    %v2196 = vunpack.c.0.s8 %v2195
    %v2197 = vlaneseq
    %v2198 = vshrl.u32 %v2197, 7
    %v2199 = vsub.s32 %v2196, %v2198
    %v2200 = vrot.slane %v2192, %v2199
    %2201 = vrot.lane.b32.xlu0 %v2200, 64
    %v2202 = vpop.permute.xlu0 %2201
    %2204 = vst.msk [vmem:[#allocation4 + $0x6] sm:$0x1] %vm2079, %v2202
    %v2205 = vld [vmem:[#allocation3 + $0x11] sm:$0x1]
    %v2208 = vunpack.c.l.s4 1983009808
    %v2209 = vunpack.c.0.s8 %v2208
    %v2210 = vlaneseq
    %v2211 = vshrl.u32 %v2210, 7
    %v2212 = vsub.s32 %v2209, %v2211
    %v2213 = vrot.slane %v2205, %v2212
    %2214 = vrot.lane.b32.xlu0 %v2213, 96
    %v2215 = vpop.permute.xlu0 %2214
    %2217 = vst.msk [vmem:[#allocation4 + $0x6] sm:$0x1] %vm2093, %v2215
    %v2218 = vld [vmem:[#allocation3 + $0x14] sm:$0x1]
    %2219 = vst.msk [vmem:[#allocation4 + $0x8] sm:$0x1] %vm2051, %v2218
    %v2220 = vld [vmem:[#allocation3 + $0x15] sm:$0x1]
    %v2223 = vunpack.c.l.s4 1983009808
    %v2224 = vunpack.c.0.s8 %v2223
    %v2225 = vlaneseq
    %v2226 = vshrl.u32 %v2225, 7
    %v2227 = vsub.s32 %v2224, %v2226
    %v2228 = vrot.slane %v2220, %v2227
    %2229 = vrot.lane.b32.xlu0 %v2228, 32
    %v2230 = vpop.permute.xlu0 %2229
    %2232 = vst.msk [vmem:[#allocation4 + $0x8] sm:$0x1] %vm2065, %v2230
    %v2233 = vld [vmem:[#allocation3 + $0x16] sm:$0x1]
    %v2236 = vunpack.c.l.s4 1983009808
    %v2237 = vunpack.c.0.s8 %v2236
    %v2238 = vlaneseq
    %v2239 = vshrl.u32 %v2238, 7
    %v2240 = vsub.s32 %v2237, %v2239
    %v2241 = vrot.slane %v2233, %v2240
    %2242 = vrot.lane.b32.xlu0 %v2241, 64
    %v2243 = vpop.permute.xlu0 %2242
    %2245 = vst.msk [vmem:[#allocation4 + $0x8] sm:$0x1] %vm2079, %v2243
    %v2246 = vld [vmem:[#allocation3 + $0x17] sm:$0x1]
    %v2249 = vunpack.c.l.s4 1983009808
    %v2250 = vunpack.c.0.s8 %v2249
    %v2251 = vlaneseq
    %v2252 = vshrl.u32 %v2251, 7
    %v2253 = vsub.s32 %v2250, %v2252
    %v2254 = vrot.slane %v2246, %v2253
    %2255 = vrot.lane.b32.xlu0 %v2254, 96
    %v2256 = vpop.permute.xlu0 %2255
    %2258 = vst.msk [vmem:[#allocation4 + $0x8] sm:$0x1] %vm2093, %v2256
    %v2259 = vld [vmem:[#allocation3 + $0x18] sm:$0x1]
    %2260 = vst.msk [vmem:[#allocation4 + $0xa] sm:$0x1] %vm2051, %v2259
    %v2261 = vld [vmem:[#allocation3 + $0x19] sm:$0x1]
    %v2264 = vunpack.c.l.s4 1983009808
    %v2265 = vunpack.c.0.s8 %v2264
    %v2266 = vlaneseq
    %v2267 = vshrl.u32 %v2266, 7
    %v2268 = vsub.s32 %v2265, %v2267
    %v2269 = vrot.slane %v2261, %v2268
    %2270 = vrot.lane.b32.xlu0 %v2269, 32
    %v2271 = vpop.permute.xlu0 %2270
    %2273 = vst.msk [vmem:[#allocation4 + $0xa] sm:$0x1] %vm2065, %v2271
    %v2274 = vld [vmem:[#allocation3 + $0x1a] sm:$0x1]
    %v2277 = vunpack.c.l.s4 1983009808
    %v2278 = vunpack.c.0.s8 %v2277
    %v2279 = vlaneseq
    %v2280 = vshrl.u32 %v2279, 7
    %v2281 = vsub.s32 %v2278, %v2280
    %v2282 = vrot.slane %v2274, %v2281
    %2283 = vrot.lane.b32.xlu0 %v2282, 64
    %v2284 = vpop.permute.xlu0 %2283
    %2286 = vst.msk [vmem:[#allocation4 + $0xa] sm:$0x1] %vm2079, %v2284
    %v2287 = vld [vmem:[#allocation3 + $0x1b] sm:$0x1]
    %v2290 = vunpack.c.l.s4 1983009808
    %v2291 = vunpack.c.0.s8 %v2290
    %v2292 = vlaneseq
    %v2293 = vshrl.u32 %v2292, 7
    %v2294 = vsub.s32 %v2291, %v2293
    %v2295 = vrot.slane %v2287, %v2294
    %2296 = vrot.lane.b32.xlu0 %v2295, 96
    %v2297 = vpop.permute.xlu0 %2296
    %2299 = vst.msk [vmem:[#allocation4 + $0xa] sm:$0x1] %vm2093, %v2297
    %v2300 = vld [vmem:[#allocation3 + $0x1e] sm:$0x1]
    %2301 = vst.msk [vmem:[#allocation4 + $0xc] sm:$0x1] %vm2051, %v2300
    %v2302 = vld [vmem:[#allocation3 + $0x1f] sm:$0x1]
    %v2305 = vunpack.c.l.s4 1983009808
    %v2306 = vunpack.c.0.s8 %v2305
    %v2307 = vlaneseq
    %v2308 = vshrl.u32 %v2307, 7
    %v2309 = vsub.s32 %v2306, %v2308
    %v2310 = vrot.slane %v2302, %v2309
    %2311 = vrot.lane.b32.xlu0 %v2310, 32
    %v2312 = vpop.permute.xlu0 %2311
    %2314 = vst.msk [vmem:[#allocation4 + $0xc] sm:$0x1] %vm2065, %v2312
    %v2315 = vld [vmem:[#allocation3 + $0x20] sm:$0x1]
    %v2318 = vunpack.c.l.s4 1983009808
    %v2319 = vunpack.c.0.s8 %v2318
    %v2320 = vlaneseq
    %v2321 = vshrl.u32 %v2320, 7
    %v2322 = vsub.s32 %v2319, %v2321
    %v2323 = vrot.slane %v2315, %v2322
    %2324 = vrot.lane.b32.xlu0 %v2323, 64
    %v2325 = vpop.permute.xlu0 %2324
    %2327 = vst.msk [vmem:[#allocation4 + $0xc] sm:$0x1] %vm2079, %v2325
    %v2328 = vld [vmem:[#allocation3 + $0x21] sm:$0x1]
    %v2331 = vunpack.c.l.s4 1983009808
    %v2332 = vunpack.c.0.s8 %v2331
    %v2333 = vlaneseq
    %v2334 = vshrl.u32 %v2333, 7
    %v2335 = vsub.s32 %v2332, %v2334
    %v2336 = vrot.slane %v2328, %v2335
    %2337 = vrot.lane.b32.xlu0 %v2336, 96
    %v2338 = vpop.permute.xlu0 %2337
    %2340 = vst.msk [vmem:[#allocation4 + $0xc] sm:$0x1] %vm2093, %v2338
    %v2341 = vld [vmem:[#allocation3 + $0x22] sm:$0x1]
    %2342 = vst.msk [vmem:[#allocation4 + $0xe] sm:$0x1] %vm2051, %v2341
    %v2343 = vld [vmem:[#allocation3 + $0x23] sm:$0x1]
    %v2346 = vunpack.c.l.s4 1983009808
    %v2347 = vunpack.c.0.s8 %v2346
    %v2348 = vlaneseq
    %v2349 = vshrl.u32 %v2348, 7
    %v2350 = vsub.s32 %v2347, %v2349
    %v2351 = vrot.slane %v2343, %v2350
    %2352 = vrot.lane.b32.xlu0 %v2351, 32
    %v2353 = vpop.permute.xlu0 %2352
    %2355 = vst.msk [vmem:[#allocation4 + $0xe] sm:$0x1] %vm2065, %v2353
    %v2356 = vld [vmem:[#allocation3 + $0x24] sm:$0x1]
    %v2359 = vunpack.c.l.s4 1983009808
    %v2360 = vunpack.c.0.s8 %v2359
    %v2361 = vlaneseq
    %v2362 = vshrl.u32 %v2361, 7
    %v2363 = vsub.s32 %v2360, %v2362
    %v2364 = vrot.slane %v2356, %v2363
    %2365 = vrot.lane.b32.xlu0 %v2364, 64
    %v2366 = vpop.permute.xlu0 %2365
    %2368 = vst.msk [vmem:[#allocation4 + $0xe] sm:$0x1] %vm2079, %v2366
    %v2369 = vld [vmem:[#allocation3 + $0x25] sm:$0x1]
    %v2372 = vunpack.c.l.s4 1983009808
    %v2373 = vunpack.c.0.s8 %v2372
    %v2374 = vlaneseq
    %v2375 = vshrl.u32 %v2374, 7
    %v2376 = vsub.s32 %v2373, %v2375
    %v2377 = vrot.slane %v2369, %v2376
    %2378 = vrot.lane.b32.xlu0 %v2377, 96
    %v2379 = vpop.permute.xlu0 %2378
    %2381 = vst.msk [vmem:[#allocation4 + $0xe] sm:$0x1] %vm2093, %v2379
    %v2382 = vld [vmem:[#allocation3 + $0x3c] sm:$0x1]
    %2383 = vst.msk [vmem:[#allocation4 + $0x1] sm:$0x1] %vm2051, %v2382
    %v2384 = vld [vmem:[#allocation3 + $0x3d] sm:$0x1]
    %v2387 = vunpack.c.l.s4 1983009808
    %v2388 = vunpack.c.0.s8 %v2387
    %v2389 = vlaneseq
    %v2390 = vshrl.u32 %v2389, 7
    %v2391 = vsub.s32 %v2388, %v2390
    %v2392 = vrot.slane %v2384, %v2391
    %2393 = vrot.lane.b32.xlu0 %v2392, 32
    %v2394 = vpop.permute.xlu0 %2393
    %2396 = vst.msk [vmem:[#allocation4 + $0x1] sm:$0x1] %vm2065, %v2394
    %v2397 = vld [vmem:[#allocation3 + $0x3e] sm:$0x1]
    %v2400 = vunpack.c.l.s4 1983009808
    %v2401 = vunpack.c.0.s8 %v2400
    %v2402 = vlaneseq
    %v2403 = vshrl.u32 %v2402, 7
    %v2404 = vsub.s32 %v2401, %v2403
    %v2405 = vrot.slane %v2397, %v2404
    %2406 = vrot.lane.b32.xlu0 %v2405, 64
    %v2407 = vpop.permute.xlu0 %2406
    %2409 = vst.msk [vmem:[#allocation4 + $0x1] sm:$0x1] %vm2079, %v2407
    %v2410 = vld [vmem:[#allocation3 + $0x3f] sm:$0x1]
    %v2413 = vunpack.c.l.s4 1983009808
    %v2414 = vunpack.c.0.s8 %v2413
    %v2415 = vlaneseq
    %v2416 = vshrl.u32 %v2415, 7
    %v2417 = vsub.s32 %v2414, %v2416
    %v2418 = vrot.slane %v2410, %v2417
    %2419 = vrot.lane.b32.xlu0 %v2418, 96
    %v2420 = vpop.permute.xlu0 %2419
    %2422 = vst.msk [vmem:[#allocation4 + $0x1] sm:$0x1] %vm2093, %v2420
    %v2423 = vld [vmem:[#allocation3 + $0x40] sm:$0x1]
    %2424 = vst.msk [vmem:[#allocation4 + $0x3] sm:$0x1] %vm2051, %v2423
    %v2425 = vld [vmem:[#allocation3 + $0x41] sm:$0x1]
    %v2428 = vunpack.c.l.s4 1983009808
    %v2429 = vunpack.c.0.s8 %v2428
    %v2430 = vlaneseq
    %v2431 = vshrl.u32 %v2430, 7
    %v2432 = vsub.s32 %v2429, %v2431
    %v2433 = vrot.slane %v2425, %v2432
    %2434 = vrot.lane.b32.xlu0 %v2433, 32
    %v2435 = vpop.permute.xlu0 %2434
    %2437 = vst.msk [vmem:[#allocation4 + $0x3] sm:$0x1] %vm2065, %v2435
    %v2438 = vld [vmem:[#allocation3 + $0x42] sm:$0x1]
    %v2441 = vunpack.c.l.s4 1983009808
    %v2442 = vunpack.c.0.s8 %v2441
    %v2443 = vlaneseq
    %v2444 = vshrl.u32 %v2443, 7
    %v2445 = vsub.s32 %v2442, %v2444
    %v2446 = vrot.slane %v2438, %v2445
    %2447 = vrot.lane.b32.xlu0 %v2446, 64
    %v2448 = vpop.permute.xlu0 %2447
    %2450 = vst.msk [vmem:[#allocation4 + $0x3] sm:$0x1] %vm2079, %v2448
    %v2451 = vld [vmem:[#allocation3 + $0x43] sm:$0x1]
    %v2454 = vunpack.c.l.s4 1983009808
    %v2455 = vunpack.c.0.s8 %v2454
    %v2456 = vlaneseq
    %v2457 = vshrl.u32 %v2456, 7
    %v2458 = vsub.s32 %v2455, %v2457
    %v2459 = vrot.slane %v2451, %v2458
    %2460 = vrot.lane.b32.xlu0 %v2459, 96
    %v2461 = vpop.permute.xlu0 %2460
    %2463 = vst.msk [vmem:[#allocation4 + $0x3] sm:$0x1] %vm2093, %v2461
    %v2464 = vld [vmem:[#allocation3 + $0x46] sm:$0x1]
    %2465 = vst.msk [vmem:[#allocation4 + $0x5] sm:$0x1] %vm2051, %v2464
    %v2466 = vld [vmem:[#allocation3 + $0x47] sm:$0x1]
    %v2469 = vunpack.c.l.s4 1983009808
    %v2470 = vunpack.c.0.s8 %v2469
    %v2471 = vlaneseq
    %v2472 = vshrl.u32 %v2471, 7
    %v2473 = vsub.s32 %v2470, %v2472
    %v2474 = vrot.slane %v2466, %v2473
    %2475 = vrot.lane.b32.xlu0 %v2474, 32
    %v2476 = vpop.permute.xlu0 %2475
    %2478 = vst.msk [vmem:[#allocation4 + $0x5] sm:$0x1] %vm2065, %v2476
    %v2479 = vld [vmem:[#allocation3 + $0x48] sm:$0x1]
    %v2482 = vunpack.c.l.s4 1983009808
    %v2483 = vunpack.c.0.s8 %v2482
    %v2484 = vlaneseq
    %v2485 = vshrl.u32 %v2484, 7
    %v2486 = vsub.s32 %v2483, %v2485
    %v2487 = vrot.slane %v2479, %v2486
    %2488 = vrot.lane.b32.xlu0 %v2487, 64
    %v2489 = vpop.permute.xlu0 %2488
    %2491 = vst.msk [vmem:[#allocation4 + $0x5] sm:$0x1] %vm2079, %v2489
    %v2492 = vld [vmem:[#allocation3 + $0x49] sm:$0x1]
    %v2495 = vunpack.c.l.s4 1983009808
    %v2496 = vunpack.c.0.s8 %v2495
    %v2497 = vlaneseq
    %v2498 = vshrl.u32 %v2497, 7
    %v2499 = vsub.s32 %v2496, %v2498
    %v2500 = vrot.slane %v2492, %v2499
    %2501 = vrot.lane.b32.xlu0 %v2500, 96
    %v2502 = vpop.permute.xlu0 %2501
    %2504 = vst.msk [vmem:[#allocation4 + $0x5] sm:$0x1] %vm2093, %v2502
    %v2505 = vld [vmem:[#allocation3 + $0x4a] sm:$0x1]
    %2506 = vst.msk [vmem:[#allocation4 + $0x7] sm:$0x1] %vm2051, %v2505
    %v2507 = vld [vmem:[#allocation3 + $0x4b] sm:$0x1]
    %v2510 = vunpack.c.l.s4 1983009808
    %v2511 = vunpack.c.0.s8 %v2510
    %v2512 = vlaneseq
    %v2513 = vshrl.u32 %v2512, 7
    %v2514 = vsub.s32 %v2511, %v2513
    %v2515 = vrot.slane %v2507, %v2514
    %2516 = vrot.lane.b32.xlu0 %v2515, 32
    %v2517 = vpop.permute.xlu0 %2516
    %2519 = vst.msk [vmem:[#allocation4 + $0x7] sm:$0x1] %vm2065, %v2517
    %v2520 = vld [vmem:[#allocation3 + $0x4c] sm:$0x1]
    %v2523 = vunpack.c.l.s4 1983009808
    %v2524 = vunpack.c.0.s8 %v2523
    %v2525 = vlaneseq
    %v2526 = vshrl.u32 %v2525, 7
    %v2527 = vsub.s32 %v2524, %v2526
    %v2528 = vrot.slane %v2520, %v2527
    %2529 = vrot.lane.b32.xlu0 %v2528, 64
    %v2530 = vpop.permute.xlu0 %2529
    %2532 = vst.msk [vmem:[#allocation4 + $0x7] sm:$0x1] %vm2079, %v2530
    %v2533 = vld [vmem:[#allocation3 + $0x4d] sm:$0x1]
    %v2536 = vunpack.c.l.s4 1983009808
    %v2537 = vunpack.c.0.s8 %v2536
    %v2538 = vlaneseq
    %v2539 = vshrl.u32 %v2538, 7
    %v2540 = vsub.s32 %v2537, %v2539
    %v2541 = vrot.slane %v2533, %v2540
    %2542 = vrot.lane.b32.xlu0 %v2541, 96
    %v2543 = vpop.permute.xlu0 %2542
    %2545 = vst.msk [vmem:[#allocation4 + $0x7] sm:$0x1] %vm2093, %v2543
    %v2546 = vld [vmem:[#allocation3 + $0x50] sm:$0x1]
    %2547 = vst.msk [vmem:[#allocation4 + $0x9] sm:$0x1] %vm2051, %v2546
    %v2548 = vld [vmem:[#allocation3 + $0x51] sm:$0x1]
    %v2551 = vunpack.c.l.s4 1983009808
    %v2552 = vunpack.c.0.s8 %v2551
    %v2553 = vlaneseq
    %v2554 = vshrl.u32 %v2553, 7
    %v2555 = vsub.s32 %v2552, %v2554
    %v2556 = vrot.slane %v2548, %v2555
    %2557 = vrot.lane.b32.xlu0 %v2556, 32
    %v2558 = vpop.permute.xlu0 %2557
    %2560 = vst.msk [vmem:[#allocation4 + $0x9] sm:$0x1] %vm2065, %v2558
    %v2561 = vld [vmem:[#allocation3 + $0x52] sm:$0x1]
    %v2564 = vunpack.c.l.s4 1983009808
    %v2565 = vunpack.c.0.s8 %v2564
    %v2566 = vlaneseq
    %v2567 = vshrl.u32 %v2566, 7
    %v2568 = vsub.s32 %v2565, %v2567
    %v2569 = vrot.slane %v2561, %v2568
    %2570 = vrot.lane.b32.xlu0 %v2569, 64
    %v2571 = vpop.permute.xlu0 %2570
    %2573 = vst.msk [vmem:[#allocation4 + $0x9] sm:$0x1] %vm2079, %v2571
    %v2574 = vld [vmem:[#allocation3 + $0x53] sm:$0x1]
    %v2577 = vunpack.c.l.s4 1983009808
    %v2578 = vunpack.c.0.s8 %v2577
    %v2579 = vlaneseq
    %v2580 = vshrl.u32 %v2579, 7
    %v2581 = vsub.s32 %v2578, %v2580
    %v2582 = vrot.slane %v2574, %v2581
    %2583 = vrot.lane.b32.xlu0 %v2582, 96
    %v2584 = vpop.permute.xlu0 %2583
    %2586 = vst.msk [vmem:[#allocation4 + $0x9] sm:$0x1] %vm2093, %v2584
    %v2587 = vld [vmem:[#allocation3 + $0x54] sm:$0x1]
    %2588 = vst.msk [vmem:[#allocation4 + $0xb] sm:$0x1] %vm2051, %v2587
    %v2589 = vld [vmem:[#allocation3 + $0x55] sm:$0x1]
    %v2592 = vunpack.c.l.s4 1983009808
    %v2593 = vunpack.c.0.s8 %v2592
    %v2594 = vlaneseq
    %v2595 = vshrl.u32 %v2594, 7
    %v2596 = vsub.s32 %v2593, %v2595
    %v2597 = vrot.slane %v2589, %v2596
    %2598 = vrot.lane.b32.xlu0 %v2597, 32
    %v2599 = vpop.permute.xlu0 %2598
    %2601 = vst.msk [vmem:[#allocation4 + $0xb] sm:$0x1] %vm2065, %v2599
    %v2602 = vld [vmem:[#allocation3 + $0x56] sm:$0x1]
    %v2605 = vunpack.c.l.s4 1983009808
    %v2606 = vunpack.c.0.s8 %v2605
    %v2607 = vlaneseq
    %v2608 = vshrl.u32 %v2607, 7
    %v2609 = vsub.s32 %v2606, %v2608
    %v2610 = vrot.slane %v2602, %v2609
    %2611 = vrot.lane.b32.xlu0 %v2610, 64
    %v2612 = vpop.permute.xlu0 %2611
    %2614 = vst.msk [vmem:[#allocation4 + $0xb] sm:$0x1] %vm2079, %v2612
    %v2615 = vld [vmem:[#allocation3 + $0x57] sm:$0x1]
    %v2618 = vunpack.c.l.s4 1983009808
    %v2619 = vunpack.c.0.s8 %v2618
    %v2620 = vlaneseq
    %v2621 = vshrl.u32 %v2620, 7
    %v2622 = vsub.s32 %v2619, %v2621
    %v2623 = vrot.slane %v2615, %v2622
    %2624 = vrot.lane.b32.xlu0 %v2623, 96
    %v2625 = vpop.permute.xlu0 %2624
    %2627 = vst.msk [vmem:[#allocation4 + $0xb] sm:$0x1] %vm2093, %v2625
    %v2628 = vld [vmem:[#allocation3 + $0x5a] sm:$0x1]
    %2629 = vst.msk [vmem:[#allocation4 + $0xd] sm:$0x1] %vm2051, %v2628
    %v2630 = vld [vmem:[#allocation3 + $0x5b] sm:$0x1]
    %v2633 = vunpack.c.l.s4 1983009808
    %v2634 = vunpack.c.0.s8 %v2633
    %v2635 = vlaneseq
    %v2636 = vshrl.u32 %v2635, 7
    %v2637 = vsub.s32 %v2634, %v2636
    %v2638 = vrot.slane %v2630, %v2637
    %2639 = vrot.lane.b32.xlu0 %v2638, 32
    %v2640 = vpop.permute.xlu0 %2639
    %2642 = vst.msk [vmem:[#allocation4 + $0xd] sm:$0x1] %vm2065, %v2640
    %v2643 = vld [vmem:[#allocation3 + $0x5c] sm:$0x1]
    %v2646 = vunpack.c.l.s4 1983009808
    %v2647 = vunpack.c.0.s8 %v2646
    %v2648 = vlaneseq
    %v2649 = vshrl.u32 %v2648, 7
    %v2650 = vsub.s32 %v2647, %v2649
    %v2651 = vrot.slane %v2643, %v2650
    %2652 = vrot.lane.b32.xlu0 %v2651, 64
    %v2653 = vpop.permute.xlu0 %2652
    %2655 = vst.msk [vmem:[#allocation4 + $0xd] sm:$0x1] %vm2079, %v2653
    %v2656 = vld [vmem:[#allocation3 + $0x5d] sm:$0x1]
    %v2659 = vunpack.c.l.s4 1983009808
    %v2660 = vunpack.c.0.s8 %v2659
    %v2661 = vlaneseq
    %v2662 = vshrl.u32 %v2661, 7
    %v2663 = vsub.s32 %v2660, %v2662
    %v2664 = vrot.slane %v2656, %v2663
    %2665 = vrot.lane.b32.xlu0 %v2664, 96
    %v2666 = vpop.permute.xlu0 %2665
    %2668 = vst.msk [vmem:[#allocation4 + $0xd] sm:$0x1] %vm2093, %v2666
    %v2669 = vld [vmem:[#allocation3 + $0x5e] sm:$0x1]
    %2670 = vst.msk [vmem:[#allocation4 + $0xf] sm:$0x1] %vm2051, %v2669
    %v2671 = vld [vmem:[#allocation3 + $0x5f] sm:$0x1]
    %v2674 = vunpack.c.l.s4 1983009808
    %v2675 = vunpack.c.0.s8 %v2674
    %v2676 = vlaneseq
    %v2677 = vshrl.u32 %v2676, 7
    %v2678 = vsub.s32 %v2675, %v2677
    %v2679 = vrot.slane %v2671, %v2678
    %2680 = vrot.lane.b32.xlu0 %v2679, 32
    %v2681 = vpop.permute.xlu0 %2680
    %2683 = vst.msk [vmem:[#allocation4 + $0xf] sm:$0x1] %vm2065, %v2681
    %v2684 = vld [vmem:[#allocation3 + $0x60] sm:$0x1]
    %v2687 = vunpack.c.l.s4 1983009808
    %v2688 = vunpack.c.0.s8 %v2687
    %v2689 = vlaneseq
    %v2690 = vshrl.u32 %v2689, 7
    %v2691 = vsub.s32 %v2688, %v2690
    %v2692 = vrot.slane %v2684, %v2691
    %2693 = vrot.lane.b32.xlu0 %v2692, 64
    %v2694 = vpop.permute.xlu0 %2693
    %2696 = vst.msk [vmem:[#allocation4 + $0xf] sm:$0x1] %vm2079, %v2694
    %v2697 = vld [vmem:[#allocation3 + $0x61] sm:$0x1]
    %v2700 = vunpack.c.l.s4 1983009808
    %v2701 = vunpack.c.0.s8 %v2700
    %v2702 = vlaneseq
    %v2703 = vshrl.u32 %v2702, 7
    %v2704 = vsub.s32 %v2701, %v2703
    %v2705 = vrot.slane %v2697, %v2704
    %2706 = vrot.lane.b32.xlu0 %v2705, 96
    %v2707 = vpop.permute.xlu0 %2706
    %2709 = vst.msk [vmem:[#allocation4 + $0xf] sm:$0x1] %vm2093, %v2707
    %v2710 = vld [vmem:[#allocation4] sm:$0xff]
    %v2711 = vld [vmem:[#allocation4 + $0x8] sm:$0xff]
    %v2712 = vld [vmem:[%s5] sm:$0xff]
    %v2713 = vld [vmem:[%s5 + $0x8] sm:$0xff]
    %v2714 = vld [vmem:[%s5 + $0x10] sm:$0xff]
    %v2715 = vld [vmem:[%s5 + $0x18] sm:$0xff]
    %v2716 = vld [vmem:[%s5 + $0x20] sm:$0xff]
    %v2717 = vld [vmem:[%s5 + $0x28] sm:$0xff]
    %v2718 = vld [vmem:[%s5 + $0x30] sm:$0xff]
    %v2719 = vld [vmem:[%s5 + $0x38] sm:$0xff]
    %v2720 = vld [vmem:[%s5 + $0x40] sm:$0xff]
    %v2721 = vld [vmem:[%s5 + $0x48] sm:$0xff]
    %v2722 = vld [vmem:[%s5 + $0x50] sm:$0xff]
    %v2723 = vld [vmem:[%s5 + $0x58] sm:$0xff]
    %v2724 = vld [vmem:[%s5 + $0x60] sm:$0xff]
    %v2725 = vld [vmem:[%s5 + $0x68] sm:$0xff]
    %v2726 = vld [vmem:[%s5 + $0x70] sm:$0xff]
    %v2727 = vld [vmem:[%s5 + $0x78] sm:$0xff]
    %v2728 = vld [vmem:[%s5 + $0x80] sm:$0xff]
    %v2729 = vld [vmem:[%s5 + $0x88] sm:$0xff]
    %v2730 = vld [vmem:[%s5 + $0x90] sm:$0xff]
    %v2731 = vld [vmem:[%s5 + $0x98] sm:$0xff]
    %v2732 = vld [vmem:[%s5 + $0xa0] sm:$0xff]
    %v2733 = vld [vmem:[%s5 + $0xa8] sm:$0xff]
    %v2734 = vld [vmem:[%s5 + $0xb0] sm:$0xff]
    %v2735 = vld [vmem:[%s5 + $0xb8] sm:$0xff]
    %v2736 = vld [vmem:[%s5 + $0xc0] sm:$0xff]
    %v2737 = vld [vmem:[%s5 + $0xc8] sm:$0xff]
    %v2738 = vld [vmem:[%s5 + $0xd0] sm:$0xff]
    %v2739 = vld [vmem:[%s5 + $0xd8] sm:$0xff]
    %v2740 = vld [vmem:[%s5 + $0xe0] sm:$0xff]
    %v2741 = vld [vmem:[%s5 + $0xe8] sm:$0xff]
    %v2742 = vld [vmem:[%s5 + $0xf0] sm:$0xff]
    %v2743 = vld [vmem:[%s5 + $0xf8] sm:$0xff]
    %v2744 = vld [vmem:[%s5 + $0x100] sm:$0xff]
    %v2745 = vld [vmem:[%s5 + $0x108] sm:$0xff]
    %v2746 = vld [vmem:[%s5 + $0x110] sm:$0xff]
    %v2747 = vld [vmem:[%s5 + $0x118] sm:$0xff]
    %v2748 = vld [vmem:[%s5 + $0x120] sm:$0xff]
    %v2749 = vld [vmem:[%s5 + $0x128] sm:$0xff]
    %v2750 = vld [vmem:[%s5 + $0x130] sm:$0xff]
    %v2751 = vld [vmem:[%s5 + $0x138] sm:$0xff]
    %v2752 = vld [vmem:[%s5 + $0x140] sm:$0xff]
    %v2753 = vld [vmem:[%s5 + $0x148] sm:$0xff]
    %v2754 = vld [vmem:[%s5 + $0x150] sm:$0xff]
    %v2755 = vld [vmem:[%s5 + $0x158] sm:$0xff]
    %v2756 = vld [vmem:[%s5 + $0x160] sm:$0xff]
    %v2757 = vld [vmem:[%s5 + $0x168] sm:$0xff]
    %v2758 = vld [vmem:[%s5 + $0x170] sm:$0xff]
    %v2759 = vld [vmem:[%s5 + $0x178] sm:$0xff]
    %v2760 = vld [vmem:[%s5 + $0x180] sm:$0xff]
    %v2761 = vld [vmem:[%s5 + $0x188] sm:$0xff]
    %v2762 = vld [vmem:[%s5 + $0x190] sm:$0xff]
    %v2763 = vld [vmem:[%s5 + $0x198] sm:$0xff]
    %v2764 = vld [vmem:[%s5 + $0x1a0] sm:$0xff]
    %v2765 = vld [vmem:[%s5 + $0x1a8] sm:$0xff]
    %v2766 = vld [vmem:[%s5 + $0x1b0] sm:$0xff]
    %v2767 = vld [vmem:[%s5 + $0x1b8] sm:$0xff]
    %v2768 = vld [vmem:[%s5 + $0x1c0] sm:$0xff]
    %v2769 = vld [vmem:[%s5 + $0x1c8] sm:$0xff]
    %v2770 = vld [vmem:[%s5 + $0x1d0] sm:$0xff]
    %v2771 = vld [vmem:[%s5 + $0x1d8] sm:$0xff]
    %v2772 = vld [vmem:[%s5 + $0x1e0] sm:$0xff]
    %v2773 = vld [vmem:[%s5 + $0x1e8] sm:$0xff]
    %v2774 = vld [vmem:[%s5 + $0x1f0] sm:$0xff]
    %v2775 = vld [vmem:[%s5 + $0x1f8] sm:$0xff]
    %v2776 = vld [vmem:[%s5 + $0x200] sm:$0xff]
    %v2777 = vld [vmem:[%s5 + $0x208] sm:$0xff]
    %v2778 = vld [vmem:[%s5 + $0x210] sm:$0xff]
    %v2779 = vld [vmem:[%s5 + $0x218] sm:$0xff]
    %v2780 = vld [vmem:[%s5 + $0x220] sm:$0xff]
    %v2781 = vld [vmem:[%s5 + $0x228] sm:$0xff]
    %v2782 = vld [vmem:[%s5 + $0x230] sm:$0xff]
    %v2783 = vld [vmem:[%s5 + $0x238] sm:$0xff]
    %v2784 = vld [vmem:[%s5 + $0x240] sm:$0xff]
    %v2785 = vld [vmem:[%s5 + $0x248] sm:$0xff]
    %v2786 = vld [vmem:[%s5 + $0x250] sm:$0xff]
    %v2787 = vld [vmem:[%s5 + $0x258] sm:$0xff]
    %v2788 = vld [vmem:[%s5 + $0x260] sm:$0xff]
    %v2789 = vld [vmem:[%s5 + $0x268] sm:$0xff]
    %v2790 = vld [vmem:[%s5 + $0x270] sm:$0xff]
    %v2791 = vld [vmem:[%s5 + $0x278] sm:$0xff]
    %v2792 = vld [vmem:[%s5 + $0x280] sm:$0xff]
    %v2793 = vld [vmem:[%s5 + $0x288] sm:$0xff]
    %v2794 = vld [vmem:[%s5 + $0x290] sm:$0xff]
    %v2795 = vld [vmem:[%s5 + $0x298] sm:$0xff]
    %v2796 = vld [vmem:[%s5 + $0x2a0] sm:$0xff]
    %v2797 = vld [vmem:[%s5 + $0x2a8] sm:$0xff]
    %v2798 = vld [vmem:[%s5 + $0x2b0] sm:$0xff]
    %v2799 = vld [vmem:[%s5 + $0x2b8] sm:$0xff]
    %v2800 = vld [vmem:[%s5 + $0x2c0] sm:$0xff]
    %v2801 = vld [vmem:[%s5 + $0x2c8] sm:$0xff]
    %v2802 = vld [vmem:[%s5 + $0x2d0] sm:$0xff]
    %v2803 = vld [vmem:[%s5 + $0x2d8] sm:$0xff]
    %v2804 = vld [vmem:[%s5 + $0x2e0] sm:$0xff]
    %v2805 = vld [vmem:[%s5 + $0x2e8] sm:$0xff]
    %v2806 = vld [vmem:[%s5 + $0x2f0] sm:$0xff]
    %v2807 = vld [vmem:[%s5 + $0x2f8] sm:$0xff]
    %v2808 = vld [vmem:[%s5 + $0x300] sm:$0xff]
    %v2809 = vld [vmem:[%s5 + $0x308] sm:$0xff]
    %v2810 = vld [vmem:[%s5 + $0x310] sm:$0xff]
    %v2811 = vld [vmem:[%s5 + $0x318] sm:$0xff]
    %v2812 = vld [vmem:[%s5 + $0x320] sm:$0xff]
    %v2813 = vld [vmem:[%s5 + $0x328] sm:$0xff]
    %v2814 = vld [vmem:[%s5 + $0x330] sm:$0xff]
    %v2815 = vld [vmem:[%s5 + $0x338] sm:$0xff]
    %v2816 = vld [vmem:[%s5 + $0x340] sm:$0xff]
    %v2817 = vld [vmem:[%s5 + $0x348] sm:$0xff]
    %v2818 = vld [vmem:[%s5 + $0x350] sm:$0xff]
    %v2819 = vld [vmem:[%s5 + $0x358] sm:$0xff]
    %v2820 = vld [vmem:[%s5 + $0x360] sm:$0xff]
    %v2821 = vld [vmem:[%s5 + $0x368] sm:$0xff]
    %v2822 = vld [vmem:[%s5 + $0x370] sm:$0xff]
    %v2823 = vld [vmem:[%s5 + $0x378] sm:$0xff]
    %v2824 = vld [vmem:[%s5 + $0x380] sm:$0xff]
    %v2825 = vld [vmem:[%s5 + $0x388] sm:$0xff]
    %v2826 = vld [vmem:[%s5 + $0x390] sm:$0xff]
    %v2827 = vld [vmem:[%s5 + $0x398] sm:$0xff]
    %v2828 = vld [vmem:[%s5 + $0x3a0] sm:$0xff]
    %v2829 = vld [vmem:[%s5 + $0x3a8] sm:$0xff]
    %v2830 = vld [vmem:[%s5 + $0x3b0] sm:$0xff]
    %v2831 = vld [vmem:[%s5 + $0x3b8] sm:$0xff]
    %v2832 = vld [vmem:[%s5 + $0x3c0] sm:$0xff]
    %v2833 = vld [vmem:[%s5 + $0x3c8] sm:$0xff]
    %v2834 = vld [vmem:[%s5 + $0x3d0] sm:$0xff]
    %v2835 = vld [vmem:[%s5 + $0x3d8] sm:$0xff]
    %v2836 = vld [vmem:[%s5 + $0x3e0] sm:$0xff]
    %v2837 = vld [vmem:[%s5 + $0x3e8] sm:$0xff]
    %v2838 = vld [vmem:[%s5 + $0x3f0] sm:$0xff]
    %v2839 = vld [vmem:[%s5 + $0x3f8] sm:$0xff]
    %v2840 = vld [vmem:[%s6] sm:$0x1]
    %v2842 = vlaneseq
    %v2843 = vshrl.u32 %v2842, 7
    %v2844 = vsub.s32 0, %v2843
    %v2845 = vrot.slane %v2840, %v2844
    %v2849 = vcombine.high %v2710, %v2710
    %v2851 = vunpack.c.l.s4 1983009808
    %v2852 = vunpack.c.0.s8 %v2851
    %v2853 = vlaneseq
    %v2854 = vshrl.u32 %v2853, 7
    %v2855 = vsub.s32 %v2852, %v2854
    %v2856 = vrot.slane %v2710, %v2855
    %v2858 = vunpack.c.l.s4 1983009808
    %v2859 = vunpack.c.0.s8 %v2858
    %v2860 = vlaneseq
    %v2861 = vshrl.u32 %v2860, 7
    %v2862 = vsub.s32 %v2859, %v2861
    %v2863 = vrot.slane %v2849, %v2862
    %v2864 = vcombine.high %v2856, %v2856
    %v2865 = vcombine.high %v2863, %v2863
    %v2866 = vcombine.high %v2711, %v2711
    %v2868 = vunpack.c.l.s4 1983009808
    %v2869 = vunpack.c.0.s8 %v2868
    %v2870 = vlaneseq
    %v2871 = vshrl.u32 %v2870, 7
    %v2872 = vsub.s32 %v2869, %v2871
    %v2873 = vrot.slane %v2711, %v2872
    %v2875 = vunpack.c.l.s4 1983009808
    %v2876 = vunpack.c.0.s8 %v2875
    %v2877 = vlaneseq
    %v2878 = vshrl.u32 %v2877, 7
    %v2879 = vsub.s32 %v2876, %v2878
    %v2880 = vrot.slane %v2866, %v2879
    %v2881 = vcombine.high %v2873, %v2873
    %v2882 = vcombine.high %v2880, %v2880
    %2891 = vmatprep.subr.mxu0 0.0
    %2892 = vmatpush1.msra.mxu0 %v2727
    %2893 = vmatprep.subr.mxu0 0.0
    %2894 = vmatpush1.msra.mxu0 %v2726
    %2895 = vmatprep.subr.mxu0 0.0
    %2896 = vmatpush1.msra.mxu0 %v2725
    %2897 = vmatprep.subr.mxu0 0.0
    %2898 = vmatpush1.msra.mxu0 %v2724
    %2899 = vmatprep.subr.mxu0 0.0
    %2900 = vmatpush1.msra.mxu0 %v2723
    %2901 = vmatprep.subr.mxu0 0.0
    %2902 = vmatpush1.msra.mxu0 %v2722
    %2903 = vmatprep.subr.mxu0 0.0
    %2904 = vmatpush1.msra.mxu0 %v2721
    %2905 = vmatprep.subr.mxu0 0.0
    %2906 = vmatpush1.msra.mxu0 %v2720
    %2907 = vmatprep.subr.mxu0 0.0
    %2908 = vmatpush1.msra.mxu0 %v2719
    %2909 = vmatprep.subr.mxu0 0.0
    %2910 = vmatpush1.msra.mxu0 %v2718
    %2911 = vmatprep.subr.mxu0 0.0
    %2912 = vmatpush1.msra.mxu0 %v2717
    %2913 = vmatprep.subr.mxu0 0.0
    %2914 = vmatpush1.msra.mxu0 %v2716
    %2915 = vmatprep.subr.mxu0 0.0
    %2916 = vmatpush1.msra.mxu0 %v2715
    %2917 = vmatprep.subr.mxu0 0.0
    %2918 = vmatpush1.msra.mxu0 %v2714
    %2919 = vmatprep.subr.mxu0 0.0
    %2920 = vmatpush1.msra.mxu0 %v2713
    %2921 = vmatprep.subr.mxu0 0.0
    %2922 = vmatpush1.msra.mxu0 %v2712
    %2923 = vmatprep.subr.mxu0 0.0
    %2924 = vmatpush2.msra.mxu0 %v2743
    %2925 = vmatprep.subr.mxu0 0.0
    %2926 = vmatpush2.msra.mxu0 %v2742
    %2927 = vmatprep.subr.mxu0 0.0
    %2928 = vmatpush2.msra.mxu0 %v2741
    %2929 = vmatprep.subr.mxu0 0.0
    %2930 = vmatpush2.msra.mxu0 %v2740
    %2931 = vmatprep.subr.mxu0 0.0
    %2932 = vmatpush2.msra.mxu0 %v2739
    %2933 = vmatprep.subr.mxu0 0.0
    %2934 = vmatpush2.msra.mxu0 %v2738
    %2935 = vmatprep.subr.mxu0 0.0
    %2936 = vmatpush2.msra.mxu0 %v2737
    %2937 = vmatprep.subr.mxu0 0.0
    %2938 = vmatpush2.msra.mxu0 %v2736
    %2939 = vmatprep.subr.mxu0 0.0
    %2940 = vmatpush2.msra.mxu0 %v2735
    %2941 = vmatprep.subr.mxu0 0.0
    %2942 = vmatpush2.msra.mxu0 %v2734
    %2943 = vmatprep.subr.mxu0 0.0
    %2944 = vmatpush2.msra.mxu0 %v2733
    %2945 = vmatprep.subr.mxu0 0.0
    %2946 = vmatpush2.msra.mxu0 %v2732
    %2947 = vmatprep.subr.mxu0 0.0
    %2948 = vmatpush2.msra.mxu0 %v2731
    %2949 = vmatprep.subr.mxu0 0.0
    %2950 = vmatpush2.msra.mxu0 %v2730
    %2951 = vmatprep.subr.mxu0 0.0
    %2952 = vmatpush2.msra.mxu0 %v2729
    %2953 = vmatprep.subr.mxu0 0.0
    %2954 = vmatpush2.msra.mxu0 %v2728
    %2955 = vmatprep.mubr.f32.mxu0 %v2864
    %2956 = vmatmul.mubr.f32.gmra.mxu0 %v2856
    %v2957 = vpop.f32.mrf.mxu0
    %v2958 = vadd.f32 %v2845, %v2957
    %v2959 = vpop.f32.mrf.mxu0
    %2960 = vdwg.mxu0
    %2961 = vmatprep.subr.mxu0 0.0
    %2962 = vmatpush1.msra.mxu0 %v2759
    %2963 = vmatprep.subr.mxu0 0.0
    %2964 = vmatpush1.msra.mxu0 %v2758
    %2965 = vmatprep.subr.mxu0 0.0
    %2966 = vmatpush1.msra.mxu0 %v2757
    %2967 = vmatprep.subr.mxu0 0.0
    %2968 = vmatpush1.msra.mxu0 %v2756
    %2969 = vmatprep.subr.mxu0 0.0
    %2970 = vmatpush1.msra.mxu0 %v2755
    %2971 = vmatprep.subr.mxu0 0.0
    %2972 = vmatpush1.msra.mxu0 %v2754
    %2973 = vmatprep.subr.mxu0 0.0
    %2974 = vmatpush1.msra.mxu0 %v2753
    %2975 = vmatprep.subr.mxu0 0.0
    %2976 = vmatpush1.msra.mxu0 %v2752
    %2977 = vmatprep.subr.mxu0 0.0
    %2978 = vmatpush1.msra.mxu0 %v2751
    %2979 = vmatprep.subr.mxu0 0.0
    %2980 = vmatpush1.msra.mxu0 %v2750
    %2981 = vmatprep.subr.mxu0 0.0
    %2982 = vmatpush1.msra.mxu0 %v2749
    %2983 = vmatprep.subr.mxu0 0.0
    %2984 = vmatpush1.msra.mxu0 %v2748
    %2985 = vmatprep.subr.mxu0 0.0
    %2986 = vmatpush1.msra.mxu0 %v2747
    %2987 = vmatprep.subr.mxu0 0.0
    %2988 = vmatpush1.msra.mxu0 %v2746
    %2989 = vmatprep.subr.mxu0 0.0
    %2990 = vmatpush1.msra.mxu0 %v2745
    %2991 = vmatprep.subr.mxu0 0.0
    %2992 = vmatpush1.msra.mxu0 %v2744
    %2993 = vmatprep.subr.mxu0 0.0
    %2994 = vmatpush2.msra.mxu0 %v2775
    %2995 = vmatprep.subr.mxu0 0.0
    %2996 = vmatpush2.msra.mxu0 %v2774
    %2997 = vmatprep.subr.mxu0 0.0
    %2998 = vmatpush2.msra.mxu0 %v2773
    %2999 = vmatprep.subr.mxu0 0.0
    %3000 = vmatpush2.msra.mxu0 %v2772
    %3001 = vmatprep.subr.mxu0 0.0
    %3002 = vmatpush2.msra.mxu0 %v2771
    %3003 = vmatprep.subr.mxu0 0.0
    %3004 = vmatpush2.msra.mxu0 %v2770
    %3005 = vmatprep.subr.mxu0 0.0
    %3006 = vmatpush2.msra.mxu0 %v2769
    %3007 = vmatprep.subr.mxu0 0.0
    %3008 = vmatpush2.msra.mxu0 %v2768
    %3009 = vmatprep.subr.mxu0 0.0
    %3010 = vmatpush2.msra.mxu0 %v2767
    %3011 = vmatprep.subr.mxu0 0.0
    %3012 = vmatpush2.msra.mxu0 %v2766
    %3013 = vmatprep.subr.mxu0 0.0
    %3014 = vmatpush2.msra.mxu0 %v2765
    %3015 = vmatprep.subr.mxu0 0.0
    %3016 = vmatpush2.msra.mxu0 %v2764
    %3017 = vmatprep.subr.mxu0 0.0
    %3018 = vmatpush2.msra.mxu0 %v2763
    %3019 = vmatprep.subr.mxu0 0.0
    %3020 = vmatpush2.msra.mxu0 %v2762
    %3021 = vmatprep.subr.mxu0 0.0
    %3022 = vmatpush2.msra.mxu0 %v2761
    %3023 = vmatprep.subr.mxu0 0.0
    %3024 = vmatpush2.msra.mxu0 %v2760
    %3025 = vmatprep.mubr.f32.mxu0 %v2865
    %3026 = vmatmul.mubr.f32.gmra.mxu0 %v2863
    %v3027 = vpop.f32.mrf.mxu0
    %v3028 = vadd.f32 %v2958, %v3027
    %v3029 = vpop.f32.mrf.mxu0
    %3030 = vdwg.mxu0
    %3031 = vmatprep.subr.mxu0 0.0
    %3032 = vmatpush1.msra.mxu0 %v2791
    %3033 = vmatprep.subr.mxu0 0.0
    %3034 = vmatpush1.msra.mxu0 %v2790
    %3035 = vmatprep.subr.mxu0 0.0
    %3036 = vmatpush1.msra.mxu0 %v2789
    %3037 = vmatprep.subr.mxu0 0.0
    %3038 = vmatpush1.msra.mxu0 %v2788
    %3039 = vmatprep.subr.mxu0 0.0
    %3040 = vmatpush1.msra.mxu0 %v2787
    %3041 = vmatprep.subr.mxu0 0.0
    %3042 = vmatpush1.msra.mxu0 %v2786
    %3043 = vmatprep.subr.mxu0 0.0
    %3044 = vmatpush1.msra.mxu0 %v2785
    %3045 = vmatprep.subr.mxu0 0.0
    %3046 = vmatpush1.msra.mxu0 %v2784
    %3047 = vmatprep.subr.mxu0 0.0
    %3048 = vmatpush1.msra.mxu0 %v2783
    %3049 = vmatprep.subr.mxu0 0.0
    %3050 = vmatpush1.msra.mxu0 %v2782
    %3051 = vmatprep.subr.mxu0 0.0
    %3052 = vmatpush1.msra.mxu0 %v2781
    %3053 = vmatprep.subr.mxu0 0.0
    %3054 = vmatpush1.msra.mxu0 %v2780
    %3055 = vmatprep.subr.mxu0 0.0
    %3056 = vmatpush1.msra.mxu0 %v2779
    %3057 = vmatprep.subr.mxu0 0.0
    %3058 = vmatpush1.msra.mxu0 %v2778
    %3059 = vmatprep.subr.mxu0 0.0
    %3060 = vmatpush1.msra.mxu0 %v2777
    %3061 = vmatprep.subr.mxu0 0.0
    %3062 = vmatpush1.msra.mxu0 %v2776
    %3063 = vmatprep.subr.mxu0 0.0
    %3064 = vmatpush2.msra.mxu0 %v2807
    %3065 = vmatprep.subr.mxu0 0.0
    %3066 = vmatpush2.msra.mxu0 %v2806
    %3067 = vmatprep.subr.mxu0 0.0
    %3068 = vmatpush2.msra.mxu0 %v2805
    %3069 = vmatprep.subr.mxu0 0.0
    %3070 = vmatpush2.msra.mxu0 %v2804
    %3071 = vmatprep.subr.mxu0 0.0
    %3072 = vmatpush2.msra.mxu0 %v2803
    %3073 = vmatprep.subr.mxu0 0.0
    %3074 = vmatpush2.msra.mxu0 %v2802
    %3075 = vmatprep.subr.mxu0 0.0
    %3076 = vmatpush2.msra.mxu0 %v2801
    %3077 = vmatprep.subr.mxu0 0.0
    %3078 = vmatpush2.msra.mxu0 %v2800
    %3079 = vmatprep.subr.mxu0 0.0
    %3080 = vmatpush2.msra.mxu0 %v2799
    %3081 = vmatprep.subr.mxu0 0.0
    %3082 = vmatpush2.msra.mxu0 %v2798
    %3083 = vmatprep.subr.mxu0 0.0
    %3084 = vmatpush2.msra.mxu0 %v2797
    %3085 = vmatprep.subr.mxu0 0.0
    %3086 = vmatpush2.msra.mxu0 %v2796
    %3087 = vmatprep.subr.mxu0 0.0
    %3088 = vmatpush2.msra.mxu0 %v2795
    %3089 = vmatprep.subr.mxu0 0.0
    %3090 = vmatpush2.msra.mxu0 %v2794
    %3091 = vmatprep.subr.mxu0 0.0
    %3092 = vmatpush2.msra.mxu0 %v2793
    %3093 = vmatprep.subr.mxu0 0.0
    %3094 = vmatpush2.msra.mxu0 %v2792
    %3095 = vmatprep.mubr.f32.mxu0 %v2881
    %3096 = vmatmul.mubr.f32.gmra.mxu0 %v2873
    %v3097 = vpop.f32.mrf.mxu0
    %v3098 = vadd.f32 %v3028, %v3097
    %v3099 = vpop.f32.mrf.mxu0
    %3100 = vdwg.mxu0
    %3101 = vmatprep.subr.mxu0 0.0
    %3102 = vmatpush1.msra.mxu0 %v2823
    %3103 = vmatprep.subr.mxu0 0.0
    %3104 = vmatpush1.msra.mxu0 %v2822
    %3105 = vmatprep.subr.mxu0 0.0
    %3106 = vmatpush1.msra.mxu0 %v2821
    %3107 = vmatprep.subr.mxu0 0.0
    %3108 = vmatpush1.msra.mxu0 %v2820
    %3109 = vmatprep.subr.mxu0 0.0
    %3110 = vmatpush1.msra.mxu0 %v2819
    %3111 = vmatprep.subr.mxu0 0.0
    %3112 = vmatpush1.msra.mxu0 %v2818
    %3113 = vmatprep.subr.mxu0 0.0
    %3114 = vmatpush1.msra.mxu0 %v2817
    %3115 = vmatprep.subr.mxu0 0.0
    %3116 = vmatpush1.msra.mxu0 %v2816
    %3117 = vmatprep.subr.mxu0 0.0
    %3118 = vmatpush1.msra.mxu0 %v2815
    %3119 = vmatprep.subr.mxu0 0.0
    %3120 = vmatpush1.msra.mxu0 %v2814
    %3121 = vmatprep.subr.mxu0 0.0
    %3122 = vmatpush1.msra.mxu0 %v2813
    %3123 = vmatprep.subr.mxu0 0.0
    %3124 = vmatpush1.msra.mxu0 %v2812
    %3125 = vmatprep.subr.mxu0 0.0
    %3126 = vmatpush1.msra.mxu0 %v2811
    %3127 = vmatprep.subr.mxu0 0.0
    %3128 = vmatpush1.msra.mxu0 %v2810
    %3129 = vmatprep.subr.mxu0 0.0
    %3130 = vmatpush1.msra.mxu0 %v2809
    %3131 = vmatprep.subr.mxu0 0.0
    %3132 = vmatpush1.msra.mxu0 %v2808
    %3133 = vmatprep.subr.mxu0 0.0
    %3134 = vmatpush2.msra.mxu0 %v2839
    %3135 = vmatprep.subr.mxu0 0.0
    %3136 = vmatpush2.msra.mxu0 %v2838
    %3137 = vmatprep.subr.mxu0 0.0
    %3138 = vmatpush2.msra.mxu0 %v2837
    %3139 = vmatprep.subr.mxu0 0.0
    %3140 = vmatpush2.msra.mxu0 %v2836
    %3141 = vmatprep.subr.mxu0 0.0
    %3142 = vmatpush2.msra.mxu0 %v2835
    %3143 = vmatprep.subr.mxu0 0.0
    %3144 = vmatpush2.msra.mxu0 %v2834
    %3145 = vmatprep.subr.mxu0 0.0
    %3146 = vmatpush2.msra.mxu0 %v2833
    %3147 = vmatprep.subr.mxu0 0.0
    %3148 = vmatpush2.msra.mxu0 %v2832
    %3149 = vmatprep.subr.mxu0 0.0
    %3150 = vmatpush2.msra.mxu0 %v2831
    %3151 = vmatprep.subr.mxu0 0.0
    %3152 = vmatpush2.msra.mxu0 %v2830
    %3153 = vmatprep.subr.mxu0 0.0
    %3154 = vmatpush2.msra.mxu0 %v2829
    %3155 = vmatprep.subr.mxu0 0.0
    %3156 = vmatpush2.msra.mxu0 %v2828
    %3157 = vmatprep.subr.mxu0 0.0
    %3158 = vmatpush2.msra.mxu0 %v2827
    %3159 = vmatprep.subr.mxu0 0.0
    %3160 = vmatpush2.msra.mxu0 %v2826
    %3161 = vmatprep.subr.mxu0 0.0
    %3162 = vmatpush2.msra.mxu0 %v2825
    %3163 = vmatprep.subr.mxu0 0.0
    %3164 = vmatpush2.msra.mxu0 %v2824
    %3165 = vmatprep.mubr.f32.mxu0 %v2882
    %3166 = vmatmul.mubr.f32.gmra.mxu0 %v2880
    %v3167 = vpop.f32.mrf.mxu0
    %v3168 = vadd.f32 %v3098, %v3167
    %v3169 = vpop.f32.mrf.mxu0
    %3170 = vdwg.mxu0
    %vm3171 = vcmask 517120
    %3172 = vst.msk [vmem:[#allocation5] sm:$0x3] %vm3171, %v3168
    // Predicated region
    $region30: #{pgam_forward.1} parent=1 // pred_check
      _
    $region31: #{pgam_forward.1} parent=1 // pred_check_branch
      %3174 = sbr.rel (0) target = $region33
    $region32: #{pgam_forward.1} parent=1 // pred_region
      %s3176 = ssub.s32 32, 32
      %3177 = vsyncadd [#allocation6], %s3176
      %s3179 = sshll.u32 [#allocation5], 4
      %s3180 = int_to_ptr.vmem [resolvable:$true] %s3179
      %3182 = dma.vmem_to_hbm [thread:$0]  %s3180, 32, %s7, [#allocation6]
    $region33: #{pgam_forward.1} parent=1 // pred_fallthru
      _
    // Predicated region
    $region34: #{pgam_forward.1} parent=1 // pred_check
      _
    $region35: #{pgam_forward.1} parent=1 // pred_check_branch
      %3184 = sbr.rel (0) target = $region37
    $region36: #{pgam_forward.1} parent=1 // pred_region
      %3185 = dma.done [#allocation6], 32
    $region37: #{pgam_forward.1} parent=1 // pred_fallthru
      _
    %3186 = vsyncpa [#allocation6], 1

</llo_original>
